<compile_context>
chip_gen: v6e
topology: v6e:2x2x1
jax: 0.10.0
libtpu: 0.0.40
codegen_flags: <defaults>
</compile_context>

<pallas_src>
import jax
import jax.numpy as jnp
from jax.experimental import pallas as pl
from jax.experimental.pallas import tpu as pltpu

IN_FEATURES = 3 * 32 * 32   # 3072
H1 = 512
H2 = 256
OUT = 1
SLOPE = 0.2


def _leaky_relu(x, slope=SLOPE):
    return jnp.where(x > 0, x, slope * x)


def discriminator_kernel(x_ref, w1_ref, b1_ref, w2_ref, b2_ref, w3_ref, b3_ref, o_ref):
    # x_ref: (TB, 3072) bf16, weights bf16 (resident), biases b1/b2 f32, b3 in SMEM.
    x = x_ref[...]                                                        # (TB, 3072) bf16

    h1 = jnp.dot(x, w1_ref[...], preferred_element_type=jnp.float32)     # MXU, f32 acc
    h1 = _leaky_relu(h1 + b1_ref[...])                                    # (TB, 512) f32

    h2 = jnp.dot(h1.astype(jnp.bfloat16), w2_ref[...],
                 preferred_element_type=jnp.float32)
    h2 = _leaky_relu(h2 + b2_ref[...])                                    # (TB, 256) f32

    # Final 256 -> 1 layer: keep it off the MXU (N=1 would use 1/256 of the lanes).
    w3 = w3_ref[...].astype(jnp.float32)                                  # (1, 256)
    h3 = jnp.sum(h2 * w3, axis=-1, keepdims=True) + b3_ref[0, 0]          # (TB, 1)

    o_ref[...] = jax.nn.sigmoid(h3).astype(o_ref.dtype)


def discriminator_forward(img, params, *, tb=256):
    """img: (B, 3, 32, 32) float32, NCHW. Returns (B, 1) float32."""
    w1, b1, w2, b2, w3, b3 = params
    B = img.shape[0]
    x = img.reshape(B, -1).astype(jnp.bfloat16)                           # nn.Flatten + bf16

    # Batch tile: multiple of 8 (sublane), capped at `tb`. Pad batch up to a tile multiple.
    TB = min(tb, ((B + 7) // 8) * 8)
    n_tiles = pl.cdiv(B, TB)
    Bp = n_tiles * TB
    if Bp != B:
        x = jnp.pad(x, ((0, Bp - B), (0, 0)))

    flops = 2 * Bp * (IN_FEATURES * H1 + H1 * H2 + H2)
    bytes_accessed = (
        Bp * IN_FEATURES * 2                       # x (bf16)
        + IN_FEATURES * H1 * 2 + H1 * 4            # w1 (bf16), b1 (f32)
        + H1 * H2 * 2 + H2 * 4                     # w2 (bf16), b2 (f32)
        + H2 * 2 + 4                               # w3 (bf16), b3 (f32)
        + Bp * OUT * 4                             # output (f32)
    )

    out = pl.pallas_call(
        discriminator_kernel,
        out_shape=jax.ShapeDtypeStruct((Bp, OUT), jnp.float32),
        grid_spec=pltpu.PrefetchScalarGridSpec(
            num_scalar_prefetch=0,
            grid=(n_tiles,),
            in_specs=[
                pl.BlockSpec((TB, IN_FEATURES), lambda i: (i, 0)),        # x: tiled over batch
                pl.BlockSpec((IN_FEATURES, H1), lambda i: (0, 0)),        # w1: resident
                pl.BlockSpec((1, H1), lambda i: (0, 0)),                  # b1: resident
                pl.BlockSpec((H1, H2), lambda i: (0, 0)),                 # w2: resident
                pl.BlockSpec((1, H2), lambda i: (0, 0)),                  # b2: resident
                pl.BlockSpec((1, H2), lambda i: (0, 0)),                  # w3 row: resident
                pl.BlockSpec(memory_space=pltpu.MemorySpace.SMEM),        # b3: SMEM scalar
            ],
            out_specs=pl.BlockSpec((TB, OUT), lambda i: (i, 0)),
        ),
        compiler_params=pltpu.CompilerParams(
            dimension_semantics=("parallel",),
            vmem_limit_bytes=24 << 20,
        ),
        cost_estimate=pl.CostEstimate(
            flops=flops, bytes_accessed=bytes_accessed, transcendentals=Bp),
    )(x, w1, b1, w2, b2, w3, b3)

    return out[:B]


def init_params(key):
    """Init mimicking PyTorch Linear default (U[-1/sqrt(fan_in), +1/sqrt(fan_in)]).
    Weights stored transposed as (in, out) in bf16; biases in f32.
    w3 is stored as a (1, 256) row; b3 as a (1, 1) scalar."""
    ks = jax.random.split(key, 6)

    def lin(kw, kb, fan_in, fan_out):
        bound = 1.0 / jnp.sqrt(fan_in)
        w = jax.random.uniform(kw, (fan_in, fan_out), jnp.float32, -bound, bound)
        b = jax.random.uniform(kb, (1, fan_out), jnp.float32, -bound, bound)
        return w.astype(jnp.bfloat16), b

    w1, b1 = lin(ks[0], ks[1], IN_FEATURES, H1)
    w2, b2 = lin(ks[2], ks[3], H1, H2)
    w3, b3 = lin(ks[4], ks[5], H2, OUT)
    w3 = w3.reshape(1, H2)          # (1, 256) row for the VPU reduction
    b3 = b3.reshape(1, 1)           # (1, 1) scalar for SMEM
    return (w1, b1, w2, b2, w3, b3)


def reference_forward(img, params):
    """Pure-JAX reference with the same bf16-input / f32-accumulate numerics."""
    w1, b1, w2, b2, w3, b3 = params
    x = img.reshape(img.shape[0], -1).astype(jnp.bfloat16)
    h1 = _leaky_relu(jnp.dot(x, w1, preferred_element_type=jnp.float32) + b1)
    h2 = _leaky_relu(jnp.dot(h1.astype(jnp.bfloat16), w2,
                             preferred_element_type=jnp.float32) + b2)
    h3 = jnp.sum(h2 * w3.astype(jnp.float32), axis=-1, keepdims=True) + b3
    return jax.nn.sigmoid(h3)


if __name__ == "__main__":
    key = jax.random.PRNGKey(0)
    k_img, k_params = jax.random.split(key)

    B = 2
    img = jax.random.normal(k_img, (B, 3, 32, 32), dtype=jnp.float32)
    params = init_params(k_params)

    out = discriminator_forward(img, params)
    out = jax.block_until_ready(out)

    ref = reference_forward(img, params)
    assert out.shape == (B, 1), out.shape
    assert bool(jnp.all(jnp.isfinite(out))), out
    assert jnp.allclose(out, ref, atol=2e-3, rtol=2e-3), (out, ref)

    print("KERNEL_OK")
</pallas_src>

<mosaic_0001>
module attributes {stable_mosaic.version = 11 : i64} {
  func.func @discriminator_kernel(%arg0: i32, %arg1: memref<8x3072xbf16, #tpu.memory_space<vmem>>, %arg2: memref<3072x512xbf16, #tpu.memory_space<vmem>>, %arg3: memref<1x512xf32, #tpu.memory_space<vmem>>, %arg4: memref<512x256xbf16, #tpu.memory_space<vmem>>, %arg5: memref<1x256xf32, #tpu.memory_space<vmem>>, %arg6: memref<1x256xbf16, #tpu.memory_space<vmem>>, %arg7: memref<1x1xf32, #tpu.memory_space<smem>>, %arg8: memref<8x1xf32, #tpu.memory_space<vmem>>) attributes {dimension_semantics = [#tpu.dimension_semantics<parallel>], iteration_bounds = array<i64: 1>, scalar_prefetch = 0 : i64, scratch_operands = 0 : i64, tpu.core_type = #tpu.core_type<tc>, window_params = [{transform_indices = @transform_0, window_bounds = array<i64: 8, 3072>}, {pipeline_mode = #tpu.pipeline_mode<synchronous>, transform_indices = @transform_1, window_bounds = array<i64: 3072, 512>}, {pipeline_mode = #tpu.pipeline_mode<synchronous>, transform_indices = @transform_2, window_bounds = array<i64: 1, 512>}, {pipeline_mode = #tpu.pipeline_mode<synchronous>, transform_indices = @transform_3, window_bounds = array<i64: 512, 256>}, {pipeline_mode = #tpu.pipeline_mode<synchronous>, transform_indices = @transform_4, window_bounds = array<i64: 1, 256>}, {pipeline_mode = #tpu.pipeline_mode<synchronous>, transform_indices = @transform_5, window_bounds = array<i64: 1, 256>}, {transform_indices = @transform_6, window_bounds = array<i64: 1, 1>}, {transform_indices = @transform_7, window_bounds = array<i64: 8, 1>}]} {
    %c0 = arith.constant 0 : index
    %c0_0 = arith.constant 0 : index
    %0 = vector.load %arg1[%c0, %c0_0] : memref<8x3072xbf16, #tpu.memory_space<vmem>>, vector<8x3072xbf16>
    %c0_1 = arith.constant 0 : index
    %c0_2 = arith.constant 0 : index
    %1 = vector.load %arg2[%c0_1, %c0_2] : memref<3072x512xbf16, #tpu.memory_space<vmem>>, vector<3072x512xbf16>
    %cst = arith.constant dense<0.000000e+00> : vector<8x512xf32>
    %2 = tpu.matmul %0, %1, %cst {dimension_numbers = #tpu.dot_dimension_numbers<[1], [0], [0], [1], [0, 0, 1, 1], [], []>} : vector<8x3072xbf16>, vector<3072x512xbf16>, vector<8x512xf32> -> vector<8x512xf32>
    %c0_3 = arith.constant 0 : index
    %c0_4 = arith.constant 0 : index
    %3 = vector.load %arg3[%c0_3, %c0_4] : memref<1x512xf32, #tpu.memory_space<vmem>>, vector<1x512xf32>
    %4 = vector.broadcast %3 : vector<1x512xf32> to vector<8x512xf32>
    %5 = arith.addf %2, %4 : vector<8x512xf32>
    %cst_5 = arith.constant 0.000000e+00 : f32
    %6 = vector.broadcast %cst_5 : f32 to vector<8x512xf32>
    %7 = arith.cmpf ogt, %5, %6 : vector<8x512xf32>
    %cst_6 = arith.constant 2.000000e-01 : f32
    %8 = vector.broadcast %cst_6 : f32 to vector<8x512xf32>
    %9 = arith.mulf %8, %5 : vector<8x512xf32>
    %10 = arith.select %7, %5, %9 : vector<8x512xi1>, vector<8x512xf32>
    %11 = arith.truncf %10 : vector<8x512xf32> to vector<8x512xbf16>
    %c0_7 = arith.constant 0 : index
    %c0_8 = arith.constant 0 : index
    %12 = vector.load %arg4[%c0_7, %c0_8] : memref<512x256xbf16, #tpu.memory_space<vmem>>, vector<512x256xbf16>
    %cst_9 = arith.constant dense<0.000000e+00> : vector<8x256xf32>
    %13 = tpu.matmul %11, %12, %cst_9 {dimension_numbers = #tpu.dot_dimension_numbers<[1], [0], [0], [1], [0, 0, 1, 1], [], []>} : vector<8x512xbf16>, vector<512x256xbf16>, vector<8x256xf32> -> vector<8x256xf32>
    %c0_10 = arith.constant 0 : index
    %c0_11 = arith.constant 0 : index
    %14 = vector.load %arg5[%c0_10, %c0_11] : memref<1x256xf32, #tpu.memory_space<vmem>>, vector<1x256xf32>
    %15 = vector.broadcast %14 : vector<1x256xf32> to vector<8x256xf32>
    %16 = arith.addf %13, %15 : vector<8x256xf32>
    %cst_12 = arith.constant 0.000000e+00 : f32
    %17 = vector.broadcast %cst_12 : f32 to vector<8x256xf32>
    %18 = arith.cmpf ogt, %16, %17 : vector<8x256xf32>
    %cst_13 = arith.constant 2.000000e-01 : f32
    %19 = vector.broadcast %cst_13 : f32 to vector<8x256xf32>
    %20 = arith.mulf %19, %16 : vector<8x256xf32>
    %21 = arith.select %18, %16, %20 : vector<8x256xi1>, vector<8x256xf32>
    %c0_14 = arith.constant 0 : index
    %c0_15 = arith.constant 0 : index
    %22 = vector.load %arg6[%c0_14, %c0_15] : memref<1x256xbf16, #tpu.memory_space<vmem>>, vector<1x256xbf16>
    %23 = arith.extf %22 : vector<1x256xbf16> to vector<1x256xf32>
    %24 = vector.broadcast %23 : vector<1x256xf32> to vector<8x256xf32>
    %25 = arith.mulf %21, %24 : vector<8x256xf32>
    %cst_16 = arith.constant dense<0.000000e+00> : vector<8xf32>
    %26 = vector.multi_reduction <add>, %25, %cst_16 [1] : vector<8x256xf32> to vector<8xf32>
    %27 = vector.shape_cast %26 : vector<8xf32> to vector<8x1xf32>
    %c0_17 = arith.constant 0 : index
    %c0_18 = arith.constant 0 : index
    %28 = memref.load %arg7[%c0_17, %c0_18] : memref<1x1xf32, #tpu.memory_space<smem>>
    %29 = vector.broadcast %28 : f32 to vector<8x1xf32>
    %30 = arith.addf %27, %29 : vector<8x1xf32>
    %31 = arith.negf %30 : vector<8x1xf32>
    %32 = math.exp %31 : vector<8x1xf32>
    %cst_19 = arith.constant 1.000000e+00 : f32
    %33 = vector.broadcast %cst_19 : f32 to vector<8x1xf32>
    %34 = arith.addf %33, %32 : vector<8x1xf32>
    %35 = arith.divf %33, %34 : vector<8x1xf32>
    %c0_20 = arith.constant 0 : index
    %c0_21 = arith.constant 0 : index
    %36 = vector.load %arg8[%c0_20, %c0_21] : memref<8x1xf32, #tpu.memory_space<vmem>>, vector<8x1xf32>
    tpu.vector_store %arg8[%c0_20, %c0_21], %35 {strides = array<i32>} : memref<8x1xf32, #tpu.memory_space<vmem>>, vector<8x1xf32>,
    return
  }
  func.func @transform_0(%arg0: i32) -> (i32, i32) {
    %c0_i32 = arith.constant 0 : i32
    %c0_i32_0 = arith.constant 0 : i32
    return %arg0, %c0_i32 : i32, i32
  }
  func.func @transform_1(%arg0: i32) -> (i32, i32) {
    %c0_i32 = arith.constant 0 : i32
    %c0_i32_0 = arith.constant 0 : i32
    %c0_i32_1 = arith.constant 0 : i32
    return %c0_i32, %c0_i32_0 : i32, i32
  }
  func.func @transform_2(%arg0: i32) -> (i32, i32) {
    %c0_i32 = arith.constant 0 : i32
    %c0_i32_0 = arith.constant 0 : i32
    %c0_i32_1 = arith.constant 0 : i32
    return %c0_i32, %c0_i32_0 : i32, i32
  }
  func.func @transform_3(%arg0: i32) -> (i32, i32) {
    %c0_i32 = arith.constant 0 : i32
    %c0_i32_0 = arith.constant 0 : i32
    %c0_i32_1 = arith.constant 0 : i32
    return %c0_i32, %c0_i32_0 : i32, i32
  }
  func.func @transform_4(%arg0: i32) -> (i32, i32) {
    %c0_i32 = arith.constant 0 : i32
    %c0_i32_0 = arith.constant 0 : i32
    %c0_i32_1 = arith.constant 0 : i32
    return %c0_i32, %c0_i32_0 : i32, i32
  }
  func.func @transform_5(%arg0: i32) -> (i32, i32) {
    %c0_i32 = arith.constant 0 : i32
    %c0_i32_0 = arith.constant 0 : i32
    %c0_i32_1 = arith.constant 0 : i32
    return %c0_i32, %c0_i32_0 : i32, i32
  }
  func.func @transform_6(%arg0: i32) -> (i32, i32) {
    %c0_i32 = arith.constant 0 : i32
    %c0_i32_0 = arith.constant 0 : i32
    %c0_i32_1 = arith.constant 0 : i32
    return %c0_i32, %c0_i32_0 : i32, i32
  }
  func.func @transform_7(%arg0: i32) -> (i32, i32) {
    %c0_i32 = arith.constant 0 : i32
    %c0_i32_0 = arith.constant 0 : i32
    return %arg0, %c0_i32 : i32, i32
  }
}

</mosaic_0001>

<llo_original>
// kernel: tpu_custom_call.1
$region0: #{tpu_custom_call.1}
  #allocation0 [shape = 'u32[]', space=smem, size = 0x4, offset = 0x4, fixed_abs, tag = 'smem constant byte address 0x4 - core index']
  #allocation1 [shape = 'u32[144,128]{1,0:T(1,128)}', space=vmem, size = 0x12000, scoped, tag = 'internal scratch']
  #allocation2 [shape = 'f32[1,1]{1,0:T(1,128)S(6)}', space=smem, size = 0x200, scoped, tag = 'scoped memory for tpu_custom_call.1']
  %s0 = inlined_call_operand.hbm [shape: bf16[8,3072], index: 0, kind: input, shape index: {}]
  %s1 = inlined_call_operand.hbm [shape: bf16[3072,512], index: 1, kind: input, shape index: {}]
  %s2 = inlined_call_operand.hbm [shape: f32[1,512], index: 2, kind: input, shape index: {}]
  %s3 = inlined_call_operand.hbm [shape: bf16[512,256], index: 3, kind: input, shape index: {}]
  %s4 = inlined_call_operand.hbm [shape: f32[1,256], index: 4, kind: input, shape index: {}]
  %s5 = inlined_call_operand.hbm [shape: bf16[1,256], index: 5, kind: input, shape index: {}]
  %s6 = inlined_call_operand.<no memory space> [shape: f32[1,1], index: 6, kind: input, shape index: {}]
  %s7 = inlined_call_operand.vmem [shape: f32[8,1], index: 7, kind: output, shape index: {}]
  %s8 = sld [smem:[#allocation0]]
  $region62: #{tpu_custom_call.1} parent=0
    _
  %s10 = ssub.s32 1, %s8
  %s11 = scalar_select 0, %s10, %s8
  %12 = sst [smem:[#allocation2]] %s6
  $region1: #{tpu_custom_call.1} parent=0
    #allocation3 [shape = 'u8[49152]{0}', space=vmem, size = 0xc000, scoped, tag = 'input window, operand 0, single buffered']
    #allocation4 [shape = 's32[1]{0}', space=sflag, size = 0x4, scoped, tag = 'scoped memory for tpu_custom_call.1']
    #allocation5 [shape = 'u8[3145728]{0}', space=vmem, size = 0x300000, scoped, tag = 'input window, operand 1, single buffered']
    #allocation6 [shape = 's32[1]{0}', space=sflag, size = 0x4, scoped, tag = 'scoped memory for tpu_custom_call.1']
    #allocation7 [shape = 'u8[2048]{0}', space=vmem, size = 0x800, scoped, tag = 'input window, operand 2, single buffered']
    #allocation8 [shape = 'u8[262144]{0}', space=vmem, size = 0x40000, scoped, tag = 'input window, operand 3, single buffered']
    #allocation9 [shape = 's32[1]{0}', space=sflag, size = 0x4, scoped, tag = 'scoped memory for tpu_custom_call.1']
    #allocation10 [shape = 'u8[1024]{0}', space=vmem, size = 0x400, scoped, tag = 'input window, operand 4, single buffered']
    #allocation11 [shape = 'u8[1024]{0}', space=vmem, size = 0x400, scoped, tag = 'input window, operand 5, single buffered']
    #allocation12 [shape = 's32[1]{0}', space=sflag, size = 0x4, scoped, tag = 'scoped memory for tpu_custom_call.1']
    %13 = vsyncpa [#allocation4], 0
    %14 = vsyncpa [#allocation6], 0
    %15 = vsyncpa [#allocation9], 0
    %16 = vsyncpa [#allocation12], 0
    // Predicated region
    $region2: #{tpu_custom_call.1} parent=1 // pred_check
      _
    $region3: #{tpu_custom_call.1} parent=1 // pred_check_branch
      %18 = sbr.rel (0) target = $region5
    $region4: #{tpu_custom_call.1} parent=1 // pred_region
      %s20 = ssub.s32 1536, 1536
      %21 = vsyncadd [#allocation4], %s20
      %s23 = sshll.u32 [#allocation3], 4
      %s24 = int_to_ptr.vmem [resolvable:$true] %s23
      %26 = dma.hbm_to_vmem [thread:$0]  %s0, 1536, %s24, [#allocation4]
    $region5: #{tpu_custom_call.1} parent=1 // pred_fallthru
      _
    // Predicated region
    $region6: #{tpu_custom_call.1} parent=1 // pred_check
      _
    $region7: #{tpu_custom_call.1} parent=1 // pred_check_branch
      %28 = sbr.rel (0) target = $region9
    $region8: #{tpu_custom_call.1} parent=1 // pred_region
      %s30 = ssub.s32 98304, 98304
      %31 = vsyncadd [#allocation6], %s30
      %s32 = sshll.u32 [#allocation5], 4
      %s33 = int_to_ptr.vmem [resolvable:$true] %s32
      %38 = dma.hbm_to_vmem [thread:$0]  %s1, 98304, %s33, [#allocation6], 256, 256, 16
    $region9: #{tpu_custom_call.1} parent=1 // pred_fallthru
      _
    // Predicated region
    $region10: #{tpu_custom_call.1} parent=1 // pred_check
      _
    $region11: #{tpu_custom_call.1} parent=1 // pred_check_branch
      %40 = sbr.rel (0) target = $region13
    $region12: #{tpu_custom_call.1} parent=1 // pred_region
      %s42 = ssub.s32 64, 64
      %43 = vsyncadd [#allocation6], %s42
      %s45 = sshll.u32 [#allocation7], 4
      %s46 = int_to_ptr.vmem [resolvable:$true] %s45
      %48 = dma.hbm_to_vmem [thread:$0]  %s2, 64, %s46, [#allocation6]
    $region13: #{tpu_custom_call.1} parent=1 // pred_fallthru
      _
    // Predicated region
    $region14: #{tpu_custom_call.1} parent=1 // pred_check
      _
    $region15: #{tpu_custom_call.1} parent=1 // pred_check_branch
      %50 = sbr.rel (0) target = $region17
    $region16: #{tpu_custom_call.1} parent=1 // pred_region
      %s52 = ssub.s32 8192, 8192
      %53 = vsyncadd [#allocation9], %s52
      %s54 = sshll.u32 [#allocation8], 4
      %s55 = int_to_ptr.vmem [resolvable:$true] %s54
      %60 = dma.hbm_to_vmem [thread:$0]  %s3, 8192, %s55, [#allocation9], 128, 128, 8
    $region17: #{tpu_custom_call.1} parent=1 // pred_fallthru
      _
    // Predicated region
    $region18: #{tpu_custom_call.1} parent=1 // pred_check
      _
    $region19: #{tpu_custom_call.1} parent=1 // pred_check_branch
      %62 = sbr.rel (0) target = $region21
    $region20: #{tpu_custom_call.1} parent=1 // pred_region
      %s64 = ssub.s32 32, 32
      %65 = vsyncadd [#allocation9], %s64
      %s67 = sshll.u32 [#allocation10], 4
      %s68 = int_to_ptr.vmem [resolvable:$true] %s67
      %70 = dma.hbm_to_vmem [thread:$0]  %s4, 32, %s68, [#allocation9]
    $region21: #{tpu_custom_call.1} parent=1 // pred_fallthru
      _
    // Predicated region
    $region22: #{tpu_custom_call.1} parent=1 // pred_check
      _
    $region23: #{tpu_custom_call.1} parent=1 // pred_check_branch
      %72 = sbr.rel (0) target = $region25
    $region24: #{tpu_custom_call.1} parent=1 // pred_region
      %s74 = ssub.s32 32, 32
      %75 = vsyncadd [#allocation12], %s74
      %s77 = sshll.u32 [#allocation11], 4
      %s78 = int_to_ptr.vmem [resolvable:$true] %s77
      %80 = dma.hbm_to_vmem [thread:$0]  %s5, 32, %s78, [#allocation12]
    $region25: #{tpu_custom_call.1} parent=1 // pred_fallthru
      _
    // Predicated region
    $region26: #{tpu_custom_call.1} parent=1 // pred_check
      _
    $region27: #{tpu_custom_call.1} parent=1 // pred_check_branch
      %82 = sbr.rel (0) target = $region29
    $region28: #{tpu_custom_call.1} parent=1 // pred_region
      _
    $region29: #{tpu_custom_call.1} parent=1 // pred_fallthru
      _
    // Predicated region
    $region30: #{tpu_custom_call.1} parent=1 // pred_check
      _
    $region31: #{tpu_custom_call.1} parent=1 // pred_check_branch
      %84 = sbr.rel (0) target = $region33
    $region32: #{tpu_custom_call.1} parent=1 // pred_region
      %85 = dma.done [#allocation4], 1536
    $region33: #{tpu_custom_call.1} parent=1 // pred_fallthru
      _
    // Predicated region
    $region34: #{tpu_custom_call.1} parent=1 // pred_check
      _
    $region35: #{tpu_custom_call.1} parent=1 // pred_check_branch
      %87 = sbr.rel (0) target = $region37
    $region36: #{tpu_custom_call.1} parent=1 // pred_region
      %88 = dma.done [#allocation6], 98304
    $region37: #{tpu_custom_call.1} parent=1 // pred_fallthru
      _
    // Predicated region
    $region38: #{tpu_custom_call.1} parent=1 // pred_check
      _
    $region39: #{tpu_custom_call.1} parent=1 // pred_check_branch
      %90 = sbr.rel (0) target = $region41
    $region40: #{tpu_custom_call.1} parent=1 // pred_region
      %91 = dma.done [#allocation6], 64
    $region41: #{tpu_custom_call.1} parent=1 // pred_fallthru
      _
    // Predicated region
    $region42: #{tpu_custom_call.1} parent=1 // pred_check
      _
    $region43: #{tpu_custom_call.1} parent=1 // pred_check_branch
      %93 = sbr.rel (0) target = $region45
    $region44: #{tpu_custom_call.1} parent=1 // pred_region
      %94 = dma.done [#allocation9], 8192
    $region45: #{tpu_custom_call.1} parent=1 // pred_fallthru
      _
    // Predicated region
    $region46: #{tpu_custom_call.1} parent=1 // pred_check
      _
    $region47: #{tpu_custom_call.1} parent=1 // pred_check_branch
      %96 = sbr.rel (0) target = $region49
    $region48: #{tpu_custom_call.1} parent=1 // pred_region
      %97 = dma.done [#allocation9], 32
    $region49: #{tpu_custom_call.1} parent=1 // pred_fallthru
      _
    // Predicated region
    $region50: #{tpu_custom_call.1} parent=1 // pred_check
      _
    $region51: #{tpu_custom_call.1} parent=1 // pred_check_branch
      %99 = sbr.rel (0) target = $region53
    $region52: #{tpu_custom_call.1} parent=1 // pred_region
      %100 = dma.done [#allocation12], 32
    $region53: #{tpu_custom_call.1} parent=1 // pred_fallthru
      _
    %v101 = vld [vmem:[#allocation3] sm:$0xff]
    %v102 = vld [vmem:[#allocation3 + $0x8] sm:$0xff]
    %v103 = vld [vmem:[#allocation3 + $0x10] sm:$0xff]
    %v104 = vld [vmem:[#allocation3 + $0x18] sm:$0xff]
    %v105 = vld [vmem:[#allocation3 + $0x20] sm:$0xff]
    %v106 = vld [vmem:[#allocation3 + $0x28] sm:$0xff]
    %v107 = vld [vmem:[#allocation3 + $0x30] sm:$0xff]
    %v108 = vld [vmem:[#allocation3 + $0x38] sm:$0xff]
    %v109 = vld [vmem:[#allocation3 + $0x40] sm:$0xff]
    %v110 = vld [vmem:[#allocation3 + $0x48] sm:$0xff]
    %v111 = vld [vmem:[#allocation3 + $0x50] sm:$0xff]
    %v112 = vld [vmem:[#allocation3 + $0x58] sm:$0xff]
    %v113 = vld [vmem:[#allocation5] sm:$0xff]
    %v114 = vld [vmem:[#allocation5 + $0x8] sm:$0xff]
    %v115 = vld [vmem:[#allocation5 + $0x10] sm:$0xff]
    %v116 = vld [vmem:[#allocation5 + $0x18] sm:$0xff]
    %v117 = vld [vmem:[#allocation5 + $0x20] sm:$0xff]
    %v118 = vld [vmem:[#allocation5 + $0x28] sm:$0xff]
    %v119 = vld [vmem:[#allocation5 + $0x30] sm:$0xff]
    %v120 = vld [vmem:[#allocation5 + $0x38] sm:$0xff]
    %v121 = vld [vmem:[#allocation5 + $0x40] sm:$0xff]
    %v122 = vld [vmem:[#allocation5 + $0x48] sm:$0xff]
    %v123 = vld [vmem:[#allocation5 + $0x50] sm:$0xff]
    %v124 = vld [vmem:[#allocation5 + $0x58] sm:$0xff]
    %v125 = vld [vmem:[#allocation5 + $0x60] sm:$0xff]
    %v126 = vld [vmem:[#allocation5 + $0x68] sm:$0xff]
    %v127 = vld [vmem:[#allocation5 + $0x70] sm:$0xff]
    %v128 = vld [vmem:[#allocation5 + $0x78] sm:$0xff]
    %v129 = vld [vmem:[#allocation5 + $0x80] sm:$0xff]
    %v130 = vld [vmem:[#allocation5 + $0x88] sm:$0xff]
    %v131 = vld [vmem:[#allocation5 + $0x90] sm:$0xff]
    %v132 = vld [vmem:[#allocation5 + $0x98] sm:$0xff]
    %v133 = vld [vmem:[#allocation5 + $0xa0] sm:$0xff]
    %v134 = vld [vmem:[#allocation5 + $0xa8] sm:$0xff]
    %v135 = vld [vmem:[#allocation5 + $0xb0] sm:$0xff]
    %v136 = vld [vmem:[#allocation5 + $0xb8] sm:$0xff]
    %v137 = vld [vmem:[#allocation5 + $0xc0] sm:$0xff]
    %v138 = vld [vmem:[#allocation5 + $0xc8] sm:$0xff]
    %v139 = vld [vmem:[#allocation5 + $0xd0] sm:$0xff]
    %v140 = vld [vmem:[#allocation5 + $0xd8] sm:$0xff]
    %v141 = vld [vmem:[#allocation5 + $0xe0] sm:$0xff]
    %v142 = vld [vmem:[#allocation5 + $0xe8] sm:$0xff]
    %v143 = vld [vmem:[#allocation5 + $0xf0] sm:$0xff]
    %v144 = vld [vmem:[#allocation5 + $0xf8] sm:$0xff]
    %v145 = vld [vmem:[#allocation5 + $0x100] sm:$0xff]
    %v146 = vld [vmem:[#allocation5 + $0x108] sm:$0xff]
    %v147 = vld [vmem:[#allocation5 + $0x110] sm:$0xff]
    %v148 = vld [vmem:[#allocation5 + $0x118] sm:$0xff]
    %v149 = vld [vmem:[#allocation5 + $0x120] sm:$0xff]
    %v150 = vld [vmem:[#allocation5 + $0x128] sm:$0xff]
    %v151 = vld [vmem:[#allocation5 + $0x130] sm:$0xff]
    %v152 = vld [vmem:[#allocation5 + $0x138] sm:$0xff]
    %v153 = vld [vmem:[#allocation5 + $0x140] sm:$0xff]
    %v154 = vld [vmem:[#allocation5 + $0x148] sm:$0xff]
    %v155 = vld [vmem:[#allocation5 + $0x150] sm:$0xff]
    %v156 = vld [vmem:[#allocation5 + $0x158] sm:$0xff]
    %v157 = vld [vmem:[#allocation5 + $0x160] sm:$0xff]
    %v158 = vld [vmem:[#allocation5 + $0x168] sm:$0xff]
    %v159 = vld [vmem:[#allocation5 + $0x170] sm:$0xff]
    %v160 = vld [vmem:[#allocation5 + $0x178] sm:$0xff]
    %v161 = vld [vmem:[#allocation5 + $0x180] sm:$0xff]
    %v162 = vld [vmem:[#allocation5 + $0x188] sm:$0xff]
    %v163 = vld [vmem:[#allocation5 + $0x190] sm:$0xff]
    %v164 = vld [vmem:[#allocation5 + $0x198] sm:$0xff]
    %v165 = vld [vmem:[#allocation5 + $0x1a0] sm:$0xff]
    %v166 = vld [vmem:[#allocation5 + $0x1a8] sm:$0xff]
    %v167 = vld [vmem:[#allocation5 + $0x1b0] sm:$0xff]
    %v168 = vld [vmem:[#allocation5 + $0x1b8] sm:$0xff]
    %v169 = vld [vmem:[#allocation5 + $0x1c0] sm:$0xff]
    %v170 = vld [vmem:[#allocation5 + $0x1c8] sm:$0xff]
    %v171 = vld [vmem:[#allocation5 + $0x1d0] sm:$0xff]
    %v172 = vld [vmem:[#allocation5 + $0x1d8] sm:$0xff]
    %v173 = vld [vmem:[#allocation5 + $0x1e0] sm:$0xff]
    %v174 = vld [vmem:[#allocation5 + $0x1e8] sm:$0xff]
    %v175 = vld [vmem:[#allocation5 + $0x1f0] sm:$0xff]
    %v176 = vld [vmem:[#allocation5 + $0x1f8] sm:$0xff]
    %v177 = vld [vmem:[#allocation5 + $0x200] sm:$0xff]
    %v178 = vld [vmem:[#allocation5 + $0x208] sm:$0xff]
    %v179 = vld [vmem:[#allocation5 + $0x210] sm:$0xff]
    %v180 = vld [vmem:[#allocation5 + $0x218] sm:$0xff]
    %v181 = vld [vmem:[#allocation5 + $0x220] sm:$0xff]
    %v182 = vld [vmem:[#allocation5 + $0x228] sm:$0xff]
    %v183 = vld [vmem:[#allocation5 + $0x230] sm:$0xff]
    %v184 = vld [vmem:[#allocation5 + $0x238] sm:$0xff]
    %v185 = vld [vmem:[#allocation5 + $0x240] sm:$0xff]
    %v186 = vld [vmem:[#allocation5 + $0x248] sm:$0xff]
    %v187 = vld [vmem:[#allocation5 + $0x250] sm:$0xff]
    %v188 = vld [vmem:[#allocation5 + $0x258] sm:$0xff]
    %v189 = vld [vmem:[#allocation5 + $0x260] sm:$0xff]
    %v190 = vld [vmem:[#allocation5 + $0x268] sm:$0xff]
    %v191 = vld [vmem:[#allocation5 + $0x270] sm:$0xff]
    %v192 = vld [vmem:[#allocation5 + $0x278] sm:$0xff]
    %v193 = vld [vmem:[#allocation5 + $0x280] sm:$0xff]
    %v194 = vld [vmem:[#allocation5 + $0x288] sm:$0xff]
    %v195 = vld [vmem:[#allocation5 + $0x290] sm:$0xff]
    %v196 = vld [vmem:[#allocation5 + $0x298] sm:$0xff]
    %v197 = vld [vmem:[#allocation5 + $0x2a0] sm:$0xff]
    %v198 = vld [vmem:[#allocation5 + $0x2a8] sm:$0xff]
    %v199 = vld [vmem:[#allocation5 + $0x2b0] sm:$0xff]
    %v200 = vld [vmem:[#allocation5 + $0x2b8] sm:$0xff]
    %v201 = vld [vmem:[#allocation5 + $0x2c0] sm:$0xff]
    %v202 = vld [vmem:[#allocation5 + $0x2c8] sm:$0xff]
    %v203 = vld [vmem:[#allocation5 + $0x2d0] sm:$0xff]
    %v204 = vld [vmem:[#allocation5 + $0x2d8] sm:$0xff]
    %v205 = vld [vmem:[#allocation5 + $0x2e0] sm:$0xff]
    %v206 = vld [vmem:[#allocation5 + $0x2e8] sm:$0xff]
    %v207 = vld [vmem:[#allocation5 + $0x2f0] sm:$0xff]
    %v208 = vld [vmem:[#allocation5 + $0x2f8] sm:$0xff]
    %v209 = vld [vmem:[#allocation5 + $0x300] sm:$0xff]
    %v210 = vld [vmem:[#allocation5 + $0x308] sm:$0xff]
    %v211 = vld [vmem:[#allocation5 + $0x310] sm:$0xff]
    %v212 = vld [vmem:[#allocation5 + $0x318] sm:$0xff]
    %v213 = vld [vmem:[#allocation5 + $0x320] sm:$0xff]
    %v214 = vld [vmem:[#allocation5 + $0x328] sm:$0xff]
    %v215 = vld [vmem:[#allocation5 + $0x330] sm:$0xff]
    %v216 = vld [vmem:[#allocation5 + $0x338] sm:$0xff]
    %v217 = vld [vmem:[#allocation5 + $0x340] sm:$0xff]
    %v218 = vld [vmem:[#allocation5 + $0x348] sm:$0xff]
    %v219 = vld [vmem:[#allocation5 + $0x350] sm:$0xff]
    %v220 = vld [vmem:[#allocation5 + $0x358] sm:$0xff]
    %v221 = vld [vmem:[#allocation5 + $0x360] sm:$0xff]
    %v222 = vld [vmem:[#allocation5 + $0x368] sm:$0xff]
    %v223 = vld [vmem:[#allocation5 + $0x370] sm:$0xff]
    %v224 = vld [vmem:[#allocation5 + $0x378] sm:$0xff]
    %v225 = vld [vmem:[#allocation5 + $0x380] sm:$0xff]
    %v226 = vld [vmem:[#allocation5 + $0x388] sm:$0xff]
    %v227 = vld [vmem:[#allocation5 + $0x390] sm:$0xff]
    %v228 = vld [vmem:[#allocation5 + $0x398] sm:$0xff]
    %v229 = vld [vmem:[#allocation5 + $0x3a0] sm:$0xff]
    %v230 = vld [vmem:[#allocation5 + $0x3a8] sm:$0xff]
    %v231 = vld [vmem:[#allocation5 + $0x3b0] sm:$0xff]
    %v232 = vld [vmem:[#allocation5 + $0x3b8] sm:$0xff]
    %v233 = vld [vmem:[#allocation5 + $0x3c0] sm:$0xff]
    %v234 = vld [vmem:[#allocation5 + $0x3c8] sm:$0xff]
    %v235 = vld [vmem:[#allocation5 + $0x3d0] sm:$0xff]
    %v236 = vld [vmem:[#allocation5 + $0x3d8] sm:$0xff]
    %v237 = vld [vmem:[#allocation5 + $0x3e0] sm:$0xff]
    %v238 = vld [vmem:[#allocation5 + $0x3e8] sm:$0xff]
    %v239 = vld [vmem:[#allocation5 + $0x3f0] sm:$0xff]
    %v240 = vld [vmem:[#allocation5 + $0x3f8] sm:$0xff]
    %v241 = vld [vmem:[#allocation5 + $0x400] sm:$0xff]
    %v242 = vld [vmem:[#allocation5 + $0x408] sm:$0xff]
    %v243 = vld [vmem:[#allocation5 + $0x410] sm:$0xff]
    %v244 = vld [vmem:[#allocation5 + $0x418] sm:$0xff]
    %v245 = vld [vmem:[#allocation5 + $0x420] sm:$0xff]
    %v246 = vld [vmem:[#allocation5 + $0x428] sm:$0xff]
    %v247 = vld [vmem:[#allocation5 + $0x430] sm:$0xff]
    %v248 = vld [vmem:[#allocation5 + $0x438] sm:$0xff]
    %v249 = vld [vmem:[#allocation5 + $0x440] sm:$0xff]
    %v250 = vld [vmem:[#allocation5 + $0x448] sm:$0xff]
    %v251 = vld [vmem:[#allocation5 + $0x450] sm:$0xff]
    %v252 = vld [vmem:[#allocation5 + $0x458] sm:$0xff]
    %v253 = vld [vmem:[#allocation5 + $0x460] sm:$0xff]
    %v254 = vld [vmem:[#allocation5 + $0x468] sm:$0xff]
    %v255 = vld [vmem:[#allocation5 + $0x470] sm:$0xff]
    %v256 = vld [vmem:[#allocation5 + $0x478] sm:$0xff]
    %v257 = vld [vmem:[#allocation5 + $0x480] sm:$0xff]
    %v258 = vld [vmem:[#allocation5 + $0x488] sm:$0xff]
    %v259 = vld [vmem:[#allocation5 + $0x490] sm:$0xff]
    %v260 = vld [vmem:[#allocation5 + $0x498] sm:$0xff]
    %v261 = vld [vmem:[#allocation5 + $0x4a0] sm:$0xff]
    %v262 = vld [vmem:[#allocation5 + $0x4a8] sm:$0xff]
    %v263 = vld [vmem:[#allocation5 + $0x4b0] sm:$0xff]
    %v264 = vld [vmem:[#allocation5 + $0x4b8] sm:$0xff]
    %v265 = vld [vmem:[#allocation5 + $0x4c0] sm:$0xff]
    %v266 = vld [vmem:[#allocation5 + $0x4c8] sm:$0xff]
    %v267 = vld [vmem:[#allocation5 + $0x4d0] sm:$0xff]
    %v268 = vld [vmem:[#allocation5 + $0x4d8] sm:$0xff]
    %v269 = vld [vmem:[#allocation5 + $0x4e0] sm:$0xff]
    %v270 = vld [vmem:[#allocation5 + $0x4e8] sm:$0xff]
    %v271 = vld [vmem:[#allocation5 + $0x4f0] sm:$0xff]
    %v272 = vld [vmem:[#allocation5 + $0x4f8] sm:$0xff]
    %v273 = vld [vmem:[#allocation5 + $0x500] sm:$0xff]
    %v274 = vld [vmem:[#allocation5 + $0x508] sm:$0xff]
    %v275 = vld [vmem:[#allocation5 + $0x510] sm:$0xff]
    %v276 = vld [vmem:[#allocation5 + $0x518] sm:$0xff]
    %v277 = vld [vmem:[#allocation5 + $0x520] sm:$0xff]
    %v278 = vld [vmem:[#allocation5 + $0x528] sm:$0xff]
    %v279 = vld [vmem:[#allocation5 + $0x530] sm:$0xff]
    %v280 = vld [vmem:[#allocation5 + $0x538] sm:$0xff]
    %v281 = vld [vmem:[#allocation5 + $0x540] sm:$0xff]
    %v282 = vld [vmem:[#allocation5 + $0x548] sm:$0xff]
    %v283 = vld [vmem:[#allocation5 + $0x550] sm:$0xff]
    %v284 = vld [vmem:[#allocation5 + $0x558] sm:$0xff]
    %v285 = vld [vmem:[#allocation5 + $0x560] sm:$0xff]
    %v286 = vld [vmem:[#allocation5 + $0x568] sm:$0xff]
    %v287 = vld [vmem:[#allocation5 + $0x570] sm:$0xff]
    %v288 = vld [vmem:[#allocation5 + $0x578] sm:$0xff]
    %v289 = vld [vmem:[#allocation5 + $0x580] sm:$0xff]
    %v290 = vld [vmem:[#allocation5 + $0x588] sm:$0xff]
    %v291 = vld [vmem:[#allocation5 + $0x590] sm:$0xff]
    %v292 = vld [vmem:[#allocation5 + $0x598] sm:$0xff]
    %v293 = vld [vmem:[#allocation5 + $0x5a0] sm:$0xff]
    %v294 = vld [vmem:[#allocation5 + $0x5a8] sm:$0xff]
    %v295 = vld [vmem:[#allocation5 + $0x5b0] sm:$0xff]
    %v296 = vld [vmem:[#allocation5 + $0x5b8] sm:$0xff]
    %v297 = vld [vmem:[#allocation5 + $0x5c0] sm:$0xff]
    %v298 = vld [vmem:[#allocation5 + $0x5c8] sm:$0xff]
    %v299 = vld [vmem:[#allocation5 + $0x5d0] sm:$0xff]
    %v300 = vld [vmem:[#allocation5 + $0x5d8] sm:$0xff]
    %v301 = vld [vmem:[#allocation5 + $0x5e0] sm:$0xff]
    %v302 = vld [vmem:[#allocation5 + $0x5e8] sm:$0xff]
    %v303 = vld [vmem:[#allocation5 + $0x5f0] sm:$0xff]
    %v304 = vld [vmem:[#allocation5 + $0x5f8] sm:$0xff]
    %v305 = vld [vmem:[#allocation5 + $0x600] sm:$0xff]
    %v306 = vld [vmem:[#allocation5 + $0x608] sm:$0xff]
    %v307 = vld [vmem:[#allocation5 + $0x610] sm:$0xff]
    %v308 = vld [vmem:[#allocation5 + $0x618] sm:$0xff]
    %v309 = vld [vmem:[#allocation5 + $0x620] sm:$0xff]
    %v310 = vld [vmem:[#allocation5 + $0x628] sm:$0xff]
    %v311 = vld [vmem:[#allocation5 + $0x630] sm:$0xff]
    %v312 = vld [vmem:[#allocation5 + $0x638] sm:$0xff]
    %v313 = vld [vmem:[#allocation5 + $0x640] sm:$0xff]
    %v314 = vld [vmem:[#allocation5 + $0x648] sm:$0xff]
    %v315 = vld [vmem:[#allocation5 + $0x650] sm:$0xff]
    %v316 = vld [vmem:[#allocation5 + $0x658] sm:$0xff]
    %v317 = vld [vmem:[#allocation5 + $0x660] sm:$0xff]
    %v318 = vld [vmem:[#allocation5 + $0x668] sm:$0xff]
    %v319 = vld [vmem:[#allocation5 + $0x670] sm:$0xff]
    %v320 = vld [vmem:[#allocation5 + $0x678] sm:$0xff]
    %v321 = vld [vmem:[#allocation5 + $0x680] sm:$0xff]
    %v322 = vld [vmem:[#allocation5 + $0x688] sm:$0xff]
    %v323 = vld [vmem:[#allocation5 + $0x690] sm:$0xff]
    %v324 = vld [vmem:[#allocation5 + $0x698] sm:$0xff]
    %v325 = vld [vmem:[#allocation5 + $0x6a0] sm:$0xff]
    %v326 = vld [vmem:[#allocation5 + $0x6a8] sm:$0xff]
    %v327 = vld [vmem:[#allocation5 + $0x6b0] sm:$0xff]
    %v328 = vld [vmem:[#allocation5 + $0x6b8] sm:$0xff]
    %v329 = vld [vmem:[#allocation5 + $0x6c0] sm:$0xff]
    %v330 = vld [vmem:[#allocation5 + $0x6c8] sm:$0xff]
    %v331 = vld [vmem:[#allocation5 + $0x6d0] sm:$0xff]
    %v332 = vld [vmem:[#allocation5 + $0x6d8] sm:$0xff]
    %v333 = vld [vmem:[#allocation5 + $0x6e0] sm:$0xff]
    %v334 = vld [vmem:[#allocation5 + $0x6e8] sm:$0xff]
    %v335 = vld [vmem:[#allocation5 + $0x6f0] sm:$0xff]
    %v336 = vld [vmem:[#allocation5 + $0x6f8] sm:$0xff]
    %v337 = vld [vmem:[#allocation5 + $0x700] sm:$0xff]
    %v338 = vld [vmem:[#allocation5 + $0x708] sm:$0xff]
    %v339 = vld [vmem:[#allocation5 + $0x710] sm:$0xff]
    %v340 = vld [vmem:[#allocation5 + $0x718] sm:$0xff]
    %v341 = vld [vmem:[#allocation5 + $0x720] sm:$0xff]
    %v342 = vld [vmem:[#allocation5 + $0x728] sm:$0xff]
    %v343 = vld [vmem:[#allocation5 + $0x730] sm:$0xff]
    %v344 = vld [vmem:[#allocation5 + $0x738] sm:$0xff]
    %v345 = vld [vmem:[#allocation5 + $0x740] sm:$0xff]
    %v346 = vld [vmem:[#allocation5 + $0x748] sm:$0xff]
    %v347 = vld [vmem:[#allocation5 + $0x750] sm:$0xff]
    %v348 = vld [vmem:[#allocation5 + $0x758] sm:$0xff]
    %v349 = vld [vmem:[#allocation5 + $0x760] sm:$0xff]
    %v350 = vld [vmem:[#allocation5 + $0x768] sm:$0xff]
    %v351 = vld [vmem:[#allocation5 + $0x770] sm:$0xff]
    %v352 = vld [vmem:[#allocation5 + $0x778] sm:$0xff]
    %v353 = vld [vmem:[#allocation5 + $0x780] sm:$0xff]
    %v354 = vld [vmem:[#allocation5 + $0x788] sm:$0xff]
    %v355 = vld [vmem:[#allocation5 + $0x790] sm:$0xff]
    %v356 = vld [vmem:[#allocation5 + $0x798] sm:$0xff]
    %v357 = vld [vmem:[#allocation5 + $0x7a0] sm:$0xff]
    %v358 = vld [vmem:[#allocation5 + $0x7a8] sm:$0xff]
    %v359 = vld [vmem:[#allocation5 + $0x7b0] sm:$0xff]
    %v360 = vld [vmem:[#allocation5 + $0x7b8] sm:$0xff]
    %v361 = vld [vmem:[#allocation5 + $0x7c0] sm:$0xff]
    %v362 = vld [vmem:[#allocation5 + $0x7c8] sm:$0xff]
    %v363 = vld [vmem:[#allocation5 + $0x7d0] sm:$0xff]
    %v364 = vld [vmem:[#allocation5 + $0x7d8] sm:$0xff]
    %v365 = vld [vmem:[#allocation5 + $0x7e0] sm:$0xff]
    %v366 = vld [vmem:[#allocation5 + $0x7e8] sm:$0xff]
    %v367 = vld [vmem:[#allocation5 + $0x7f0] sm:$0xff]
    %v368 = vld [vmem:[#allocation5 + $0x7f8] sm:$0xff]
    %v369 = vld [vmem:[#allocation5 + $0x800] sm:$0xff]
    %v370 = vld [vmem:[#allocation5 + $0x808] sm:$0xff]
    %v371 = vld [vmem:[#allocation5 + $0x810] sm:$0xff]
    %v372 = vld [vmem:[#allocation5 + $0x818] sm:$0xff]
    %v373 = vld [vmem:[#allocation5 + $0x820] sm:$0xff]
    %v374 = vld [vmem:[#allocation5 + $0x828] sm:$0xff]
    %v375 = vld [vmem:[#allocation5 + $0x830] sm:$0xff]
    %v376 = vld [vmem:[#allocation5 + $0x838] sm:$0xff]
    %v377 = vld [vmem:[#allocation5 + $0x840] sm:$0xff]
    %v378 = vld [vmem:[#allocation5 + $0x848] sm:$0xff]
    %v379 = vld [vmem:[#allocation5 + $0x850] sm:$0xff]
    %v380 = vld [vmem:[#allocation5 + $0x858] sm:$0xff]
    %v381 = vld [vmem:[#allocation5 + $0x860] sm:$0xff]
    %v382 = vld [vmem:[#allocation5 + $0x868] sm:$0xff]
    %v383 = vld [vmem:[#allocation5 + $0x870] sm:$0xff]
    %v384 = vld [vmem:[#allocation5 + $0x878] sm:$0xff]
    %v385 = vld [vmem:[#allocation5 + $0x880] sm:$0xff]
    %v386 = vld [vmem:[#allocation5 + $0x888] sm:$0xff]
    %v387 = vld [vmem:[#allocation5 + $0x890] sm:$0xff]
    %v388 = vld [vmem:[#allocation5 + $0x898] sm:$0xff]
    %v389 = vld [vmem:[#allocation5 + $0x8a0] sm:$0xff]
    %v390 = vld [vmem:[#allocation5 + $0x8a8] sm:$0xff]
    %v391 = vld [vmem:[#allocation5 + $0x8b0] sm:$0xff]
    %v392 = vld [vmem:[#allocation5 + $0x8b8] sm:$0xff]
    %v393 = vld [vmem:[#allocation5 + $0x8c0] sm:$0xff]
    %v394 = vld [vmem:[#allocation5 + $0x8c8] sm:$0xff]
    %v395 = vld [vmem:[#allocation5 + $0x8d0] sm:$0xff]
    %v396 = vld [vmem:[#allocation5 + $0x8d8] sm:$0xff]
    %v397 = vld [vmem:[#allocation5 + $0x8e0] sm:$0xff]
    %v398 = vld [vmem:[#allocation5 + $0x8e8] sm:$0xff]
    %v399 = vld [vmem:[#allocation5 + $0x8f0] sm:$0xff]
    %v400 = vld [vmem:[#allocation5 + $0x8f8] sm:$0xff]
    %v401 = vld [vmem:[#allocation5 + $0x900] sm:$0xff]
    %v402 = vld [vmem:[#allocation5 + $0x908] sm:$0xff]
    %v403 = vld [vmem:[#allocation5 + $0x910] sm:$0xff]
    %v404 = vld [vmem:[#allocation5 + $0x918] sm:$0xff]
    %v405 = vld [vmem:[#allocation5 + $0x920] sm:$0xff]
    %v406 = vld [vmem:[#allocation5 + $0x928] sm:$0xff]
    %v407 = vld [vmem:[#allocation5 + $0x930] sm:$0xff]
    %v408 = vld [vmem:[#allocation5 + $0x938] sm:$0xff]
    %v409 = vld [vmem:[#allocation5 + $0x940] sm:$0xff]
    %v410 = vld [vmem:[#allocation5 + $0x948] sm:$0xff]
    %v411 = vld [vmem:[#allocation5 + $0x950] sm:$0xff]
    %v412 = vld [vmem:[#allocation5 + $0x958] sm:$0xff]
    %v413 = vld [vmem:[#allocation5 + $0x960] sm:$0xff]
    %v414 = vld [vmem:[#allocation5 + $0x968] sm:$0xff]
    %v415 = vld [vmem:[#allocation5 + $0x970] sm:$0xff]
    %v416 = vld [vmem:[#allocation5 + $0x978] sm:$0xff]
    %v417 = vld [vmem:[#allocation5 + $0x980] sm:$0xff]
    %v418 = vld [vmem:[#allocation5 + $0x988] sm:$0xff]
    %v419 = vld [vmem:[#allocation5 + $0x990] sm:$0xff]
    %v420 = vld [vmem:[#allocation5 + $0x998] sm:$0xff]
    %v421 = vld [vmem:[#allocation5 + $0x9a0] sm:$0xff]
    %v422 = vld [vmem:[#allocation5 + $0x9a8] sm:$0xff]
    %v423 = vld [vmem:[#allocation5 + $0x9b0] sm:$0xff]
    %v424 = vld [vmem:[#allocation5 + $0x9b8] sm:$0xff]
    %v425 = vld [vmem:[#allocation5 + $0x9c0] sm:$0xff]
    %v426 = vld [vmem:[#allocation5 + $0x9c8] sm:$0xff]
    %v427 = vld [vmem:[#allocation5 + $0x9d0] sm:$0xff]
    %v428 = vld [vmem:[#allocation5 + $0x9d8] sm:$0xff]
    %v429 = vld [vmem:[#allocation5 + $0x9e0] sm:$0xff]
    %v430 = vld [vmem:[#allocation5 + $0x9e8] sm:$0xff]
    %v431 = vld [vmem:[#allocation5 + $0x9f0] sm:$0xff]
    %v432 = vld [vmem:[#allocation5 + $0x9f8] sm:$0xff]
    %v433 = vld [vmem:[#allocation5 + $0xa00] sm:$0xff]
    %v434 = vld [vmem:[#allocation5 + $0xa08] sm:$0xff]
    %v435 = vld [vmem:[#allocation5 + $0xa10] sm:$0xff]
    %v436 = vld [vmem:[#allocation5 + $0xa18] sm:$0xff]
    %v437 = vld [vmem:[#allocation5 + $0xa20] sm:$0xff]
    %v438 = vld [vmem:[#allocation5 + $0xa28] sm:$0xff]
    %v439 = vld [vmem:[#allocation5 + $0xa30] sm:$0xff]
    %v440 = vld [vmem:[#allocation5 + $0xa38] sm:$0xff]
    %v441 = vld [vmem:[#allocation5 + $0xa40] sm:$0xff]
    %v442 = vld [vmem:[#allocation5 + $0xa48] sm:$0xff]
    %v443 = vld [vmem:[#allocation5 + $0xa50] sm:$0xff]
    %v444 = vld [vmem:[#allocation5 + $0xa58] sm:$0xff]
    %v445 = vld [vmem:[#allocation5 + $0xa60] sm:$0xff]
    %v446 = vld [vmem:[#allocation5 + $0xa68] sm:$0xff]
    %v447 = vld [vmem:[#allocation5 + $0xa70] sm:$0xff]
    %v448 = vld [vmem:[#allocation5 + $0xa78] sm:$0xff]
    %v449 = vld [vmem:[#allocation5 + $0xa80] sm:$0xff]
    %v450 = vld [vmem:[#allocation5 + $0xa88] sm:$0xff]
    %v451 = vld [vmem:[#allocation5 + $0xa90] sm:$0xff]
    %v452 = vld [vmem:[#allocation5 + $0xa98] sm:$0xff]
    %v453 = vld [vmem:[#allocation5 + $0xaa0] sm:$0xff]
    %v454 = vld [vmem:[#allocation5 + $0xaa8] sm:$0xff]
    %v455 = vld [vmem:[#allocation5 + $0xab0] sm:$0xff]
    %v456 = vld [vmem:[#allocation5 + $0xab8] sm:$0xff]
    %v457 = vld [vmem:[#allocation5 + $0xac0] sm:$0xff]
    %v458 = vld [vmem:[#allocation5 + $0xac8] sm:$0xff]
    %v459 = vld [vmem:[#allocation5 + $0xad0] sm:$0xff]
    %v460 = vld [vmem:[#allocation5 + $0xad8] sm:$0xff]
    %v461 = vld [vmem:[#allocation5 + $0xae0] sm:$0xff]
    %v462 = vld [vmem:[#allocation5 + $0xae8] sm:$0xff]
    %v463 = vld [vmem:[#allocation5 + $0xaf0] sm:$0xff]
    %v464 = vld [vmem:[#allocation5 + $0xaf8] sm:$0xff]
    %v465 = vld [vmem:[#allocation5 + $0xb00] sm:$0xff]
    %v466 = vld [vmem:[#allocation5 + $0xb08] sm:$0xff]
    %v467 = vld [vmem:[#allocation5 + $0xb10] sm:$0xff]
    %v468 = vld [vmem:[#allocation5 + $0xb18] sm:$0xff]
    %v469 = vld [vmem:[#allocation5 + $0xb20] sm:$0xff]
    %v470 = vld [vmem:[#allocation5 + $0xb28] sm:$0xff]
    %v471 = vld [vmem:[#allocation5 + $0xb30] sm:$0xff]
    %v472 = vld [vmem:[#allocation5 + $0xb38] sm:$0xff]
    %v473 = vld [vmem:[#allocation5 + $0xb40] sm:$0xff]
    %v474 = vld [vmem:[#allocation5 + $0xb48] sm:$0xff]
    %v475 = vld [vmem:[#allocation5 + $0xb50] sm:$0xff]
    %v476 = vld [vmem:[#allocation5 + $0xb58] sm:$0xff]
    %v477 = vld [vmem:[#allocation5 + $0xb60] sm:$0xff]
    %v478 = vld [vmem:[#allocation5 + $0xb68] sm:$0xff]
    %v479 = vld [vmem:[#allocation5 + $0xb70] sm:$0xff]
    %v480 = vld [vmem:[#allocation5 + $0xb78] sm:$0xff]
    %v481 = vld [vmem:[#allocation5 + $0xb80] sm:$0xff]
    %v482 = vld [vmem:[#allocation5 + $0xb88] sm:$0xff]
    %v483 = vld [vmem:[#allocation5 + $0xb90] sm:$0xff]
    %v484 = vld [vmem:[#allocation5 + $0xb98] sm:$0xff]
    %v485 = vld [vmem:[#allocation5 + $0xba0] sm:$0xff]
    %v486 = vld [vmem:[#allocation5 + $0xba8] sm:$0xff]
    %v487 = vld [vmem:[#allocation5 + $0xbb0] sm:$0xff]
    %v488 = vld [vmem:[#allocation5 + $0xbb8] sm:$0xff]
    %v489 = vld [vmem:[#allocation5 + $0xbc0] sm:$0xff]
    %v490 = vld [vmem:[#allocation5 + $0xbc8] sm:$0xff]
    %v491 = vld [vmem:[#allocation5 + $0xbd0] sm:$0xff]
    %v492 = vld [vmem:[#allocation5 + $0xbd8] sm:$0xff]
    %v493 = vld [vmem:[#allocation5 + $0xbe0] sm:$0xff]
    %v494 = vld [vmem:[#allocation5 + $0xbe8] sm:$0xff]
    %v495 = vld [vmem:[#allocation5 + $0xbf0] sm:$0xff]
    %v496 = vld [vmem:[#allocation5 + $0xbf8] sm:$0xff]
    %v497 = vld [vmem:[#allocation5 + $0xc00] sm:$0xff]
    %v498 = vld [vmem:[#allocation5 + $0xc08] sm:$0xff]
    %v499 = vld [vmem:[#allocation5 + $0xc10] sm:$0xff]
    %v500 = vld [vmem:[#allocation5 + $0xc18] sm:$0xff]
    %v501 = vld [vmem:[#allocation5 + $0xc20] sm:$0xff]
    %v502 = vld [vmem:[#allocation5 + $0xc28] sm:$0xff]
    %v503 = vld [vmem:[#allocation5 + $0xc30] sm:$0xff]
    %v504 = vld [vmem:[#allocation5 + $0xc38] sm:$0xff]
    %v505 = vld [vmem:[#allocation5 + $0xc40] sm:$0xff]
    %v506 = vld [vmem:[#allocation5 + $0xc48] sm:$0xff]
    %v507 = vld [vmem:[#allocation5 + $0xc50] sm:$0xff]
    %v508 = vld [vmem:[#allocation5 + $0xc58] sm:$0xff]
    %v509 = vld [vmem:[#allocation5 + $0xc60] sm:$0xff]
    %v510 = vld [vmem:[#allocation5 + $0xc68] sm:$0xff]
    %v511 = vld [vmem:[#allocation5 + $0xc70] sm:$0xff]
    %v512 = vld [vmem:[#allocation5 + $0xc78] sm:$0xff]
    %v513 = vld [vmem:[#allocation5 + $0xc80] sm:$0xff]
    %v514 = vld [vmem:[#allocation5 + $0xc88] sm:$0xff]
    %v515 = vld [vmem:[#allocation5 + $0xc90] sm:$0xff]
    %v516 = vld [vmem:[#allocation5 + $0xc98] sm:$0xff]
    %v517 = vld [vmem:[#allocation5 + $0xca0] sm:$0xff]
    %v518 = vld [vmem:[#allocation5 + $0xca8] sm:$0xff]
    %v519 = vld [vmem:[#allocation5 + $0xcb0] sm:$0xff]
    %v520 = vld [vmem:[#allocation5 + $0xcb8] sm:$0xff]
    %v521 = vld [vmem:[#allocation5 + $0xcc0] sm:$0xff]
    %v522 = vld [vmem:[#allocation5 + $0xcc8] sm:$0xff]
    %v523 = vld [vmem:[#allocation5 + $0xcd0] sm:$0xff]
    %v524 = vld [vmem:[#allocation5 + $0xcd8] sm:$0xff]
    %v525 = vld [vmem:[#allocation5 + $0xce0] sm:$0xff]
    %v526 = vld [vmem:[#allocation5 + $0xce8] sm:$0xff]
    %v527 = vld [vmem:[#allocation5 + $0xcf0] sm:$0xff]
    %v528 = vld [vmem:[#allocation5 + $0xcf8] sm:$0xff]
    %v529 = vld [vmem:[#allocation5 + $0xd00] sm:$0xff]
    %v530 = vld [vmem:[#allocation5 + $0xd08] sm:$0xff]
    %v531 = vld [vmem:[#allocation5 + $0xd10] sm:$0xff]
    %v532 = vld [vmem:[#allocation5 + $0xd18] sm:$0xff]
    %v533 = vld [vmem:[#allocation5 + $0xd20] sm:$0xff]
    %v534 = vld [vmem:[#allocation5 + $0xd28] sm:$0xff]
    %v535 = vld [vmem:[#allocation5 + $0xd30] sm:$0xff]
    %v536 = vld [vmem:[#allocation5 + $0xd38] sm:$0xff]
    %v537 = vld [vmem:[#allocation5 + $0xd40] sm:$0xff]
    %v538 = vld [vmem:[#allocation5 + $0xd48] sm:$0xff]
    %v539 = vld [vmem:[#allocation5 + $0xd50] sm:$0xff]
    %v540 = vld [vmem:[#allocation5 + $0xd58] sm:$0xff]
    %v541 = vld [vmem:[#allocation5 + $0xd60] sm:$0xff]
    %v542 = vld [vmem:[#allocation5 + $0xd68] sm:$0xff]
    %v543 = vld [vmem:[#allocation5 + $0xd70] sm:$0xff]
    %v544 = vld [vmem:[#allocation5 + $0xd78] sm:$0xff]
    %v545 = vld [vmem:[#allocation5 + $0xd80] sm:$0xff]
    %v546 = vld [vmem:[#allocation5 + $0xd88] sm:$0xff]
    %v547 = vld [vmem:[#allocation5 + $0xd90] sm:$0xff]
    %v548 = vld [vmem:[#allocation5 + $0xd98] sm:$0xff]
    %v549 = vld [vmem:[#allocation5 + $0xda0] sm:$0xff]
    %v550 = vld [vmem:[#allocation5 + $0xda8] sm:$0xff]
    %v551 = vld [vmem:[#allocation5 + $0xdb0] sm:$0xff]
    %v552 = vld [vmem:[#allocation5 + $0xdb8] sm:$0xff]
    %v553 = vld [vmem:[#allocation5 + $0xdc0] sm:$0xff]
    %v554 = vld [vmem:[#allocation5 + $0xdc8] sm:$0xff]
    %v555 = vld [vmem:[#allocation5 + $0xdd0] sm:$0xff]
    %v556 = vld [vmem:[#allocation5 + $0xdd8] sm:$0xff]
    %v557 = vld [vmem:[#allocation5 + $0xde0] sm:$0xff]
    %v558 = vld [vmem:[#allocation5 + $0xde8] sm:$0xff]
    %v559 = vld [vmem:[#allocation5 + $0xdf0] sm:$0xff]
    %v560 = vld [vmem:[#allocation5 + $0xdf8] sm:$0xff]
    %v561 = vld [vmem:[#allocation5 + $0xe00] sm:$0xff]
    %v562 = vld [vmem:[#allocation5 + $0xe08] sm:$0xff]
    %v563 = vld [vmem:[#allocation5 + $0xe10] sm:$0xff]
    %v564 = vld [vmem:[#allocation5 + $0xe18] sm:$0xff]
    %v565 = vld [vmem:[#allocation5 + $0xe20] sm:$0xff]
    %v566 = vld [vmem:[#allocation5 + $0xe28] sm:$0xff]
    %v567 = vld [vmem:[#allocation5 + $0xe30] sm:$0xff]
    %v568 = vld [vmem:[#allocation5 + $0xe38] sm:$0xff]
    %v569 = vld [vmem:[#allocation5 + $0xe40] sm:$0xff]
    %v570 = vld [vmem:[#allocation5 + $0xe48] sm:$0xff]
    %v571 = vld [vmem:[#allocation5 + $0xe50] sm:$0xff]
    %v572 = vld [vmem:[#allocation5 + $0xe58] sm:$0xff]
    %v573 = vld [vmem:[#allocation5 + $0xe60] sm:$0xff]
    %v574 = vld [vmem:[#allocation5 + $0xe68] sm:$0xff]
    %v575 = vld [vmem:[#allocation5 + $0xe70] sm:$0xff]
    %v576 = vld [vmem:[#allocation5 + $0xe78] sm:$0xff]
    %v577 = vld [vmem:[#allocation5 + $0xe80] sm:$0xff]
    %v578 = vld [vmem:[#allocation5 + $0xe88] sm:$0xff]
    %v579 = vld [vmem:[#allocation5 + $0xe90] sm:$0xff]
    %v580 = vld [vmem:[#allocation5 + $0xe98] sm:$0xff]
    %v581 = vld [vmem:[#allocation5 + $0xea0] sm:$0xff]
    %v582 = vld [vmem:[#allocation5 + $0xea8] sm:$0xff]
    %v583 = vld [vmem:[#allocation5 + $0xeb0] sm:$0xff]
    %v584 = vld [vmem:[#allocation5 + $0xeb8] sm:$0xff]
    %v585 = vld [vmem:[#allocation5 + $0xec0] sm:$0xff]
    %v586 = vld [vmem:[#allocation5 + $0xec8] sm:$0xff]
    %v587 = vld [vmem:[#allocation5 + $0xed0] sm:$0xff]
    %v588 = vld [vmem:[#allocation5 + $0xed8] sm:$0xff]
    %v589 = vld [vmem:[#allocation5 + $0xee0] sm:$0xff]
    %v590 = vld [vmem:[#allocation5 + $0xee8] sm:$0xff]
    %v591 = vld [vmem:[#allocation5 + $0xef0] sm:$0xff]
    %v592 = vld [vmem:[#allocation5 + $0xef8] sm:$0xff]
    %v593 = vld [vmem:[#allocation5 + $0xf00] sm:$0xff]
    %v594 = vld [vmem:[#allocation5 + $0xf08] sm:$0xff]
    %v595 = vld [vmem:[#allocation5 + $0xf10] sm:$0xff]
    %v596 = vld [vmem:[#allocation5 + $0xf18] sm:$0xff]
    %v597 = vld [vmem:[#allocation5 + $0xf20] sm:$0xff]
    %v598 = vld [vmem:[#allocation5 + $0xf28] sm:$0xff]
    %v599 = vld [vmem:[#allocation5 + $0xf30] sm:$0xff]
    %v600 = vld [vmem:[#allocation5 + $0xf38] sm:$0xff]
    %v601 = vld [vmem:[#allocation5 + $0xf40] sm:$0xff]
    %v602 = vld [vmem:[#allocation5 + $0xf48] sm:$0xff]
    %v603 = vld [vmem:[#allocation5 + $0xf50] sm:$0xff]
    %v604 = vld [vmem:[#allocation5 + $0xf58] sm:$0xff]
    %v605 = vld [vmem:[#allocation5 + $0xf60] sm:$0xff]
    %v606 = vld [vmem:[#allocation5 + $0xf68] sm:$0xff]
    %v607 = vld [vmem:[#allocation5 + $0xf70] sm:$0xff]
    %v608 = vld [vmem:[#allocation5 + $0xf78] sm:$0xff]
    %v609 = vld [vmem:[#allocation5 + $0xf80] sm:$0xff]
    %v610 = vld [vmem:[#allocation5 + $0xf88] sm:$0xff]
    %v611 = vld [vmem:[#allocation5 + $0xf90] sm:$0xff]
    %v612 = vld [vmem:[#allocation5 + $0xf98] sm:$0xff]
    %v613 = vld [vmem:[#allocation5 + $0xfa0] sm:$0xff]
    %v614 = vld [vmem:[#allocation5 + $0xfa8] sm:$0xff]
    %v615 = vld [vmem:[#allocation5 + $0xfb0] sm:$0xff]
    %v616 = vld [vmem:[#allocation5 + $0xfb8] sm:$0xff]
    %v617 = vld [vmem:[#allocation5 + $0xfc0] sm:$0xff]
    %v618 = vld [vmem:[#allocation5 + $0xfc8] sm:$0xff]
    %v619 = vld [vmem:[#allocation5 + $0xfd0] sm:$0xff]
    %v620 = vld [vmem:[#allocation5 + $0xfd8] sm:$0xff]
    %v621 = vld [vmem:[#allocation5 + $0xfe0] sm:$0xff]
    %v622 = vld [vmem:[#allocation5 + $0xfe8] sm:$0xff]
    %v623 = vld [vmem:[#allocation5 + $0xff0] sm:$0xff]
    %v624 = vld [vmem:[#allocation5 + $0xff8] sm:$0xff]
    %v625 = vld [vmem:[#allocation5 + $0x1000] sm:$0xff]
    %v626 = vld [vmem:[#allocation5 + $0x1008] sm:$0xff]
    %v627 = vld [vmem:[#allocation5 + $0x1010] sm:$0xff]
    %v628 = vld [vmem:[#allocation5 + $0x1018] sm:$0xff]
    %v629 = vld [vmem:[#allocation5 + $0x1020] sm:$0xff]
    %v630 = vld [vmem:[#allocation5 + $0x1028] sm:$0xff]
    %v631 = vld [vmem:[#allocation5 + $0x1030] sm:$0xff]
    %v632 = vld [vmem:[#allocation5 + $0x1038] sm:$0xff]
    %v633 = vld [vmem:[#allocation5 + $0x1040] sm:$0xff]
    %v634 = vld [vmem:[#allocation5 + $0x1048] sm:$0xff]
    %v635 = vld [vmem:[#allocation5 + $0x1050] sm:$0xff]
    %v636 = vld [vmem:[#allocation5 + $0x1058] sm:$0xff]
    %v637 = vld [vmem:[#allocation5 + $0x1060] sm:$0xff]
    %v638 = vld [vmem:[#allocation5 + $0x1068] sm:$0xff]
    %v639 = vld [vmem:[#allocation5 + $0x1070] sm:$0xff]
    %v640 = vld [vmem:[#allocation5 + $0x1078] sm:$0xff]
    %v641 = vld [vmem:[#allocation5 + $0x1080] sm:$0xff]
    %v642 = vld [vmem:[#allocation5 + $0x1088] sm:$0xff]
    %v643 = vld [vmem:[#allocation5 + $0x1090] sm:$0xff]
    %v644 = vld [vmem:[#allocation5 + $0x1098] sm:$0xff]
    %v645 = vld [vmem:[#allocation5 + $0x10a0] sm:$0xff]
    %v646 = vld [vmem:[#allocation5 + $0x10a8] sm:$0xff]
    %v647 = vld [vmem:[#allocation5 + $0x10b0] sm:$0xff]
    %v648 = vld [vmem:[#allocation5 + $0x10b8] sm:$0xff]
    %v649 = vld [vmem:[#allocation5 + $0x10c0] sm:$0xff]
    %v650 = vld [vmem:[#allocation5 + $0x10c8] sm:$0xff]
    %v651 = vld [vmem:[#allocation5 + $0x10d0] sm:$0xff]
    %v652 = vld [vmem:[#allocation5 + $0x10d8] sm:$0xff]
    %v653 = vld [vmem:[#allocation5 + $0x10e0] sm:$0xff]
    %v654 = vld [vmem:[#allocation5 + $0x10e8] sm:$0xff]
    %v655 = vld [vmem:[#allocation5 + $0x10f0] sm:$0xff]
    %v656 = vld [vmem:[#allocation5 + $0x10f8] sm:$0xff]
    %v657 = vld [vmem:[#allocation5 + $0x1100] sm:$0xff]
    %v658 = vld [vmem:[#allocation5 + $0x1108] sm:$0xff]
    %v659 = vld [vmem:[#allocation5 + $0x1110] sm:$0xff]
    %v660 = vld [vmem:[#allocation5 + $0x1118] sm:$0xff]
    %v661 = vld [vmem:[#allocation5 + $0x1120] sm:$0xff]
    %v662 = vld [vmem:[#allocation5 + $0x1128] sm:$0xff]
    %v663 = vld [vmem:[#allocation5 + $0x1130] sm:$0xff]
    %v664 = vld [vmem:[#allocation5 + $0x1138] sm:$0xff]
    %v665 = vld [vmem:[#allocation5 + $0x1140] sm:$0xff]
    %v666 = vld [vmem:[#allocation5 + $0x1148] sm:$0xff]
    %v667 = vld [vmem:[#allocation5 + $0x1150] sm:$0xff]
    %v668 = vld [vmem:[#allocation5 + $0x1158] sm:$0xff]
    %v669 = vld [vmem:[#allocation5 + $0x1160] sm:$0xff]
    %v670 = vld [vmem:[#allocation5 + $0x1168] sm:$0xff]
    %v671 = vld [vmem:[#allocation5 + $0x1170] sm:$0xff]
    %v672 = vld [vmem:[#allocation5 + $0x1178] sm:$0xff]
    %v673 = vld [vmem:[#allocation5 + $0x1180] sm:$0xff]
    %v674 = vld [vmem:[#allocation5 + $0x1188] sm:$0xff]
    %v675 = vld [vmem:[#allocation5 + $0x1190] sm:$0xff]
    %v676 = vld [vmem:[#allocation5 + $0x1198] sm:$0xff]
    %v677 = vld [vmem:[#allocation5 + $0x11a0] sm:$0xff]
    %v678 = vld [vmem:[#allocation5 + $0x11a8] sm:$0xff]
    %v679 = vld [vmem:[#allocation5 + $0x11b0] sm:$0xff]
    %v680 = vld [vmem:[#allocation5 + $0x11b8] sm:$0xff]
    %v681 = vld [vmem:[#allocation5 + $0x11c0] sm:$0xff]
    %v682 = vld [vmem:[#allocation5 + $0x11c8] sm:$0xff]
    %v683 = vld [vmem:[#allocation5 + $0x11d0] sm:$0xff]
    %v684 = vld [vmem:[#allocation5 + $0x11d8] sm:$0xff]
    %v685 = vld [vmem:[#allocation5 + $0x11e0] sm:$0xff]
    %v686 = vld [vmem:[#allocation5 + $0x11e8] sm:$0xff]
    %v687 = vld [vmem:[#allocation5 + $0x11f0] sm:$0xff]
    %v688 = vld [vmem:[#allocation5 + $0x11f8] sm:$0xff]
    %v689 = vld [vmem:[#allocation5 + $0x1200] sm:$0xff]
    %v690 = vld [vmem:[#allocation5 + $0x1208] sm:$0xff]
    %v691 = vld [vmem:[#allocation5 + $0x1210] sm:$0xff]
    %v692 = vld [vmem:[#allocation5 + $0x1218] sm:$0xff]
    %v693 = vld [vmem:[#allocation5 + $0x1220] sm:$0xff]
    %v694 = vld [vmem:[#allocation5 + $0x1228] sm:$0xff]
    %v695 = vld [vmem:[#allocation5 + $0x1230] sm:$0xff]
    %v696 = vld [vmem:[#allocation5 + $0x1238] sm:$0xff]
    %v697 = vld [vmem:[#allocation5 + $0x1240] sm:$0xff]
    %v698 = vld [vmem:[#allocation5 + $0x1248] sm:$0xff]
    %v699 = vld [vmem:[#allocation5 + $0x1250] sm:$0xff]
    %v700 = vld [vmem:[#allocation5 + $0x1258] sm:$0xff]
    %v701 = vld [vmem:[#allocation5 + $0x1260] sm:$0xff]
    %v702 = vld [vmem:[#allocation5 + $0x1268] sm:$0xff]
    %v703 = vld [vmem:[#allocation5 + $0x1270] sm:$0xff]
    %v704 = vld [vmem:[#allocation5 + $0x1278] sm:$0xff]
    %v705 = vld [vmem:[#allocation5 + $0x1280] sm:$0xff]
    %v706 = vld [vmem:[#allocation5 + $0x1288] sm:$0xff]
    %v707 = vld [vmem:[#allocation5 + $0x1290] sm:$0xff]
    %v708 = vld [vmem:[#allocation5 + $0x1298] sm:$0xff]
    %v709 = vld [vmem:[#allocation5 + $0x12a0] sm:$0xff]
    %v710 = vld [vmem:[#allocation5 + $0x12a8] sm:$0xff]
    %v711 = vld [vmem:[#allocation5 + $0x12b0] sm:$0xff]
    %v712 = vld [vmem:[#allocation5 + $0x12b8] sm:$0xff]
    %v713 = vld [vmem:[#allocation5 + $0x12c0] sm:$0xff]
    %v714 = vld [vmem:[#allocation5 + $0x12c8] sm:$0xff]
    %v715 = vld [vmem:[#allocation5 + $0x12d0] sm:$0xff]
    %v716 = vld [vmem:[#allocation5 + $0x12d8] sm:$0xff]
    %v717 = vld [vmem:[#allocation5 + $0x12e0] sm:$0xff]
    %v718 = vld [vmem:[#allocation5 + $0x12e8] sm:$0xff]
    %v719 = vld [vmem:[#allocation5 + $0x12f0] sm:$0xff]
    %v720 = vld [vmem:[#allocation5 + $0x12f8] sm:$0xff]
    %v721 = vld [vmem:[#allocation5 + $0x1300] sm:$0xff]
    %v722 = vld [vmem:[#allocation5 + $0x1308] sm:$0xff]
    %v723 = vld [vmem:[#allocation5 + $0x1310] sm:$0xff]
    %v724 = vld [vmem:[#allocation5 + $0x1318] sm:$0xff]
    %v725 = vld [vmem:[#allocation5 + $0x1320] sm:$0xff]
    %v726 = vld [vmem:[#allocation5 + $0x1328] sm:$0xff]
    %v727 = vld [vmem:[#allocation5 + $0x1330] sm:$0xff]
    %v728 = vld [vmem:[#allocation5 + $0x1338] sm:$0xff]
    %v729 = vld [vmem:[#allocation5 + $0x1340] sm:$0xff]
    %v730 = vld [vmem:[#allocation5 + $0x1348] sm:$0xff]
    %v731 = vld [vmem:[#allocation5 + $0x1350] sm:$0xff]
    %v732 = vld [vmem:[#allocation5 + $0x1358] sm:$0xff]
    %v733 = vld [vmem:[#allocation5 + $0x1360] sm:$0xff]
    %v734 = vld [vmem:[#allocation5 + $0x1368] sm:$0xff]
    %v735 = vld [vmem:[#allocation5 + $0x1370] sm:$0xff]
    %v736 = vld [vmem:[#allocation5 + $0x1378] sm:$0xff]
    %v737 = vld [vmem:[#allocation5 + $0x1380] sm:$0xff]
    %v738 = vld [vmem:[#allocation5 + $0x1388] sm:$0xff]
    %v739 = vld [vmem:[#allocation5 + $0x1390] sm:$0xff]
    %v740 = vld [vmem:[#allocation5 + $0x1398] sm:$0xff]
    %v741 = vld [vmem:[#allocation5 + $0x13a0] sm:$0xff]
    %v742 = vld [vmem:[#allocation5 + $0x13a8] sm:$0xff]
    %v743 = vld [vmem:[#allocation5 + $0x13b0] sm:$0xff]
    %v744 = vld [vmem:[#allocation5 + $0x13b8] sm:$0xff]
    %v745 = vld [vmem:[#allocation5 + $0x13c0] sm:$0xff]
    %v746 = vld [vmem:[#allocation5 + $0x13c8] sm:$0xff]
    %v747 = vld [vmem:[#allocation5 + $0x13d0] sm:$0xff]
    %v748 = vld [vmem:[#allocation5 + $0x13d8] sm:$0xff]
    %v749 = vld [vmem:[#allocation5 + $0x13e0] sm:$0xff]
    %v750 = vld [vmem:[#allocation5 + $0x13e8] sm:$0xff]
    %v751 = vld [vmem:[#allocation5 + $0x13f0] sm:$0xff]
    %v752 = vld [vmem:[#allocation5 + $0x13f8] sm:$0xff]
    %v753 = vld [vmem:[#allocation5 + $0x1400] sm:$0xff]
    %v754 = vld [vmem:[#allocation5 + $0x1408] sm:$0xff]
    %v755 = vld [vmem:[#allocation5 + $0x1410] sm:$0xff]
    %v756 = vld [vmem:[#allocation5 + $0x1418] sm:$0xff]
    %v757 = vld [vmem:[#allocation5 + $0x1420] sm:$0xff]
    %v758 = vld [vmem:[#allocation5 + $0x1428] sm:$0xff]
    %v759 = vld [vmem:[#allocation5 + $0x1430] sm:$0xff]
    %v760 = vld [vmem:[#allocation5 + $0x1438] sm:$0xff]
    %v761 = vld [vmem:[#allocation5 + $0x1440] sm:$0xff]
    %v762 = vld [vmem:[#allocation5 + $0x1448] sm:$0xff]
    %v763 = vld [vmem:[#allocation5 + $0x1450] sm:$0xff]
    %v764 = vld [vmem:[#allocation5 + $0x1458] sm:$0xff]
    %v765 = vld [vmem:[#allocation5 + $0x1460] sm:$0xff]
    %v766 = vld [vmem:[#allocation5 + $0x1468] sm:$0xff]
    %v767 = vld [vmem:[#allocation5 + $0x1470] sm:$0xff]
    %v768 = vld [vmem:[#allocation5 + $0x1478] sm:$0xff]
    %v769 = vld [vmem:[#allocation5 + $0x1480] sm:$0xff]
    %v770 = vld [vmem:[#allocation5 + $0x1488] sm:$0xff]
    %v771 = vld [vmem:[#allocation5 + $0x1490] sm:$0xff]
    %v772 = vld [vmem:[#allocation5 + $0x1498] sm:$0xff]
    %v773 = vld [vmem:[#allocation5 + $0x14a0] sm:$0xff]
    %v774 = vld [vmem:[#allocation5 + $0x14a8] sm:$0xff]
    %v775 = vld [vmem:[#allocation5 + $0x14b0] sm:$0xff]
    %v776 = vld [vmem:[#allocation5 + $0x14b8] sm:$0xff]
    %v777 = vld [vmem:[#allocation5 + $0x14c0] sm:$0xff]
    %v778 = vld [vmem:[#allocation5 + $0x14c8] sm:$0xff]
    %v779 = vld [vmem:[#allocation5 + $0x14d0] sm:$0xff]
    %v780 = vld [vmem:[#allocation5 + $0x14d8] sm:$0xff]
    %v781 = vld [vmem:[#allocation5 + $0x14e0] sm:$0xff]
    %v782 = vld [vmem:[#allocation5 + $0x14e8] sm:$0xff]
    %v783 = vld [vmem:[#allocation5 + $0x14f0] sm:$0xff]
    %v784 = vld [vmem:[#allocation5 + $0x14f8] sm:$0xff]
    %v785 = vld [vmem:[#allocation5 + $0x1500] sm:$0xff]
    %v786 = vld [vmem:[#allocation5 + $0x1508] sm:$0xff]
    %v787 = vld [vmem:[#allocation5 + $0x1510] sm:$0xff]
    %v788 = vld [vmem:[#allocation5 + $0x1518] sm:$0xff]
    %v789 = vld [vmem:[#allocation5 + $0x1520] sm:$0xff]
    %v790 = vld [vmem:[#allocation5 + $0x1528] sm:$0xff]
    %v791 = vld [vmem:[#allocation5 + $0x1530] sm:$0xff]
    %v792 = vld [vmem:[#allocation5 + $0x1538] sm:$0xff]
    %v793 = vld [vmem:[#allocation5 + $0x1540] sm:$0xff]
    %v794 = vld [vmem:[#allocation5 + $0x1548] sm:$0xff]
    %v795 = vld [vmem:[#allocation5 + $0x1550] sm:$0xff]
    %v796 = vld [vmem:[#allocation5 + $0x1558] sm:$0xff]
    %v797 = vld [vmem:[#allocation5 + $0x1560] sm:$0xff]
    %v798 = vld [vmem:[#allocation5 + $0x1568] sm:$0xff]
    %v799 = vld [vmem:[#allocation5 + $0x1570] sm:$0xff]
    %v800 = vld [vmem:[#allocation5 + $0x1578] sm:$0xff]
    %v801 = vld [vmem:[#allocation5 + $0x1580] sm:$0xff]
    %v802 = vld [vmem:[#allocation5 + $0x1588] sm:$0xff]
    %v803 = vld [vmem:[#allocation5 + $0x1590] sm:$0xff]
    %v804 = vld [vmem:[#allocation5 + $0x1598] sm:$0xff]
    %v805 = vld [vmem:[#allocation5 + $0x15a0] sm:$0xff]
    %v806 = vld [vmem:[#allocation5 + $0x15a8] sm:$0xff]
    %v807 = vld [vmem:[#allocation5 + $0x15b0] sm:$0xff]
    %v808 = vld [vmem:[#allocation5 + $0x15b8] sm:$0xff]
    %v809 = vld [vmem:[#allocation5 + $0x15c0] sm:$0xff]
    %v810 = vld [vmem:[#allocation5 + $0x15c8] sm:$0xff]
    %v811 = vld [vmem:[#allocation5 + $0x15d0] sm:$0xff]
    %v812 = vld [vmem:[#allocation5 + $0x15d8] sm:$0xff]
    %v813 = vld [vmem:[#allocation5 + $0x15e0] sm:$0xff]
    %v814 = vld [vmem:[#allocation5 + $0x15e8] sm:$0xff]
    %v815 = vld [vmem:[#allocation5 + $0x15f0] sm:$0xff]
    %v816 = vld [vmem:[#allocation5 + $0x15f8] sm:$0xff]
    %v817 = vld [vmem:[#allocation5 + $0x1600] sm:$0xff]
    %v818 = vld [vmem:[#allocation5 + $0x1608] sm:$0xff]
    %v819 = vld [vmem:[#allocation5 + $0x1610] sm:$0xff]
    %v820 = vld [vmem:[#allocation5 + $0x1618] sm:$0xff]
    %v821 = vld [vmem:[#allocation5 + $0x1620] sm:$0xff]
    %v822 = vld [vmem:[#allocation5 + $0x1628] sm:$0xff]
    %v823 = vld [vmem:[#allocation5 + $0x1630] sm:$0xff]
    %v824 = vld [vmem:[#allocation5 + $0x1638] sm:$0xff]
    %v825 = vld [vmem:[#allocation5 + $0x1640] sm:$0xff]
    %v826 = vld [vmem:[#allocation5 + $0x1648] sm:$0xff]
    %v827 = vld [vmem:[#allocation5 + $0x1650] sm:$0xff]
    %v828 = vld [vmem:[#allocation5 + $0x1658] sm:$0xff]
    %v829 = vld [vmem:[#allocation5 + $0x1660] sm:$0xff]
    %v830 = vld [vmem:[#allocation5 + $0x1668] sm:$0xff]
    %v831 = vld [vmem:[#allocation5 + $0x1670] sm:$0xff]
    %v832 = vld [vmem:[#allocation5 + $0x1678] sm:$0xff]
    %v833 = vld [vmem:[#allocation5 + $0x1680] sm:$0xff]
    %v834 = vld [vmem:[#allocation5 + $0x1688] sm:$0xff]
    %v835 = vld [vmem:[#allocation5 + $0x1690] sm:$0xff]
    %v836 = vld [vmem:[#allocation5 + $0x1698] sm:$0xff]
    %v837 = vld [vmem:[#allocation5 + $0x16a0] sm:$0xff]
    %v838 = vld [vmem:[#allocation5 + $0x16a8] sm:$0xff]
    %v839 = vld [vmem:[#allocation5 + $0x16b0] sm:$0xff]
    %v840 = vld [vmem:[#allocation5 + $0x16b8] sm:$0xff]
    %v841 = vld [vmem:[#allocation5 + $0x16c0] sm:$0xff]
    %v842 = vld [vmem:[#allocation5 + $0x16c8] sm:$0xff]
    %v843 = vld [vmem:[#allocation5 + $0x16d0] sm:$0xff]
    %v844 = vld [vmem:[#allocation5 + $0x16d8] sm:$0xff]
    %v845 = vld [vmem:[#allocation5 + $0x16e0] sm:$0xff]
    %v846 = vld [vmem:[#allocation5 + $0x16e8] sm:$0xff]
    %v847 = vld [vmem:[#allocation5 + $0x16f0] sm:$0xff]
    %v848 = vld [vmem:[#allocation5 + $0x16f8] sm:$0xff]
    %v849 = vld [vmem:[#allocation5 + $0x1700] sm:$0xff]
    %v850 = vld [vmem:[#allocation5 + $0x1708] sm:$0xff]
    %v851 = vld [vmem:[#allocation5 + $0x1710] sm:$0xff]
    %v852 = vld [vmem:[#allocation5 + $0x1718] sm:$0xff]
    %v853 = vld [vmem:[#allocation5 + $0x1720] sm:$0xff]
    %v854 = vld [vmem:[#allocation5 + $0x1728] sm:$0xff]
    %v855 = vld [vmem:[#allocation5 + $0x1730] sm:$0xff]
    %v856 = vld [vmem:[#allocation5 + $0x1738] sm:$0xff]
    %v857 = vld [vmem:[#allocation5 + $0x1740] sm:$0xff]
    %v858 = vld [vmem:[#allocation5 + $0x1748] sm:$0xff]
    %v859 = vld [vmem:[#allocation5 + $0x1750] sm:$0xff]
    %v860 = vld [vmem:[#allocation5 + $0x1758] sm:$0xff]
    %v861 = vld [vmem:[#allocation5 + $0x1760] sm:$0xff]
    %v862 = vld [vmem:[#allocation5 + $0x1768] sm:$0xff]
    %v863 = vld [vmem:[#allocation5 + $0x1770] sm:$0xff]
    %v864 = vld [vmem:[#allocation5 + $0x1778] sm:$0xff]
    %v865 = vld [vmem:[#allocation5 + $0x1780] sm:$0xff]
    %v866 = vld [vmem:[#allocation5 + $0x1788] sm:$0xff]
    %v867 = vld [vmem:[#allocation5 + $0x1790] sm:$0xff]
    %v868 = vld [vmem:[#allocation5 + $0x1798] sm:$0xff]
    %v869 = vld [vmem:[#allocation5 + $0x17a0] sm:$0xff]
    %v870 = vld [vmem:[#allocation5 + $0x17a8] sm:$0xff]
    %v871 = vld [vmem:[#allocation5 + $0x17b0] sm:$0xff]
    %v872 = vld [vmem:[#allocation5 + $0x17b8] sm:$0xff]
    %v873 = vld [vmem:[#allocation5 + $0x17c0] sm:$0xff]
    %v874 = vld [vmem:[#allocation5 + $0x17c8] sm:$0xff]
    %v875 = vld [vmem:[#allocation5 + $0x17d0] sm:$0xff]
    %v876 = vld [vmem:[#allocation5 + $0x17d8] sm:$0xff]
    %v877 = vld [vmem:[#allocation5 + $0x17e0] sm:$0xff]
    %v878 = vld [vmem:[#allocation5 + $0x17e8] sm:$0xff]
    %v879 = vld [vmem:[#allocation5 + $0x17f0] sm:$0xff]
    %v880 = vld [vmem:[#allocation5 + $0x17f8] sm:$0xff]
    %v881 = vld [vmem:[#allocation7] sm:$0xf]
    %v883 = vlaneseq
    %v884 = vshrl.u32 %v883, 7
    %v885 = vsub.s32 0, %v884
    %v886 = vrot.slane %v881, %v885
    %v887 = vlaneseq
    %v888 = vshrl.u32 %v887, 7
    %v889 = vsub.s32 1, %v888
    %v890 = vrot.slane %v881, %v889
    %v891 = vlaneseq
    %v892 = vshrl.u32 %v891, 7
    %v893 = vsub.s32 2, %v892
    %v894 = vrot.slane %v881, %v893
    %v895 = vlaneseq
    %v896 = vshrl.u32 %v895, 7
    %v897 = vsub.s32 3, %v896
    %v898 = vrot.slane %v881, %v897
    %v915 = vunpack.c.l.b16 %v101
    %v916 = vunpack.c.h.b16 %v101
    %v917 = vunpack.c.l.b16 %v102
    %v918 = vunpack.c.h.b16 %v102
    %v919 = vunpack.c.l.b16 %v103
    %v920 = vunpack.c.h.b16 %v103
    %v921 = vunpack.c.l.b16 %v104
    %v922 = vunpack.c.h.b16 %v104
    %v923 = vunpack.c.l.b16 %v105
    %v924 = vunpack.c.h.b16 %v105
    %v925 = vunpack.c.l.b16 %v106
    %v926 = vunpack.c.h.b16 %v106
    %v927 = vunpack.c.l.b16 %v107
    %v928 = vunpack.c.h.b16 %v107
    %v929 = vunpack.c.l.b16 %v108
    %v930 = vunpack.c.h.b16 %v108
    %v931 = vunpack.c.l.b16 %v109
    %v932 = vunpack.c.h.b16 %v109
    %v933 = vunpack.c.l.b16 %v110
    %v934 = vunpack.c.h.b16 %v110
    %v935 = vunpack.c.l.b16 %v111
    %v936 = vunpack.c.h.b16 %v111
    %v937 = vunpack.c.l.b16 %v112
    %v938 = vunpack.c.h.b16 %v112
    %v939 = vpack.c.b16 %v915, %v915
    %v940 = vpack.c.b16 %v916, %v916
    %v941 = vpack.c.b16 %v917, %v917
    %v942 = vpack.c.b16 %v918, %v918
    %v943 = vpack.c.b16 %v919, %v919
    %v944 = vpack.c.b16 %v920, %v920
    %v945 = vpack.c.b16 %v921, %v921
    %v946 = vpack.c.b16 %v922, %v922
    %v947 = vpack.c.b16 %v923, %v923
    %v948 = vpack.c.b16 %v924, %v924
    %v949 = vpack.c.b16 %v925, %v925
    %v950 = vpack.c.b16 %v926, %v926
    %v951 = vpack.c.b16 %v927, %v927
    %v952 = vpack.c.b16 %v928, %v928
    %v953 = vpack.c.b16 %v929, %v929
    %v954 = vpack.c.b16 %v930, %v930
    %v955 = vpack.c.b16 %v931, %v931
    %v956 = vpack.c.b16 %v932, %v932
    %v957 = vpack.c.b16 %v933, %v933
    %v958 = vpack.c.b16 %v934, %v934
    %v959 = vpack.c.b16 %v935, %v935
    %v960 = vpack.c.b16 %v936, %v936
    %v961 = vpack.c.b16 %v937, %v937
    %v962 = vpack.c.b16 %v938, %v938
    %v1755 = vunpack.c.l.b16 %v113
    %v1756 = vunpack.c.h.b16 %v113
    %v1757 = vunpack.c.l.b16 %v114
    %v1758 = vunpack.c.h.b16 %v114
    %v1759 = vunpack.c.l.b16 %v115
    %v1760 = vunpack.c.h.b16 %v115
    %v1761 = vunpack.c.l.b16 %v116
    %v1762 = vunpack.c.h.b16 %v116
    %v1763 = vunpack.c.l.b16 %v117
    %v1764 = vunpack.c.h.b16 %v117
    %v1765 = vunpack.c.l.b16 %v118
    %v1766 = vunpack.c.h.b16 %v118
    %v1767 = vunpack.c.l.b16 %v119
    %v1768 = vunpack.c.h.b16 %v119
    %v1769 = vunpack.c.l.b16 %v120
    %v1770 = vunpack.c.h.b16 %v120
    %v1771 = vunpack.c.l.b16 %v121
    %v1772 = vunpack.c.h.b16 %v121
    %v1773 = vunpack.c.l.b16 %v122
    %v1774 = vunpack.c.h.b16 %v122
    %v1775 = vunpack.c.l.b16 %v123
    %v1776 = vunpack.c.h.b16 %v123
    %v1777 = vunpack.c.l.b16 %v124
    %v1778 = vunpack.c.h.b16 %v124
    %v1779 = vunpack.c.l.b16 %v125
    %v1780 = vunpack.c.h.b16 %v125
    %v1781 = vunpack.c.l.b16 %v126
    %v1782 = vunpack.c.h.b16 %v126
    %v1783 = vunpack.c.l.b16 %v127
    %v1784 = vunpack.c.h.b16 %v127
    %v1785 = vunpack.c.l.b16 %v128
    %v1786 = vunpack.c.h.b16 %v128
    %v1787 = vunpack.c.l.b16 %v129
    %v1788 = vunpack.c.h.b16 %v129
    %v1789 = vunpack.c.l.b16 %v130
    %v1790 = vunpack.c.h.b16 %v130
    %v1791 = vunpack.c.l.b16 %v131
    %v1792 = vunpack.c.h.b16 %v131
    %v1793 = vunpack.c.l.b16 %v132
    %v1794 = vunpack.c.h.b16 %v132
    %v1795 = vunpack.c.l.b16 %v133
    %v1796 = vunpack.c.h.b16 %v133
    %v1797 = vunpack.c.l.b16 %v134
    %v1798 = vunpack.c.h.b16 %v134
    %v1799 = vunpack.c.l.b16 %v135
    %v1800 = vunpack.c.h.b16 %v135
    %v1801 = vunpack.c.l.b16 %v136
    %v1802 = vunpack.c.h.b16 %v136
    %v1803 = vunpack.c.l.b16 %v137
    %v1804 = vunpack.c.h.b16 %v137
    %v1805 = vunpack.c.l.b16 %v138
    %v1806 = vunpack.c.h.b16 %v138
    %v1807 = vunpack.c.l.b16 %v139
    %v1808 = vunpack.c.h.b16 %v139
    %v1809 = vunpack.c.l.b16 %v140
    %v1810 = vunpack.c.h.b16 %v140
    %v1811 = vunpack.c.l.b16 %v141
    %v1812 = vunpack.c.h.b16 %v141
    %v1813 = vunpack.c.l.b16 %v142
    %v1814 = vunpack.c.h.b16 %v142
    %v1815 = vunpack.c.l.b16 %v143
    %v1816 = vunpack.c.h.b16 %v143
    %v1817 = vunpack.c.l.b16 %v144
    %v1818 = vunpack.c.h.b16 %v144
    %v1819 = vunpack.c.l.b16 %v145
    %v1820 = vunpack.c.h.b16 %v145
    %v1821 = vunpack.c.l.b16 %v146
    %v1822 = vunpack.c.h.b16 %v146
    %v1823 = vunpack.c.l.b16 %v147
    %v1824 = vunpack.c.h.b16 %v147
    %v1825 = vunpack.c.l.b16 %v148
    %v1826 = vunpack.c.h.b16 %v148
    %v1827 = vunpack.c.l.b16 %v149
    %v1828 = vunpack.c.h.b16 %v149
    %v1829 = vunpack.c.l.b16 %v150
    %v1830 = vunpack.c.h.b16 %v150
    %v1831 = vunpack.c.l.b16 %v151
    %v1832 = vunpack.c.h.b16 %v151
    %v1833 = vunpack.c.l.b16 %v152
    %v1834 = vunpack.c.h.b16 %v152
    %v1835 = vunpack.c.l.b16 %v153
    %v1836 = vunpack.c.h.b16 %v153
    %v1837 = vunpack.c.l.b16 %v154
    %v1838 = vunpack.c.h.b16 %v154
    %v1839 = vunpack.c.l.b16 %v155
    %v1840 = vunpack.c.h.b16 %v155
    %v1841 = vunpack.c.l.b16 %v156
    %v1842 = vunpack.c.h.b16 %v156
    %v1843 = vunpack.c.l.b16 %v157
    %v1844 = vunpack.c.h.b16 %v157
    %v1845 = vunpack.c.l.b16 %v158
    %v1846 = vunpack.c.h.b16 %v158
    %v1847 = vunpack.c.l.b16 %v159
    %v1848 = vunpack.c.h.b16 %v159
    %v1849 = vunpack.c.l.b16 %v160
    %v1850 = vunpack.c.h.b16 %v160
    %v1851 = vunpack.c.l.b16 %v161
    %v1852 = vunpack.c.h.b16 %v161
    %v1853 = vunpack.c.l.b16 %v162
    %v1854 = vunpack.c.h.b16 %v162
    %v1855 = vunpack.c.l.b16 %v163
    %v1856 = vunpack.c.h.b16 %v163
    %v1857 = vunpack.c.l.b16 %v164
    %v1858 = vunpack.c.h.b16 %v164
    %v1859 = vunpack.c.l.b16 %v165
    %v1860 = vunpack.c.h.b16 %v165
    %v1861 = vunpack.c.l.b16 %v166
    %v1862 = vunpack.c.h.b16 %v166
    %v1863 = vunpack.c.l.b16 %v167
    %v1864 = vunpack.c.h.b16 %v167
    %v1865 = vunpack.c.l.b16 %v168
    %v1866 = vunpack.c.h.b16 %v168
    %v1867 = vunpack.c.l.b16 %v169
    %v1868 = vunpack.c.h.b16 %v169
    %v1869 = vunpack.c.l.b16 %v170
    %v1870 = vunpack.c.h.b16 %v170
    %v1871 = vunpack.c.l.b16 %v171
    %v1872 = vunpack.c.h.b16 %v171
    %v1873 = vunpack.c.l.b16 %v172
    %v1874 = vunpack.c.h.b16 %v172
    %v1875 = vunpack.c.l.b16 %v173
    %v1876 = vunpack.c.h.b16 %v173
    %v1877 = vunpack.c.l.b16 %v174
    %v1878 = vunpack.c.h.b16 %v174
    %v1879 = vunpack.c.l.b16 %v175
    %v1880 = vunpack.c.h.b16 %v175
    %v1881 = vunpack.c.l.b16 %v176
    %v1882 = vunpack.c.h.b16 %v176
    %v1883 = vunpack.c.l.b16 %v177
    %v1884 = vunpack.c.h.b16 %v177
    %v1885 = vunpack.c.l.b16 %v178
    %v1886 = vunpack.c.h.b16 %v178
    %v1887 = vunpack.c.l.b16 %v179
    %v1888 = vunpack.c.h.b16 %v179
    %v1889 = vunpack.c.l.b16 %v180
    %v1890 = vunpack.c.h.b16 %v180
    %v1891 = vunpack.c.l.b16 %v181
    %v1892 = vunpack.c.h.b16 %v181
    %v1893 = vunpack.c.l.b16 %v182
    %v1894 = vunpack.c.h.b16 %v182
    %v1895 = vunpack.c.l.b16 %v183
    %v1896 = vunpack.c.h.b16 %v183
    %v1897 = vunpack.c.l.b16 %v184
    %v1898 = vunpack.c.h.b16 %v184
    %v1899 = vunpack.c.l.b16 %v185
    %v1900 = vunpack.c.h.b16 %v185
    %v1901 = vunpack.c.l.b16 %v186
    %v1902 = vunpack.c.h.b16 %v186
    %v1903 = vunpack.c.l.b16 %v187
    %v1904 = vunpack.c.h.b16 %v187
    %v1905 = vunpack.c.l.b16 %v188
    %v1906 = vunpack.c.h.b16 %v188
    %v1907 = vunpack.c.l.b16 %v189
    %v1908 = vunpack.c.h.b16 %v189
    %v1909 = vunpack.c.l.b16 %v190
    %v1910 = vunpack.c.h.b16 %v190
    %v1911 = vunpack.c.l.b16 %v191
    %v1912 = vunpack.c.h.b16 %v191
    %v1913 = vunpack.c.l.b16 %v192
    %v1914 = vunpack.c.h.b16 %v192
    %v1915 = vunpack.c.l.b16 %v193
    %v1916 = vunpack.c.h.b16 %v193
    %v1917 = vunpack.c.l.b16 %v194
    %v1918 = vunpack.c.h.b16 %v194
    %v1919 = vunpack.c.l.b16 %v195
    %v1920 = vunpack.c.h.b16 %v195
    %v1921 = vunpack.c.l.b16 %v196
    %v1922 = vunpack.c.h.b16 %v196
    %v1923 = vunpack.c.l.b16 %v197
    %v1924 = vunpack.c.h.b16 %v197
    %v1925 = vunpack.c.l.b16 %v198
    %v1926 = vunpack.c.h.b16 %v198
    %v1927 = vunpack.c.l.b16 %v199
    %v1928 = vunpack.c.h.b16 %v199
    %v1929 = vunpack.c.l.b16 %v200
    %v1930 = vunpack.c.h.b16 %v200
    %v1931 = vunpack.c.l.b16 %v201
    %v1932 = vunpack.c.h.b16 %v201
    %v1933 = vunpack.c.l.b16 %v202
    %v1934 = vunpack.c.h.b16 %v202
    %v1935 = vunpack.c.l.b16 %v203
    %v1936 = vunpack.c.h.b16 %v203
    %v1937 = vunpack.c.l.b16 %v204
    %v1938 = vunpack.c.h.b16 %v204
    %v1939 = vunpack.c.l.b16 %v205
    %v1940 = vunpack.c.h.b16 %v205
    %v1941 = vunpack.c.l.b16 %v206
    %v1942 = vunpack.c.h.b16 %v206
    %v1943 = vunpack.c.l.b16 %v207
    %v1944 = vunpack.c.h.b16 %v207
    %v1945 = vunpack.c.l.b16 %v208
    %v1946 = vunpack.c.h.b16 %v208
    %v1947 = vunpack.c.l.b16 %v209
    %v1948 = vunpack.c.h.b16 %v209
    %v1949 = vunpack.c.l.b16 %v210
    %v1950 = vunpack.c.h.b16 %v210
    %v1951 = vunpack.c.l.b16 %v211
    %v1952 = vunpack.c.h.b16 %v211
    %v1953 = vunpack.c.l.b16 %v212
    %v1954 = vunpack.c.h.b16 %v212
    %v1955 = vunpack.c.l.b16 %v213
    %v1956 = vunpack.c.h.b16 %v213
    %v1957 = vunpack.c.l.b16 %v214
    %v1958 = vunpack.c.h.b16 %v214
    %v1959 = vunpack.c.l.b16 %v215
    %v1960 = vunpack.c.h.b16 %v215
    %v1961 = vunpack.c.l.b16 %v216
    %v1962 = vunpack.c.h.b16 %v216
    %v1963 = vunpack.c.l.b16 %v217
    %v1964 = vunpack.c.h.b16 %v217
    %v1965 = vunpack.c.l.b16 %v218
    %v1966 = vunpack.c.h.b16 %v218
    %v1967 = vunpack.c.l.b16 %v219
    %v1968 = vunpack.c.h.b16 %v219
    %v1969 = vunpack.c.l.b16 %v220
    %v1970 = vunpack.c.h.b16 %v220
    %v1971 = vunpack.c.l.b16 %v221
    %v1972 = vunpack.c.h.b16 %v221
    %v1973 = vunpack.c.l.b16 %v222
    %v1974 = vunpack.c.h.b16 %v222
    %v1975 = vunpack.c.l.b16 %v223
    %v1976 = vunpack.c.h.b16 %v223
    %v1977 = vunpack.c.l.b16 %v224
    %v1978 = vunpack.c.h.b16 %v224
    %v1979 = vunpack.c.l.b16 %v225
    %v1980 = vunpack.c.h.b16 %v225
    %v1981 = vunpack.c.l.b16 %v226
    %v1982 = vunpack.c.h.b16 %v226
    %v1983 = vunpack.c.l.b16 %v227
    %v1984 = vunpack.c.h.b16 %v227
    %v1985 = vunpack.c.l.b16 %v228
    %v1986 = vunpack.c.h.b16 %v228
    %v1987 = vunpack.c.l.b16 %v229
    %v1988 = vunpack.c.h.b16 %v229
    %v1989 = vunpack.c.l.b16 %v230
    %v1990 = vunpack.c.h.b16 %v230
    %v1991 = vunpack.c.l.b16 %v231
    %v1992 = vunpack.c.h.b16 %v231
    %v1993 = vunpack.c.l.b16 %v232
    %v1994 = vunpack.c.h.b16 %v232
    %v1995 = vunpack.c.l.b16 %v233
    %v1996 = vunpack.c.h.b16 %v233
    %v1997 = vunpack.c.l.b16 %v234
    %v1998 = vunpack.c.h.b16 %v234
    %v1999 = vunpack.c.l.b16 %v235
    %v2000 = vunpack.c.h.b16 %v235
    %v2001 = vunpack.c.l.b16 %v236
    %v2002 = vunpack.c.h.b16 %v236
    %v2003 = vunpack.c.l.b16 %v237
    %v2004 = vunpack.c.h.b16 %v237
    %v2005 = vunpack.c.l.b16 %v238
    %v2006 = vunpack.c.h.b16 %v238
    %v2007 = vunpack.c.l.b16 %v239
    %v2008 = vunpack.c.h.b16 %v239
    %v2009 = vunpack.c.l.b16 %v240
    %v2010 = vunpack.c.h.b16 %v240
    %v2011 = vunpack.c.l.b16 %v241
    %v2012 = vunpack.c.h.b16 %v241
    %v2013 = vunpack.c.l.b16 %v242
    %v2014 = vunpack.c.h.b16 %v242
    %v2015 = vunpack.c.l.b16 %v243
    %v2016 = vunpack.c.h.b16 %v243
    %v2017 = vunpack.c.l.b16 %v244
    %v2018 = vunpack.c.h.b16 %v244
    %v2019 = vunpack.c.l.b16 %v245
    %v2020 = vunpack.c.h.b16 %v245
    %v2021 = vunpack.c.l.b16 %v246
    %v2022 = vunpack.c.h.b16 %v246
    %v2023 = vunpack.c.l.b16 %v247
    %v2024 = vunpack.c.h.b16 %v247
    %v2025 = vunpack.c.l.b16 %v248
    %v2026 = vunpack.c.h.b16 %v248
    %v2027 = vunpack.c.l.b16 %v249
    %v2028 = vunpack.c.h.b16 %v249
    %v2029 = vunpack.c.l.b16 %v250
    %v2030 = vunpack.c.h.b16 %v250
    %v2031 = vunpack.c.l.b16 %v251
    %v2032 = vunpack.c.h.b16 %v251
    %v2033 = vunpack.c.l.b16 %v252
    %v2034 = vunpack.c.h.b16 %v252
    %v2035 = vunpack.c.l.b16 %v253
    %v2036 = vunpack.c.h.b16 %v253
    %v2037 = vunpack.c.l.b16 %v254
    %v2038 = vunpack.c.h.b16 %v254
    %v2039 = vunpack.c.l.b16 %v255
    %v2040 = vunpack.c.h.b16 %v255
    %v2041 = vunpack.c.l.b16 %v256
    %v2042 = vunpack.c.h.b16 %v256
    %v2043 = vunpack.c.l.b16 %v257
    %v2044 = vunpack.c.h.b16 %v257
    %v2045 = vunpack.c.l.b16 %v258
    %v2046 = vunpack.c.h.b16 %v258
    %v2047 = vunpack.c.l.b16 %v259
    %v2048 = vunpack.c.h.b16 %v259
    %v2049 = vunpack.c.l.b16 %v260
    %v2050 = vunpack.c.h.b16 %v260
    %v2051 = vunpack.c.l.b16 %v261
    %v2052 = vunpack.c.h.b16 %v261
    %v2053 = vunpack.c.l.b16 %v262
    %v2054 = vunpack.c.h.b16 %v262
    %v2055 = vunpack.c.l.b16 %v263
    %v2056 = vunpack.c.h.b16 %v263
    %v2057 = vunpack.c.l.b16 %v264
    %v2058 = vunpack.c.h.b16 %v264
    %v2059 = vunpack.c.l.b16 %v265
    %v2060 = vunpack.c.h.b16 %v265
    %v2061 = vunpack.c.l.b16 %v266
    %v2062 = vunpack.c.h.b16 %v266
    %v2063 = vunpack.c.l.b16 %v267
    %v2064 = vunpack.c.h.b16 %v267
    %v2065 = vunpack.c.l.b16 %v268
    %v2066 = vunpack.c.h.b16 %v268
    %v2067 = vunpack.c.l.b16 %v269
    %v2068 = vunpack.c.h.b16 %v269
    %v2069 = vunpack.c.l.b16 %v270
    %v2070 = vunpack.c.h.b16 %v270
    %v2071 = vunpack.c.l.b16 %v271
    %v2072 = vunpack.c.h.b16 %v271
    %v2073 = vunpack.c.l.b16 %v272
    %v2074 = vunpack.c.h.b16 %v272
    %v2075 = vunpack.c.l.b16 %v273
    %v2076 = vunpack.c.h.b16 %v273
    %v2077 = vunpack.c.l.b16 %v274
    %v2078 = vunpack.c.h.b16 %v274
    %v2079 = vunpack.c.l.b16 %v275
    %v2080 = vunpack.c.h.b16 %v275
    %v2081 = vunpack.c.l.b16 %v276
    %v2082 = vunpack.c.h.b16 %v276
    %v2083 = vunpack.c.l.b16 %v277
    %v2084 = vunpack.c.h.b16 %v277
    %v2085 = vunpack.c.l.b16 %v278
    %v2086 = vunpack.c.h.b16 %v278
    %v2087 = vunpack.c.l.b16 %v279
    %v2088 = vunpack.c.h.b16 %v279
    %v2089 = vunpack.c.l.b16 %v280
    %v2090 = vunpack.c.h.b16 %v280
    %v2091 = vunpack.c.l.b16 %v281
    %v2092 = vunpack.c.h.b16 %v281
    %v2093 = vunpack.c.l.b16 %v282
    %v2094 = vunpack.c.h.b16 %v282
    %v2095 = vunpack.c.l.b16 %v283
    %v2096 = vunpack.c.h.b16 %v283
    %v2097 = vunpack.c.l.b16 %v284
    %v2098 = vunpack.c.h.b16 %v284
    %v2099 = vunpack.c.l.b16 %v285
    %v2100 = vunpack.c.h.b16 %v285
    %v2101 = vunpack.c.l.b16 %v286
    %v2102 = vunpack.c.h.b16 %v286
    %v2103 = vunpack.c.l.b16 %v287
    %v2104 = vunpack.c.h.b16 %v287
    %v2105 = vunpack.c.l.b16 %v288
    %v2106 = vunpack.c.h.b16 %v288
    %v2107 = vunpack.c.l.b16 %v289
    %v2108 = vunpack.c.h.b16 %v289
    %v2109 = vunpack.c.l.b16 %v290
    %v2110 = vunpack.c.h.b16 %v290
    %v2111 = vunpack.c.l.b16 %v291
    %v2112 = vunpack.c.h.b16 %v291
    %v2113 = vunpack.c.l.b16 %v292
    %v2114 = vunpack.c.h.b16 %v292
    %v2115 = vunpack.c.l.b16 %v293
    %v2116 = vunpack.c.h.b16 %v293
    %v2117 = vunpack.c.l.b16 %v294
    %v2118 = vunpack.c.h.b16 %v294
    %v2119 = vunpack.c.l.b16 %v295
    %v2120 = vunpack.c.h.b16 %v295
    %v2121 = vunpack.c.l.b16 %v296
    %v2122 = vunpack.c.h.b16 %v296
    %v2123 = vunpack.c.l.b16 %v297
    %v2124 = vunpack.c.h.b16 %v297
    %v2125 = vunpack.c.l.b16 %v298
    %v2126 = vunpack.c.h.b16 %v298
    %v2127 = vunpack.c.l.b16 %v299
    %v2128 = vunpack.c.h.b16 %v299
    %v2129 = vunpack.c.l.b16 %v300
    %v2130 = vunpack.c.h.b16 %v300
    %v2131 = vunpack.c.l.b16 %v301
    %v2132 = vunpack.c.h.b16 %v301
    %v2133 = vunpack.c.l.b16 %v302
    %v2134 = vunpack.c.h.b16 %v302
    %v2135 = vunpack.c.l.b16 %v303
    %v2136 = vunpack.c.h.b16 %v303
    %v2137 = vunpack.c.l.b16 %v304
    %v2138 = vunpack.c.h.b16 %v304
    %v2139 = vunpack.c.l.b16 %v305
    %v2140 = vunpack.c.h.b16 %v305
    %v2141 = vunpack.c.l.b16 %v306
    %v2142 = vunpack.c.h.b16 %v306
    %v2143 = vunpack.c.l.b16 %v307
    %v2144 = vunpack.c.h.b16 %v307
    %v2145 = vunpack.c.l.b16 %v308
    %v2146 = vunpack.c.h.b16 %v308
    %v2147 = vunpack.c.l.b16 %v309
    %v2148 = vunpack.c.h.b16 %v309
    %v2149 = vunpack.c.l.b16 %v310
    %v2150 = vunpack.c.h.b16 %v310
    %v2151 = vunpack.c.l.b16 %v311
    %v2152 = vunpack.c.h.b16 %v311
    %v2153 = vunpack.c.l.b16 %v312
    %v2154 = vunpack.c.h.b16 %v312
    %v2155 = vunpack.c.l.b16 %v313
    %v2156 = vunpack.c.h.b16 %v313
    %v2157 = vunpack.c.l.b16 %v314
    %v2158 = vunpack.c.h.b16 %v314
    %v2159 = vunpack.c.l.b16 %v315
    %v2160 = vunpack.c.h.b16 %v315
    %v2161 = vunpack.c.l.b16 %v316
    %v2162 = vunpack.c.h.b16 %v316
    %v2163 = vunpack.c.l.b16 %v317
    %v2164 = vunpack.c.h.b16 %v317
    %v2165 = vunpack.c.l.b16 %v318
    %v2166 = vunpack.c.h.b16 %v318
    %v2167 = vunpack.c.l.b16 %v319
    %v2168 = vunpack.c.h.b16 %v319
    %v2169 = vunpack.c.l.b16 %v320
    %v2170 = vunpack.c.h.b16 %v320
    %v2171 = vunpack.c.l.b16 %v321
    %v2172 = vunpack.c.h.b16 %v321
    %v2173 = vunpack.c.l.b16 %v322
    %v2174 = vunpack.c.h.b16 %v322
    %v2175 = vunpack.c.l.b16 %v323
    %v2176 = vunpack.c.h.b16 %v323
    %v2177 = vunpack.c.l.b16 %v324
    %v2178 = vunpack.c.h.b16 %v324
    %v2179 = vunpack.c.l.b16 %v325
    %v2180 = vunpack.c.h.b16 %v325
    %v2181 = vunpack.c.l.b16 %v326
    %v2182 = vunpack.c.h.b16 %v326
    %v2183 = vunpack.c.l.b16 %v327
    %v2184 = vunpack.c.h.b16 %v327
    %v2185 = vunpack.c.l.b16 %v328
    %v2186 = vunpack.c.h.b16 %v328
    %v2187 = vunpack.c.l.b16 %v329
    %v2188 = vunpack.c.h.b16 %v329
    %v2189 = vunpack.c.l.b16 %v330
    %v2190 = vunpack.c.h.b16 %v330
    %v2191 = vunpack.c.l.b16 %v331
    %v2192 = vunpack.c.h.b16 %v331
    %v2193 = vunpack.c.l.b16 %v332
    %v2194 = vunpack.c.h.b16 %v332
    %v2195 = vunpack.c.l.b16 %v333
    %v2196 = vunpack.c.h.b16 %v333
    %v2197 = vunpack.c.l.b16 %v334
    %v2198 = vunpack.c.h.b16 %v334
    %v2199 = vunpack.c.l.b16 %v335
    %v2200 = vunpack.c.h.b16 %v335
    %v2201 = vunpack.c.l.b16 %v336
    %v2202 = vunpack.c.h.b16 %v336
    %v2203 = vunpack.c.l.b16 %v337
    %v2204 = vunpack.c.h.b16 %v337
    %v2205 = vunpack.c.l.b16 %v338
    %v2206 = vunpack.c.h.b16 %v338
    %v2207 = vunpack.c.l.b16 %v339
    %v2208 = vunpack.c.h.b16 %v339
    %v2209 = vunpack.c.l.b16 %v340
    %v2210 = vunpack.c.h.b16 %v340
    %v2211 = vunpack.c.l.b16 %v341
    %v2212 = vunpack.c.h.b16 %v341
    %v2213 = vunpack.c.l.b16 %v342
    %v2214 = vunpack.c.h.b16 %v342
    %v2215 = vunpack.c.l.b16 %v343
    %v2216 = vunpack.c.h.b16 %v343
    %v2217 = vunpack.c.l.b16 %v344
    %v2218 = vunpack.c.h.b16 %v344
    %v2219 = vunpack.c.l.b16 %v345
    %v2220 = vunpack.c.h.b16 %v345
    %v2221 = vunpack.c.l.b16 %v346
    %v2222 = vunpack.c.h.b16 %v346
    %v2223 = vunpack.c.l.b16 %v347
    %v2224 = vunpack.c.h.b16 %v347
    %v2225 = vunpack.c.l.b16 %v348
    %v2226 = vunpack.c.h.b16 %v348
    %v2227 = vunpack.c.l.b16 %v349
    %v2228 = vunpack.c.h.b16 %v349
    %v2229 = vunpack.c.l.b16 %v350
    %v2230 = vunpack.c.h.b16 %v350
    %v2231 = vunpack.c.l.b16 %v351
    %v2232 = vunpack.c.h.b16 %v351
    %v2233 = vunpack.c.l.b16 %v352
    %v2234 = vunpack.c.h.b16 %v352
    %v2235 = vunpack.c.l.b16 %v353
    %v2236 = vunpack.c.h.b16 %v353
    %v2237 = vunpack.c.l.b16 %v354
    %v2238 = vunpack.c.h.b16 %v354
    %v2239 = vunpack.c.l.b16 %v355
    %v2240 = vunpack.c.h.b16 %v355
    %v2241 = vunpack.c.l.b16 %v356
    %v2242 = vunpack.c.h.b16 %v356
    %v2243 = vunpack.c.l.b16 %v357
    %v2244 = vunpack.c.h.b16 %v357
    %v2245 = vunpack.c.l.b16 %v358
    %v2246 = vunpack.c.h.b16 %v358
    %v2247 = vunpack.c.l.b16 %v359
    %v2248 = vunpack.c.h.b16 %v359
    %v2249 = vunpack.c.l.b16 %v360
    %v2250 = vunpack.c.h.b16 %v360
    %v2251 = vunpack.c.l.b16 %v361
    %v2252 = vunpack.c.h.b16 %v361
    %v2253 = vunpack.c.l.b16 %v362
    %v2254 = vunpack.c.h.b16 %v362
    %v2255 = vunpack.c.l.b16 %v363
    %v2256 = vunpack.c.h.b16 %v363
    %v2257 = vunpack.c.l.b16 %v364
    %v2258 = vunpack.c.h.b16 %v364
    %v2259 = vunpack.c.l.b16 %v365
    %v2260 = vunpack.c.h.b16 %v365
    %v2261 = vunpack.c.l.b16 %v366
    %v2262 = vunpack.c.h.b16 %v366
    %v2263 = vunpack.c.l.b16 %v367
    %v2264 = vunpack.c.h.b16 %v367
    %v2265 = vunpack.c.l.b16 %v368
    %v2266 = vunpack.c.h.b16 %v368
    %v2267 = vunpack.c.l.b16 %v369
    %v2268 = vunpack.c.h.b16 %v369
    %v2269 = vunpack.c.l.b16 %v370
    %v2270 = vunpack.c.h.b16 %v370
    %v2271 = vunpack.c.l.b16 %v371
    %v2272 = vunpack.c.h.b16 %v371
    %v2273 = vunpack.c.l.b16 %v372
    %v2274 = vunpack.c.h.b16 %v372
    %v2275 = vunpack.c.l.b16 %v373
    %v2276 = vunpack.c.h.b16 %v373
    %v2277 = vunpack.c.l.b16 %v374
    %v2278 = vunpack.c.h.b16 %v374
    %v2279 = vunpack.c.l.b16 %v375
    %v2280 = vunpack.c.h.b16 %v375
    %v2281 = vunpack.c.l.b16 %v376
    %v2282 = vunpack.c.h.b16 %v376
    %v2283 = vunpack.c.l.b16 %v377
    %v2284 = vunpack.c.h.b16 %v377
    %v2285 = vunpack.c.l.b16 %v378
    %v2286 = vunpack.c.h.b16 %v378
    %v2287 = vunpack.c.l.b16 %v379
    %v2288 = vunpack.c.h.b16 %v379
    %v2289 = vunpack.c.l.b16 %v380
    %v2290 = vunpack.c.h.b16 %v380
    %v2291 = vunpack.c.l.b16 %v381
    %v2292 = vunpack.c.h.b16 %v381
    %v2293 = vunpack.c.l.b16 %v382
    %v2294 = vunpack.c.h.b16 %v382
    %v2295 = vunpack.c.l.b16 %v383
    %v2296 = vunpack.c.h.b16 %v383
    %v2297 = vunpack.c.l.b16 %v384
    %v2298 = vunpack.c.h.b16 %v384
    %v2299 = vunpack.c.l.b16 %v385
    %v2300 = vunpack.c.h.b16 %v385
    %v2301 = vunpack.c.l.b16 %v386
    %v2302 = vunpack.c.h.b16 %v386
    %v2303 = vunpack.c.l.b16 %v387
    %v2304 = vunpack.c.h.b16 %v387
    %v2305 = vunpack.c.l.b16 %v388
    %v2306 = vunpack.c.h.b16 %v388
    %v2307 = vunpack.c.l.b16 %v389
    %v2308 = vunpack.c.h.b16 %v389
    %v2309 = vunpack.c.l.b16 %v390
    %v2310 = vunpack.c.h.b16 %v390
    %v2311 = vunpack.c.l.b16 %v391
    %v2312 = vunpack.c.h.b16 %v391
    %v2313 = vunpack.c.l.b16 %v392
    %v2314 = vunpack.c.h.b16 %v392
    %v2315 = vunpack.c.l.b16 %v393
    %v2316 = vunpack.c.h.b16 %v393
    %v2317 = vunpack.c.l.b16 %v394
    %v2318 = vunpack.c.h.b16 %v394
    %v2319 = vunpack.c.l.b16 %v395
    %v2320 = vunpack.c.h.b16 %v395
    %v2321 = vunpack.c.l.b16 %v396
    %v2322 = vunpack.c.h.b16 %v396
    %v2323 = vunpack.c.l.b16 %v397
    %v2324 = vunpack.c.h.b16 %v397
    %v2325 = vunpack.c.l.b16 %v398
    %v2326 = vunpack.c.h.b16 %v398
    %v2327 = vunpack.c.l.b16 %v399
    %v2328 = vunpack.c.h.b16 %v399
    %v2329 = vunpack.c.l.b16 %v400
    %v2330 = vunpack.c.h.b16 %v400
    %v2331 = vunpack.c.l.b16 %v401
    %v2332 = vunpack.c.h.b16 %v401
    %v2333 = vunpack.c.l.b16 %v402
    %v2334 = vunpack.c.h.b16 %v402
    %v2335 = vunpack.c.l.b16 %v403
    %v2336 = vunpack.c.h.b16 %v403
    %v2337 = vunpack.c.l.b16 %v404
    %v2338 = vunpack.c.h.b16 %v404
    %v2339 = vunpack.c.l.b16 %v405
    %v2340 = vunpack.c.h.b16 %v405
    %v2341 = vunpack.c.l.b16 %v406
    %v2342 = vunpack.c.h.b16 %v406
    %v2343 = vunpack.c.l.b16 %v407
    %v2344 = vunpack.c.h.b16 %v407
    %v2345 = vunpack.c.l.b16 %v408
    %v2346 = vunpack.c.h.b16 %v408
    %v2347 = vunpack.c.l.b16 %v409
    %v2348 = vunpack.c.h.b16 %v409
    %v2349 = vunpack.c.l.b16 %v410
    %v2350 = vunpack.c.h.b16 %v410
    %v2351 = vunpack.c.l.b16 %v411
    %v2352 = vunpack.c.h.b16 %v411
    %v2353 = vunpack.c.l.b16 %v412
    %v2354 = vunpack.c.h.b16 %v412
    %v2355 = vunpack.c.l.b16 %v413
    %v2356 = vunpack.c.h.b16 %v413
    %v2357 = vunpack.c.l.b16 %v414
    %v2358 = vunpack.c.h.b16 %v414
    %v2359 = vunpack.c.l.b16 %v415
    %v2360 = vunpack.c.h.b16 %v415
    %v2361 = vunpack.c.l.b16 %v416
    %v2362 = vunpack.c.h.b16 %v416
    %v2363 = vunpack.c.l.b16 %v417
    %v2364 = vunpack.c.h.b16 %v417
    %v2365 = vunpack.c.l.b16 %v418
    %v2366 = vunpack.c.h.b16 %v418
    %v2367 = vunpack.c.l.b16 %v419
    %v2368 = vunpack.c.h.b16 %v419
    %v2369 = vunpack.c.l.b16 %v420
    %v2370 = vunpack.c.h.b16 %v420
    %v2371 = vunpack.c.l.b16 %v421
    %v2372 = vunpack.c.h.b16 %v421
    %v2373 = vunpack.c.l.b16 %v422
    %v2374 = vunpack.c.h.b16 %v422
    %v2375 = vunpack.c.l.b16 %v423
    %v2376 = vunpack.c.h.b16 %v423
    %v2377 = vunpack.c.l.b16 %v424
    %v2378 = vunpack.c.h.b16 %v424
    %v2379 = vunpack.c.l.b16 %v425
    %v2380 = vunpack.c.h.b16 %v425
    %v2381 = vunpack.c.l.b16 %v426
    %v2382 = vunpack.c.h.b16 %v426
    %v2383 = vunpack.c.l.b16 %v427
    %v2384 = vunpack.c.h.b16 %v427
    %v2385 = vunpack.c.l.b16 %v428
    %v2386 = vunpack.c.h.b16 %v428
    %v2387 = vunpack.c.l.b16 %v429
    %v2388 = vunpack.c.h.b16 %v429
    %v2389 = vunpack.c.l.b16 %v430
    %v2390 = vunpack.c.h.b16 %v430
    %v2391 = vunpack.c.l.b16 %v431
    %v2392 = vunpack.c.h.b16 %v431
    %v2393 = vunpack.c.l.b16 %v432
    %v2394 = vunpack.c.h.b16 %v432
    %v2395 = vunpack.c.l.b16 %v433
    %v2396 = vunpack.c.h.b16 %v433
    %v2397 = vunpack.c.l.b16 %v434
    %v2398 = vunpack.c.h.b16 %v434
    %v2399 = vunpack.c.l.b16 %v435
    %v2400 = vunpack.c.h.b16 %v435
    %v2401 = vunpack.c.l.b16 %v436
    %v2402 = vunpack.c.h.b16 %v436
    %v2403 = vunpack.c.l.b16 %v437
    %v2404 = vunpack.c.h.b16 %v437
    %v2405 = vunpack.c.l.b16 %v438
    %v2406 = vunpack.c.h.b16 %v438
    %v2407 = vunpack.c.l.b16 %v439
    %v2408 = vunpack.c.h.b16 %v439
    %v2409 = vunpack.c.l.b16 %v440
    %v2410 = vunpack.c.h.b16 %v440
    %v2411 = vunpack.c.l.b16 %v441
    %v2412 = vunpack.c.h.b16 %v441
    %v2413 = vunpack.c.l.b16 %v442
    %v2414 = vunpack.c.h.b16 %v442
    %v2415 = vunpack.c.l.b16 %v443
    %v2416 = vunpack.c.h.b16 %v443
    %v2417 = vunpack.c.l.b16 %v444
    %v2418 = vunpack.c.h.b16 %v444
    %v2419 = vunpack.c.l.b16 %v445
    %v2420 = vunpack.c.h.b16 %v445
    %v2421 = vunpack.c.l.b16 %v446
    %v2422 = vunpack.c.h.b16 %v446
    %v2423 = vunpack.c.l.b16 %v447
    %v2424 = vunpack.c.h.b16 %v447
    %v2425 = vunpack.c.l.b16 %v448
    %v2426 = vunpack.c.h.b16 %v448
    %v2427 = vunpack.c.l.b16 %v449
    %v2428 = vunpack.c.h.b16 %v449
    %v2429 = vunpack.c.l.b16 %v450
    %v2430 = vunpack.c.h.b16 %v450
    %v2431 = vunpack.c.l.b16 %v451
    %v2432 = vunpack.c.h.b16 %v451
    %v2433 = vunpack.c.l.b16 %v452
    %v2434 = vunpack.c.h.b16 %v452
    %v2435 = vunpack.c.l.b16 %v453
    %v2436 = vunpack.c.h.b16 %v453
    %v2437 = vunpack.c.l.b16 %v454
    %v2438 = vunpack.c.h.b16 %v454
    %v2439 = vunpack.c.l.b16 %v455
    %v2440 = vunpack.c.h.b16 %v455
    %v2441 = vunpack.c.l.b16 %v456
    %v2442 = vunpack.c.h.b16 %v456
    %v2443 = vunpack.c.l.b16 %v457
    %v2444 = vunpack.c.h.b16 %v457
    %v2445 = vunpack.c.l.b16 %v458
    %v2446 = vunpack.c.h.b16 %v458
    %v2447 = vunpack.c.l.b16 %v459
    %v2448 = vunpack.c.h.b16 %v459
    %v2449 = vunpack.c.l.b16 %v460
    %v2450 = vunpack.c.h.b16 %v460
    %v2451 = vunpack.c.l.b16 %v461
    %v2452 = vunpack.c.h.b16 %v461
    %v2453 = vunpack.c.l.b16 %v462
    %v2454 = vunpack.c.h.b16 %v462
    %v2455 = vunpack.c.l.b16 %v463
    %v2456 = vunpack.c.h.b16 %v463
    %v2457 = vunpack.c.l.b16 %v464
    %v2458 = vunpack.c.h.b16 %v464
    %v2459 = vunpack.c.l.b16 %v465
    %v2460 = vunpack.c.h.b16 %v465
    %v2461 = vunpack.c.l.b16 %v466
    %v2462 = vunpack.c.h.b16 %v466
    %v2463 = vunpack.c.l.b16 %v467
    %v2464 = vunpack.c.h.b16 %v467
    %v2465 = vunpack.c.l.b16 %v468
    %v2466 = vunpack.c.h.b16 %v468
    %v2467 = vunpack.c.l.b16 %v469
    %v2468 = vunpack.c.h.b16 %v469
    %v2469 = vunpack.c.l.b16 %v470
    %v2470 = vunpack.c.h.b16 %v470
    %v2471 = vunpack.c.l.b16 %v471
    %v2472 = vunpack.c.h.b16 %v471
    %v2473 = vunpack.c.l.b16 %v472
    %v2474 = vunpack.c.h.b16 %v472
    %v2475 = vunpack.c.l.b16 %v473
    %v2476 = vunpack.c.h.b16 %v473
    %v2477 = vunpack.c.l.b16 %v474
    %v2478 = vunpack.c.h.b16 %v474
    %v2479 = vunpack.c.l.b16 %v475
    %v2480 = vunpack.c.h.b16 %v475
    %v2481 = vunpack.c.l.b16 %v476
    %v2482 = vunpack.c.h.b16 %v476
    %v2483 = vunpack.c.l.b16 %v477
    %v2484 = vunpack.c.h.b16 %v477
    %v2485 = vunpack.c.l.b16 %v478
    %v2486 = vunpack.c.h.b16 %v478
    %v2487 = vunpack.c.l.b16 %v479
    %v2488 = vunpack.c.h.b16 %v479
    %v2489 = vunpack.c.l.b16 %v480
    %v2490 = vunpack.c.h.b16 %v480
    %v2491 = vunpack.c.l.b16 %v481
    %v2492 = vunpack.c.h.b16 %v481
    %v2493 = vunpack.c.l.b16 %v482
    %v2494 = vunpack.c.h.b16 %v482
    %v2495 = vunpack.c.l.b16 %v483
    %v2496 = vunpack.c.h.b16 %v483
    %v2497 = vunpack.c.l.b16 %v484
    %v2498 = vunpack.c.h.b16 %v484
    %v2499 = vunpack.c.l.b16 %v485
    %v2500 = vunpack.c.h.b16 %v485
    %v2501 = vunpack.c.l.b16 %v486
    %v2502 = vunpack.c.h.b16 %v486
    %v2503 = vunpack.c.l.b16 %v487
    %v2504 = vunpack.c.h.b16 %v487
    %v2505 = vunpack.c.l.b16 %v488
    %v2506 = vunpack.c.h.b16 %v488
    %v2507 = vunpack.c.l.b16 %v489
    %v2508 = vunpack.c.h.b16 %v489
    %v2509 = vunpack.c.l.b16 %v490
    %v2510 = vunpack.c.h.b16 %v490
    %v2511 = vunpack.c.l.b16 %v491
    %v2512 = vunpack.c.h.b16 %v491
    %v2513 = vunpack.c.l.b16 %v492
    %v2514 = vunpack.c.h.b16 %v492
    %v2515 = vunpack.c.l.b16 %v493
    %v2516 = vunpack.c.h.b16 %v493
    %v2517 = vunpack.c.l.b16 %v494
    %v2518 = vunpack.c.h.b16 %v494
    %v2519 = vunpack.c.l.b16 %v495
    %v2520 = vunpack.c.h.b16 %v495
    %v2521 = vunpack.c.l.b16 %v496
    %v2522 = vunpack.c.h.b16 %v496
    %v2523 = vunpack.c.l.b16 %v497
    %v2524 = vunpack.c.h.b16 %v497
    %v2525 = vunpack.c.l.b16 %v498
    %v2526 = vunpack.c.h.b16 %v498
    %v2527 = vunpack.c.l.b16 %v499
    %v2528 = vunpack.c.h.b16 %v499
    %v2529 = vunpack.c.l.b16 %v500
    %v2530 = vunpack.c.h.b16 %v500
    %v2531 = vunpack.c.l.b16 %v501
    %v2532 = vunpack.c.h.b16 %v501
    %v2533 = vunpack.c.l.b16 %v502
    %v2534 = vunpack.c.h.b16 %v502
    %v2535 = vunpack.c.l.b16 %v503
    %v2536 = vunpack.c.h.b16 %v503
    %v2537 = vunpack.c.l.b16 %v504
    %v2538 = vunpack.c.h.b16 %v504
    %v2539 = vunpack.c.l.b16 %v505
    %v2540 = vunpack.c.h.b16 %v505
    %v2541 = vunpack.c.l.b16 %v506
    %v2542 = vunpack.c.h.b16 %v506
    %v2543 = vunpack.c.l.b16 %v507
    %v2544 = vunpack.c.h.b16 %v507
    %v2545 = vunpack.c.l.b16 %v508
    %v2546 = vunpack.c.h.b16 %v508
    %v2547 = vunpack.c.l.b16 %v509
    %v2548 = vunpack.c.h.b16 %v509
    %v2549 = vunpack.c.l.b16 %v510
    %v2550 = vunpack.c.h.b16 %v510
    %v2551 = vunpack.c.l.b16 %v511
    %v2552 = vunpack.c.h.b16 %v511
    %v2553 = vunpack.c.l.b16 %v512
    %v2554 = vunpack.c.h.b16 %v512
    %v2555 = vunpack.c.l.b16 %v513
    %v2556 = vunpack.c.h.b16 %v513
    %v2557 = vunpack.c.l.b16 %v514
    %v2558 = vunpack.c.h.b16 %v514
    %v2559 = vunpack.c.l.b16 %v515
    %v2560 = vunpack.c.h.b16 %v515
    %v2561 = vunpack.c.l.b16 %v516
    %v2562 = vunpack.c.h.b16 %v516
    %v2563 = vunpack.c.l.b16 %v517
    %v2564 = vunpack.c.h.b16 %v517
    %v2565 = vunpack.c.l.b16 %v518
    %v2566 = vunpack.c.h.b16 %v518
    %v2567 = vunpack.c.l.b16 %v519
    %v2568 = vunpack.c.h.b16 %v519
    %v2569 = vunpack.c.l.b16 %v520
    %v2570 = vunpack.c.h.b16 %v520
    %v2571 = vunpack.c.l.b16 %v521
    %v2572 = vunpack.c.h.b16 %v521
    %v2573 = vunpack.c.l.b16 %v522
    %v2574 = vunpack.c.h.b16 %v522
    %v2575 = vunpack.c.l.b16 %v523
    %v2576 = vunpack.c.h.b16 %v523
    %v2577 = vunpack.c.l.b16 %v524
    %v2578 = vunpack.c.h.b16 %v524
    %v2579 = vunpack.c.l.b16 %v525
    %v2580 = vunpack.c.h.b16 %v525
    %v2581 = vunpack.c.l.b16 %v526
    %v2582 = vunpack.c.h.b16 %v526
    %v2583 = vunpack.c.l.b16 %v527
    %v2584 = vunpack.c.h.b16 %v527
    %v2585 = vunpack.c.l.b16 %v528
    %v2586 = vunpack.c.h.b16 %v528
    %v2587 = vunpack.c.l.b16 %v529
    %v2588 = vunpack.c.h.b16 %v529
    %v2589 = vunpack.c.l.b16 %v530
    %v2590 = vunpack.c.h.b16 %v530
    %v2591 = vunpack.c.l.b16 %v531
    %v2592 = vunpack.c.h.b16 %v531
    %v2593 = vunpack.c.l.b16 %v532
    %v2594 = vunpack.c.h.b16 %v532
    %v2595 = vunpack.c.l.b16 %v533
    %v2596 = vunpack.c.h.b16 %v533
    %v2597 = vunpack.c.l.b16 %v534
    %v2598 = vunpack.c.h.b16 %v534
    %v2599 = vunpack.c.l.b16 %v535
    %v2600 = vunpack.c.h.b16 %v535
    %v2601 = vunpack.c.l.b16 %v536
    %v2602 = vunpack.c.h.b16 %v536
    %v2603 = vunpack.c.l.b16 %v537
    %v2604 = vunpack.c.h.b16 %v537
    %v2605 = vunpack.c.l.b16 %v538
    %v2606 = vunpack.c.h.b16 %v538
    %v2607 = vunpack.c.l.b16 %v539
    %v2608 = vunpack.c.h.b16 %v539
    %v2609 = vunpack.c.l.b16 %v540
    %v2610 = vunpack.c.h.b16 %v540
    %v2611 = vunpack.c.l.b16 %v541
    %v2612 = vunpack.c.h.b16 %v541
    %v2613 = vunpack.c.l.b16 %v542
    %v2614 = vunpack.c.h.b16 %v542
    %v2615 = vunpack.c.l.b16 %v543
    %v2616 = vunpack.c.h.b16 %v543
    %v2617 = vunpack.c.l.b16 %v544
    %v2618 = vunpack.c.h.b16 %v544
    %v2619 = vunpack.c.l.b16 %v545
    %v2620 = vunpack.c.h.b16 %v545
    %v2621 = vunpack.c.l.b16 %v546
    %v2622 = vunpack.c.h.b16 %v546
    %v2623 = vunpack.c.l.b16 %v547
    %v2624 = vunpack.c.h.b16 %v547
    %v2625 = vunpack.c.l.b16 %v548
    %v2626 = vunpack.c.h.b16 %v548
    %v2627 = vunpack.c.l.b16 %v549
    %v2628 = vunpack.c.h.b16 %v549
    %v2629 = vunpack.c.l.b16 %v550
    %v2630 = vunpack.c.h.b16 %v550
    %v2631 = vunpack.c.l.b16 %v551
    %v2632 = vunpack.c.h.b16 %v551
    %v2633 = vunpack.c.l.b16 %v552
    %v2634 = vunpack.c.h.b16 %v552
    %v2635 = vunpack.c.l.b16 %v553
    %v2636 = vunpack.c.h.b16 %v553
    %v2637 = vunpack.c.l.b16 %v554
    %v2638 = vunpack.c.h.b16 %v554
    %v2639 = vunpack.c.l.b16 %v555
    %v2640 = vunpack.c.h.b16 %v555
    %v2641 = vunpack.c.l.b16 %v556
    %v2642 = vunpack.c.h.b16 %v556
    %v2643 = vunpack.c.l.b16 %v557
    %v2644 = vunpack.c.h.b16 %v557
    %v2645 = vunpack.c.l.b16 %v558
    %v2646 = vunpack.c.h.b16 %v558
    %v2647 = vunpack.c.l.b16 %v559
    %v2648 = vunpack.c.h.b16 %v559
    %v2649 = vunpack.c.l.b16 %v560
    %v2650 = vunpack.c.h.b16 %v560
    %v2651 = vunpack.c.l.b16 %v561
    %v2652 = vunpack.c.h.b16 %v561
    %v2653 = vunpack.c.l.b16 %v562
    %v2654 = vunpack.c.h.b16 %v562
    %v2655 = vunpack.c.l.b16 %v563
    %v2656 = vunpack.c.h.b16 %v563
    %v2657 = vunpack.c.l.b16 %v564
    %v2658 = vunpack.c.h.b16 %v564
    %v2659 = vunpack.c.l.b16 %v565
    %v2660 = vunpack.c.h.b16 %v565
    %v2661 = vunpack.c.l.b16 %v566
    %v2662 = vunpack.c.h.b16 %v566
    %v2663 = vunpack.c.l.b16 %v567
    %v2664 = vunpack.c.h.b16 %v567
    %v2665 = vunpack.c.l.b16 %v568
    %v2666 = vunpack.c.h.b16 %v568
    %v2667 = vunpack.c.l.b16 %v569
    %v2668 = vunpack.c.h.b16 %v569
    %v2669 = vunpack.c.l.b16 %v570
    %v2670 = vunpack.c.h.b16 %v570
    %v2671 = vunpack.c.l.b16 %v571
    %v2672 = vunpack.c.h.b16 %v571
    %v2673 = vunpack.c.l.b16 %v572
    %v2674 = vunpack.c.h.b16 %v572
    %v2675 = vunpack.c.l.b16 %v573
    %v2676 = vunpack.c.h.b16 %v573
    %v2677 = vunpack.c.l.b16 %v574
    %v2678 = vunpack.c.h.b16 %v574
    %v2679 = vunpack.c.l.b16 %v575
    %v2680 = vunpack.c.h.b16 %v575
    %v2681 = vunpack.c.l.b16 %v576
    %v2682 = vunpack.c.h.b16 %v576
    %v2683 = vunpack.c.l.b16 %v577
    %v2684 = vunpack.c.h.b16 %v577
    %v2685 = vunpack.c.l.b16 %v578
    %v2686 = vunpack.c.h.b16 %v578
    %v2687 = vunpack.c.l.b16 %v579
    %v2688 = vunpack.c.h.b16 %v579
    %v2689 = vunpack.c.l.b16 %v580
    %v2690 = vunpack.c.h.b16 %v580
    %v2691 = vunpack.c.l.b16 %v581
    %v2692 = vunpack.c.h.b16 %v581
    %v2693 = vunpack.c.l.b16 %v582
    %v2694 = vunpack.c.h.b16 %v582
    %v2695 = vunpack.c.l.b16 %v583
    %v2696 = vunpack.c.h.b16 %v583
    %v2697 = vunpack.c.l.b16 %v584
    %v2698 = vunpack.c.h.b16 %v584
    %v2699 = vunpack.c.l.b16 %v585
    %v2700 = vunpack.c.h.b16 %v585
    %v2701 = vunpack.c.l.b16 %v586
    %v2702 = vunpack.c.h.b16 %v586
    %v2703 = vunpack.c.l.b16 %v587
    %v2704 = vunpack.c.h.b16 %v587
    %v2705 = vunpack.c.l.b16 %v588
    %v2706 = vunpack.c.h.b16 %v588
    %v2707 = vunpack.c.l.b16 %v589
    %v2708 = vunpack.c.h.b16 %v589
    %v2709 = vunpack.c.l.b16 %v590
    %v2710 = vunpack.c.h.b16 %v590
    %v2711 = vunpack.c.l.b16 %v591
    %v2712 = vunpack.c.h.b16 %v591
    %v2713 = vunpack.c.l.b16 %v592
    %v2714 = vunpack.c.h.b16 %v592
    %v2715 = vunpack.c.l.b16 %v593
    %v2716 = vunpack.c.h.b16 %v593
    %v2717 = vunpack.c.l.b16 %v594
    %v2718 = vunpack.c.h.b16 %v594
    %v2719 = vunpack.c.l.b16 %v595
    %v2720 = vunpack.c.h.b16 %v595
    %v2721 = vunpack.c.l.b16 %v596
    %v2722 = vunpack.c.h.b16 %v596
    %v2723 = vunpack.c.l.b16 %v597
    %v2724 = vunpack.c.h.b16 %v597
    %v2725 = vunpack.c.l.b16 %v598
    %v2726 = vunpack.c.h.b16 %v598
    %v2727 = vunpack.c.l.b16 %v599
    %v2728 = vunpack.c.h.b16 %v599
    %v2729 = vunpack.c.l.b16 %v600
    %v2730 = vunpack.c.h.b16 %v600
    %v2731 = vunpack.c.l.b16 %v601
    %v2732 = vunpack.c.h.b16 %v601
    %v2733 = vunpack.c.l.b16 %v602
    %v2734 = vunpack.c.h.b16 %v602
    %v2735 = vunpack.c.l.b16 %v603
    %v2736 = vunpack.c.h.b16 %v603
    %v2737 = vunpack.c.l.b16 %v604
    %v2738 = vunpack.c.h.b16 %v604
    %v2739 = vunpack.c.l.b16 %v605
    %v2740 = vunpack.c.h.b16 %v605
    %v2741 = vunpack.c.l.b16 %v606
    %v2742 = vunpack.c.h.b16 %v606
    %v2743 = vunpack.c.l.b16 %v607
    %v2744 = vunpack.c.h.b16 %v607
    %v2745 = vunpack.c.l.b16 %v608
    %v2746 = vunpack.c.h.b16 %v608
    %v2747 = vunpack.c.l.b16 %v609
    %v2748 = vunpack.c.h.b16 %v609
    %v2749 = vunpack.c.l.b16 %v610
    %v2750 = vunpack.c.h.b16 %v610
    %v2751 = vunpack.c.l.b16 %v611
    %v2752 = vunpack.c.h.b16 %v611
    %v2753 = vunpack.c.l.b16 %v612
    %v2754 = vunpack.c.h.b16 %v612
    %v2755 = vunpack.c.l.b16 %v613
    %v2756 = vunpack.c.h.b16 %v613
    %v2757 = vunpack.c.l.b16 %v614
    %v2758 = vunpack.c.h.b16 %v614
    %v2759 = vunpack.c.l.b16 %v615
    %v2760 = vunpack.c.h.b16 %v615
    %v2761 = vunpack.c.l.b16 %v616
    %v2762 = vunpack.c.h.b16 %v616
    %v2763 = vunpack.c.l.b16 %v617
    %v2764 = vunpack.c.h.b16 %v617
    %v2765 = vunpack.c.l.b16 %v618
    %v2766 = vunpack.c.h.b16 %v618
    %v2767 = vunpack.c.l.b16 %v619
    %v2768 = vunpack.c.h.b16 %v619
    %v2769 = vunpack.c.l.b16 %v620
    %v2770 = vunpack.c.h.b16 %v620
    %v2771 = vunpack.c.l.b16 %v621
    %v2772 = vunpack.c.h.b16 %v621
    %v2773 = vunpack.c.l.b16 %v622
    %v2774 = vunpack.c.h.b16 %v622
    %v2775 = vunpack.c.l.b16 %v623
    %v2776 = vunpack.c.h.b16 %v623
    %v2777 = vunpack.c.l.b16 %v624
    %v2778 = vunpack.c.h.b16 %v624
    %v2779 = vunpack.c.l.b16 %v625
    %v2780 = vunpack.c.h.b16 %v625
    %v2781 = vunpack.c.l.b16 %v626
    %v2782 = vunpack.c.h.b16 %v626
    %v2783 = vunpack.c.l.b16 %v627
    %v2784 = vunpack.c.h.b16 %v627
    %v2785 = vunpack.c.l.b16 %v628
    %v2786 = vunpack.c.h.b16 %v628
    %v2787 = vunpack.c.l.b16 %v629
    %v2788 = vunpack.c.h.b16 %v629
    %v2789 = vunpack.c.l.b16 %v630
    %v2790 = vunpack.c.h.b16 %v630
    %v2791 = vunpack.c.l.b16 %v631
    %v2792 = vunpack.c.h.b16 %v631
    %v2793 = vunpack.c.l.b16 %v632
    %v2794 = vunpack.c.h.b16 %v632
    %v2795 = vunpack.c.l.b16 %v633
    %v2796 = vunpack.c.h.b16 %v633
    %v2797 = vunpack.c.l.b16 %v634
    %v2798 = vunpack.c.h.b16 %v634
    %v2799 = vunpack.c.l.b16 %v635
    %v2800 = vunpack.c.h.b16 %v635
    %v2801 = vunpack.c.l.b16 %v636
    %v2802 = vunpack.c.h.b16 %v636
    %v2803 = vunpack.c.l.b16 %v637
    %v2804 = vunpack.c.h.b16 %v637
    %v2805 = vunpack.c.l.b16 %v638
    %v2806 = vunpack.c.h.b16 %v638
    %v2807 = vunpack.c.l.b16 %v639
    %v2808 = vunpack.c.h.b16 %v639
    %v2809 = vunpack.c.l.b16 %v640
    %v2810 = vunpack.c.h.b16 %v640
    %v2811 = vunpack.c.l.b16 %v641
    %v2812 = vunpack.c.h.b16 %v641
    %v2813 = vunpack.c.l.b16 %v642
    %v2814 = vunpack.c.h.b16 %v642
    %v2815 = vunpack.c.l.b16 %v643
    %v2816 = vunpack.c.h.b16 %v643
    %v2817 = vunpack.c.l.b16 %v644
    %v2818 = vunpack.c.h.b16 %v644
    %v2819 = vunpack.c.l.b16 %v645
    %v2820 = vunpack.c.h.b16 %v645
    %v2821 = vunpack.c.l.b16 %v646
    %v2822 = vunpack.c.h.b16 %v646
    %v2823 = vunpack.c.l.b16 %v647
    %v2824 = vunpack.c.h.b16 %v647
    %v2825 = vunpack.c.l.b16 %v648
    %v2826 = vunpack.c.h.b16 %v648
    %v2827 = vunpack.c.l.b16 %v649
    %v2828 = vunpack.c.h.b16 %v649
    %v2829 = vunpack.c.l.b16 %v650
    %v2830 = vunpack.c.h.b16 %v650
    %v2831 = vunpack.c.l.b16 %v651
    %v2832 = vunpack.c.h.b16 %v651
    %v2833 = vunpack.c.l.b16 %v652
    %v2834 = vunpack.c.h.b16 %v652
    %v2835 = vunpack.c.l.b16 %v653
    %v2836 = vunpack.c.h.b16 %v653
    %v2837 = vunpack.c.l.b16 %v654
    %v2838 = vunpack.c.h.b16 %v654
    %v2839 = vunpack.c.l.b16 %v655
    %v2840 = vunpack.c.h.b16 %v655
    %v2841 = vunpack.c.l.b16 %v656
    %v2842 = vunpack.c.h.b16 %v656
    %v2843 = vunpack.c.l.b16 %v657
    %v2844 = vunpack.c.h.b16 %v657
    %v2845 = vunpack.c.l.b16 %v658
    %v2846 = vunpack.c.h.b16 %v658
    %v2847 = vunpack.c.l.b16 %v659
    %v2848 = vunpack.c.h.b16 %v659
    %v2849 = vunpack.c.l.b16 %v660
    %v2850 = vunpack.c.h.b16 %v660
    %v2851 = vunpack.c.l.b16 %v661
    %v2852 = vunpack.c.h.b16 %v661
    %v2853 = vunpack.c.l.b16 %v662
    %v2854 = vunpack.c.h.b16 %v662
    %v2855 = vunpack.c.l.b16 %v663
    %v2856 = vunpack.c.h.b16 %v663
    %v2857 = vunpack.c.l.b16 %v664
    %v2858 = vunpack.c.h.b16 %v664
    %v2859 = vunpack.c.l.b16 %v665
    %v2860 = vunpack.c.h.b16 %v665
    %v2861 = vunpack.c.l.b16 %v666
    %v2862 = vunpack.c.h.b16 %v666
    %v2863 = vunpack.c.l.b16 %v667
    %v2864 = vunpack.c.h.b16 %v667
    %v2865 = vunpack.c.l.b16 %v668
    %v2866 = vunpack.c.h.b16 %v668
    %v2867 = vunpack.c.l.b16 %v669
    %v2868 = vunpack.c.h.b16 %v669
    %v2869 = vunpack.c.l.b16 %v670
    %v2870 = vunpack.c.h.b16 %v670
    %v2871 = vunpack.c.l.b16 %v671
    %v2872 = vunpack.c.h.b16 %v671
    %v2873 = vunpack.c.l.b16 %v672
    %v2874 = vunpack.c.h.b16 %v672
    %v2875 = vunpack.c.l.b16 %v673
    %v2876 = vunpack.c.h.b16 %v673
    %v2877 = vunpack.c.l.b16 %v674
    %v2878 = vunpack.c.h.b16 %v674
    %v2879 = vunpack.c.l.b16 %v675
    %v2880 = vunpack.c.h.b16 %v675
    %v2881 = vunpack.c.l.b16 %v676
    %v2882 = vunpack.c.h.b16 %v676
    %v2883 = vunpack.c.l.b16 %v677
    %v2884 = vunpack.c.h.b16 %v677
    %v2885 = vunpack.c.l.b16 %v678
    %v2886 = vunpack.c.h.b16 %v678
    %v2887 = vunpack.c.l.b16 %v679
    %v2888 = vunpack.c.h.b16 %v679
    %v2889 = vunpack.c.l.b16 %v680
    %v2890 = vunpack.c.h.b16 %v680
    %v2891 = vunpack.c.l.b16 %v681
    %v2892 = vunpack.c.h.b16 %v681
    %v2893 = vunpack.c.l.b16 %v682
    %v2894 = vunpack.c.h.b16 %v682
    %v2895 = vunpack.c.l.b16 %v683
    %v2896 = vunpack.c.h.b16 %v683
    %v2897 = vunpack.c.l.b16 %v684
    %v2898 = vunpack.c.h.b16 %v684
    %v2899 = vunpack.c.l.b16 %v685
    %v2900 = vunpack.c.h.b16 %v685
    %v2901 = vunpack.c.l.b16 %v686
    %v2902 = vunpack.c.h.b16 %v686
    %v2903 = vunpack.c.l.b16 %v687
    %v2904 = vunpack.c.h.b16 %v687
    %v2905 = vunpack.c.l.b16 %v688
    %v2906 = vunpack.c.h.b16 %v688
    %v2907 = vunpack.c.l.b16 %v689
    %v2908 = vunpack.c.h.b16 %v689
    %v2909 = vunpack.c.l.b16 %v690
    %v2910 = vunpack.c.h.b16 %v690
    %v2911 = vunpack.c.l.b16 %v691
    %v2912 = vunpack.c.h.b16 %v691
    %v2913 = vunpack.c.l.b16 %v692
    %v2914 = vunpack.c.h.b16 %v692
    %v2915 = vunpack.c.l.b16 %v693
    %v2916 = vunpack.c.h.b16 %v693
    %v2917 = vunpack.c.l.b16 %v694
    %v2918 = vunpack.c.h.b16 %v694
    %v2919 = vunpack.c.l.b16 %v695
    %v2920 = vunpack.c.h.b16 %v695
    %v2921 = vunpack.c.l.b16 %v696
    %v2922 = vunpack.c.h.b16 %v696
    %v2923 = vunpack.c.l.b16 %v697
    %v2924 = vunpack.c.h.b16 %v697
    %v2925 = vunpack.c.l.b16 %v698
    %v2926 = vunpack.c.h.b16 %v698
    %v2927 = vunpack.c.l.b16 %v699
    %v2928 = vunpack.c.h.b16 %v699
    %v2929 = vunpack.c.l.b16 %v700
    %v2930 = vunpack.c.h.b16 %v700
    %v2931 = vunpack.c.l.b16 %v701
    %v2932 = vunpack.c.h.b16 %v701
    %v2933 = vunpack.c.l.b16 %v702
    %v2934 = vunpack.c.h.b16 %v702
    %v2935 = vunpack.c.l.b16 %v703
    %v2936 = vunpack.c.h.b16 %v703
    %v2937 = vunpack.c.l.b16 %v704
    %v2938 = vunpack.c.h.b16 %v704
    %v2939 = vunpack.c.l.b16 %v705
    %v2940 = vunpack.c.h.b16 %v705
    %v2941 = vunpack.c.l.b16 %v706
    %v2942 = vunpack.c.h.b16 %v706
    %v2943 = vunpack.c.l.b16 %v707
    %v2944 = vunpack.c.h.b16 %v707
    %v2945 = vunpack.c.l.b16 %v708
    %v2946 = vunpack.c.h.b16 %v708
    %v2947 = vunpack.c.l.b16 %v709
    %v2948 = vunpack.c.h.b16 %v709
    %v2949 = vunpack.c.l.b16 %v710
    %v2950 = vunpack.c.h.b16 %v710
    %v2951 = vunpack.c.l.b16 %v711
    %v2952 = vunpack.c.h.b16 %v711
    %v2953 = vunpack.c.l.b16 %v712
    %v2954 = vunpack.c.h.b16 %v712
    %v2955 = vunpack.c.l.b16 %v713
    %v2956 = vunpack.c.h.b16 %v713
    %v2957 = vunpack.c.l.b16 %v714
    %v2958 = vunpack.c.h.b16 %v714
    %v2959 = vunpack.c.l.b16 %v715
    %v2960 = vunpack.c.h.b16 %v715
    %v2961 = vunpack.c.l.b16 %v716
    %v2962 = vunpack.c.h.b16 %v716
    %v2963 = vunpack.c.l.b16 %v717
    %v2964 = vunpack.c.h.b16 %v717
    %v2965 = vunpack.c.l.b16 %v718
    %v2966 = vunpack.c.h.b16 %v718
    %v2967 = vunpack.c.l.b16 %v719
    %v2968 = vunpack.c.h.b16 %v719
    %v2969 = vunpack.c.l.b16 %v720
    %v2970 = vunpack.c.h.b16 %v720
    %v2971 = vunpack.c.l.b16 %v721
    %v2972 = vunpack.c.h.b16 %v721
    %v2973 = vunpack.c.l.b16 %v722
    %v2974 = vunpack.c.h.b16 %v722
    %v2975 = vunpack.c.l.b16 %v723
    %v2976 = vunpack.c.h.b16 %v723
    %v2977 = vunpack.c.l.b16 %v724
    %v2978 = vunpack.c.h.b16 %v724
    %v2979 = vunpack.c.l.b16 %v725
    %v2980 = vunpack.c.h.b16 %v725
    %v2981 = vunpack.c.l.b16 %v726
    %v2982 = vunpack.c.h.b16 %v726
    %v2983 = vunpack.c.l.b16 %v727
    %v2984 = vunpack.c.h.b16 %v727
    %v2985 = vunpack.c.l.b16 %v728
    %v2986 = vunpack.c.h.b16 %v728
    %v2987 = vunpack.c.l.b16 %v729
    %v2988 = vunpack.c.h.b16 %v729
    %v2989 = vunpack.c.l.b16 %v730
    %v2990 = vunpack.c.h.b16 %v730
    %v2991 = vunpack.c.l.b16 %v731
    %v2992 = vunpack.c.h.b16 %v731
    %v2993 = vunpack.c.l.b16 %v732
    %v2994 = vunpack.c.h.b16 %v732
    %v2995 = vunpack.c.l.b16 %v733
    %v2996 = vunpack.c.h.b16 %v733
    %v2997 = vunpack.c.l.b16 %v734
    %v2998 = vunpack.c.h.b16 %v734
    %v2999 = vunpack.c.l.b16 %v735
    %v3000 = vunpack.c.h.b16 %v735
    %v3001 = vunpack.c.l.b16 %v736
    %v3002 = vunpack.c.h.b16 %v736
    %v3003 = vunpack.c.l.b16 %v737
    %v3004 = vunpack.c.h.b16 %v737
    %v3005 = vunpack.c.l.b16 %v738
    %v3006 = vunpack.c.h.b16 %v738
    %v3007 = vunpack.c.l.b16 %v739
    %v3008 = vunpack.c.h.b16 %v739
    %v3009 = vunpack.c.l.b16 %v740
    %v3010 = vunpack.c.h.b16 %v740
    %v3011 = vunpack.c.l.b16 %v741
    %v3012 = vunpack.c.h.b16 %v741
    %v3013 = vunpack.c.l.b16 %v742
    %v3014 = vunpack.c.h.b16 %v742
    %v3015 = vunpack.c.l.b16 %v743
    %v3016 = vunpack.c.h.b16 %v743
    %v3017 = vunpack.c.l.b16 %v744
    %v3018 = vunpack.c.h.b16 %v744
    %v3019 = vunpack.c.l.b16 %v745
    %v3020 = vunpack.c.h.b16 %v745
    %v3021 = vunpack.c.l.b16 %v746
    %v3022 = vunpack.c.h.b16 %v746
    %v3023 = vunpack.c.l.b16 %v747
    %v3024 = vunpack.c.h.b16 %v747
    %v3025 = vunpack.c.l.b16 %v748
    %v3026 = vunpack.c.h.b16 %v748
    %v3027 = vunpack.c.l.b16 %v749
    %v3028 = vunpack.c.h.b16 %v749
    %v3029 = vunpack.c.l.b16 %v750
    %v3030 = vunpack.c.h.b16 %v750
    %v3031 = vunpack.c.l.b16 %v751
    %v3032 = vunpack.c.h.b16 %v751
    %v3033 = vunpack.c.l.b16 %v752
    %v3034 = vunpack.c.h.b16 %v752
    %v3035 = vunpack.c.l.b16 %v753
    %v3036 = vunpack.c.h.b16 %v753
    %v3037 = vunpack.c.l.b16 %v754
    %v3038 = vunpack.c.h.b16 %v754
    %v3039 = vunpack.c.l.b16 %v755
    %v3040 = vunpack.c.h.b16 %v755
    %v3041 = vunpack.c.l.b16 %v756
    %v3042 = vunpack.c.h.b16 %v756
    %v3043 = vunpack.c.l.b16 %v757
    %v3044 = vunpack.c.h.b16 %v757
    %v3045 = vunpack.c.l.b16 %v758
    %v3046 = vunpack.c.h.b16 %v758
    %v3047 = vunpack.c.l.b16 %v759
    %v3048 = vunpack.c.h.b16 %v759
    %v3049 = vunpack.c.l.b16 %v760
    %v3050 = vunpack.c.h.b16 %v760
    %v3051 = vunpack.c.l.b16 %v761
    %v3052 = vunpack.c.h.b16 %v761
    %v3053 = vunpack.c.l.b16 %v762
    %v3054 = vunpack.c.h.b16 %v762
    %v3055 = vunpack.c.l.b16 %v763
    %v3056 = vunpack.c.h.b16 %v763
    %v3057 = vunpack.c.l.b16 %v764
    %v3058 = vunpack.c.h.b16 %v764
    %v3059 = vunpack.c.l.b16 %v765
    %v3060 = vunpack.c.h.b16 %v765
    %v3061 = vunpack.c.l.b16 %v766
    %v3062 = vunpack.c.h.b16 %v766
    %v3063 = vunpack.c.l.b16 %v767
    %v3064 = vunpack.c.h.b16 %v767
    %v3065 = vunpack.c.l.b16 %v768
    %v3066 = vunpack.c.h.b16 %v768
    %v3067 = vunpack.c.l.b16 %v769
    %v3068 = vunpack.c.h.b16 %v769
    %v3069 = vunpack.c.l.b16 %v770
    %v3070 = vunpack.c.h.b16 %v770
    %v3071 = vunpack.c.l.b16 %v771
    %v3072 = vunpack.c.h.b16 %v771
    %v3073 = vunpack.c.l.b16 %v772
    %v3074 = vunpack.c.h.b16 %v772
    %v3075 = vunpack.c.l.b16 %v773
    %v3076 = vunpack.c.h.b16 %v773
    %v3077 = vunpack.c.l.b16 %v774
    %v3078 = vunpack.c.h.b16 %v774
    %v3079 = vunpack.c.l.b16 %v775
    %v3080 = vunpack.c.h.b16 %v775
    %v3081 = vunpack.c.l.b16 %v776
    %v3082 = vunpack.c.h.b16 %v776
    %v3083 = vunpack.c.l.b16 %v777
    %v3084 = vunpack.c.h.b16 %v777
    %v3085 = vunpack.c.l.b16 %v778
    %v3086 = vunpack.c.h.b16 %v778
    %v3087 = vunpack.c.l.b16 %v779
    %v3088 = vunpack.c.h.b16 %v779
    %v3089 = vunpack.c.l.b16 %v780
    %v3090 = vunpack.c.h.b16 %v780
    %v3091 = vunpack.c.l.b16 %v781
    %v3092 = vunpack.c.h.b16 %v781
    %v3093 = vunpack.c.l.b16 %v782
    %v3094 = vunpack.c.h.b16 %v782
    %v3095 = vunpack.c.l.b16 %v783
    %v3096 = vunpack.c.h.b16 %v783
    %v3097 = vunpack.c.l.b16 %v784
    %v3098 = vunpack.c.h.b16 %v784
    %v3099 = vunpack.c.l.b16 %v785
    %v3100 = vunpack.c.h.b16 %v785
    %v3101 = vunpack.c.l.b16 %v786
    %v3102 = vunpack.c.h.b16 %v786
    %v3103 = vunpack.c.l.b16 %v787
    %v3104 = vunpack.c.h.b16 %v787
    %v3105 = vunpack.c.l.b16 %v788
    %v3106 = vunpack.c.h.b16 %v788
    %v3107 = vunpack.c.l.b16 %v789
    %v3108 = vunpack.c.h.b16 %v789
    %v3109 = vunpack.c.l.b16 %v790
    %v3110 = vunpack.c.h.b16 %v790
    %v3111 = vunpack.c.l.b16 %v791
    %v3112 = vunpack.c.h.b16 %v791
    %v3113 = vunpack.c.l.b16 %v792
    %v3114 = vunpack.c.h.b16 %v792
    %v3115 = vunpack.c.l.b16 %v793
    %v3116 = vunpack.c.h.b16 %v793
    %v3117 = vunpack.c.l.b16 %v794
    %v3118 = vunpack.c.h.b16 %v794
    %v3119 = vunpack.c.l.b16 %v795
    %v3120 = vunpack.c.h.b16 %v795
    %v3121 = vunpack.c.l.b16 %v796
    %v3122 = vunpack.c.h.b16 %v796
    %v3123 = vunpack.c.l.b16 %v797
    %v3124 = vunpack.c.h.b16 %v797
    %v3125 = vunpack.c.l.b16 %v798
    %v3126 = vunpack.c.h.b16 %v798
    %v3127 = vunpack.c.l.b16 %v799
    %v3128 = vunpack.c.h.b16 %v799
    %v3129 = vunpack.c.l.b16 %v800
    %v3130 = vunpack.c.h.b16 %v800
    %v3131 = vunpack.c.l.b16 %v801
    %v3132 = vunpack.c.h.b16 %v801
    %v3133 = vunpack.c.l.b16 %v802
    %v3134 = vunpack.c.h.b16 %v802
    %v3135 = vunpack.c.l.b16 %v803
    %v3136 = vunpack.c.h.b16 %v803
    %v3137 = vunpack.c.l.b16 %v804
    %v3138 = vunpack.c.h.b16 %v804
    %v3139 = vunpack.c.l.b16 %v805
    %v3140 = vunpack.c.h.b16 %v805
    %v3141 = vunpack.c.l.b16 %v806
    %v3142 = vunpack.c.h.b16 %v806
    %v3143 = vunpack.c.l.b16 %v807
    %v3144 = vunpack.c.h.b16 %v807
    %v3145 = vunpack.c.l.b16 %v808
    %v3146 = vunpack.c.h.b16 %v808
    %v3147 = vunpack.c.l.b16 %v809
    %v3148 = vunpack.c.h.b16 %v809
    %v3149 = vunpack.c.l.b16 %v810
    %v3150 = vunpack.c.h.b16 %v810
    %v3151 = vunpack.c.l.b16 %v811
    %v3152 = vunpack.c.h.b16 %v811
    %v3153 = vunpack.c.l.b16 %v812
    %v3154 = vunpack.c.h.b16 %v812
    %v3155 = vunpack.c.l.b16 %v813
    %v3156 = vunpack.c.h.b16 %v813
    %v3157 = vunpack.c.l.b16 %v814
    %v3158 = vunpack.c.h.b16 %v814
    %v3159 = vunpack.c.l.b16 %v815
    %v3160 = vunpack.c.h.b16 %v815
    %v3161 = vunpack.c.l.b16 %v816
    %v3162 = vunpack.c.h.b16 %v816
    %v3163 = vunpack.c.l.b16 %v817
    %v3164 = vunpack.c.h.b16 %v817
    %v3165 = vunpack.c.l.b16 %v818
    %v3166 = vunpack.c.h.b16 %v818
    %v3167 = vunpack.c.l.b16 %v819
    %v3168 = vunpack.c.h.b16 %v819
    %v3169 = vunpack.c.l.b16 %v820
    %v3170 = vunpack.c.h.b16 %v820
    %v3171 = vunpack.c.l.b16 %v821
    %v3172 = vunpack.c.h.b16 %v821
    %v3173 = vunpack.c.l.b16 %v822
    %v3174 = vunpack.c.h.b16 %v822
    %v3175 = vunpack.c.l.b16 %v823
    %v3176 = vunpack.c.h.b16 %v823
    %v3177 = vunpack.c.l.b16 %v824
    %v3178 = vunpack.c.h.b16 %v824
    %v3179 = vunpack.c.l.b16 %v825
    %v3180 = vunpack.c.h.b16 %v825
    %v3181 = vunpack.c.l.b16 %v826
    %v3182 = vunpack.c.h.b16 %v826
    %v3183 = vunpack.c.l.b16 %v827
    %v3184 = vunpack.c.h.b16 %v827
    %v3185 = vunpack.c.l.b16 %v828
    %v3186 = vunpack.c.h.b16 %v828
    %v3187 = vunpack.c.l.b16 %v829
    %v3188 = vunpack.c.h.b16 %v829
    %v3189 = vunpack.c.l.b16 %v830
    %v3190 = vunpack.c.h.b16 %v830
    %v3191 = vunpack.c.l.b16 %v831
    %v3192 = vunpack.c.h.b16 %v831
    %v3193 = vunpack.c.l.b16 %v832
    %v3194 = vunpack.c.h.b16 %v832
    %v3195 = vunpack.c.l.b16 %v833
    %v3196 = vunpack.c.h.b16 %v833
    %v3197 = vunpack.c.l.b16 %v834
    %v3198 = vunpack.c.h.b16 %v834
    %v3199 = vunpack.c.l.b16 %v835
    %v3200 = vunpack.c.h.b16 %v835
    %v3201 = vunpack.c.l.b16 %v836
    %v3202 = vunpack.c.h.b16 %v836
    %v3203 = vunpack.c.l.b16 %v837
    %v3204 = vunpack.c.h.b16 %v837
    %v3205 = vunpack.c.l.b16 %v838
    %v3206 = vunpack.c.h.b16 %v838
    %v3207 = vunpack.c.l.b16 %v839
    %v3208 = vunpack.c.h.b16 %v839
    %v3209 = vunpack.c.l.b16 %v840
    %v3210 = vunpack.c.h.b16 %v840
    %v3211 = vunpack.c.l.b16 %v841
    %v3212 = vunpack.c.h.b16 %v841
    %v3213 = vunpack.c.l.b16 %v842
    %v3214 = vunpack.c.h.b16 %v842
    %v3215 = vunpack.c.l.b16 %v843
    %v3216 = vunpack.c.h.b16 %v843
    %v3217 = vunpack.c.l.b16 %v844
    %v3218 = vunpack.c.h.b16 %v844
    %v3219 = vunpack.c.l.b16 %v845
    %v3220 = vunpack.c.h.b16 %v845
    %v3221 = vunpack.c.l.b16 %v846
    %v3222 = vunpack.c.h.b16 %v846
    %v3223 = vunpack.c.l.b16 %v847
    %v3224 = vunpack.c.h.b16 %v847
    %v3225 = vunpack.c.l.b16 %v848
    %v3226 = vunpack.c.h.b16 %v848
    %v3227 = vunpack.c.l.b16 %v849
    %v3228 = vunpack.c.h.b16 %v849
    %v3229 = vunpack.c.l.b16 %v850
    %v3230 = vunpack.c.h.b16 %v850
    %v3231 = vunpack.c.l.b16 %v851
    %v3232 = vunpack.c.h.b16 %v851
    %v3233 = vunpack.c.l.b16 %v852
    %v3234 = vunpack.c.h.b16 %v852
    %v3235 = vunpack.c.l.b16 %v853
    %v3236 = vunpack.c.h.b16 %v853
    %v3237 = vunpack.c.l.b16 %v854
    %v3238 = vunpack.c.h.b16 %v854
    %v3239 = vunpack.c.l.b16 %v855
    %v3240 = vunpack.c.h.b16 %v855
    %v3241 = vunpack.c.l.b16 %v856
    %v3242 = vunpack.c.h.b16 %v856
    %v3243 = vunpack.c.l.b16 %v857
    %v3244 = vunpack.c.h.b16 %v857
    %v3245 = vunpack.c.l.b16 %v858
    %v3246 = vunpack.c.h.b16 %v858
    %v3247 = vunpack.c.l.b16 %v859
    %v3248 = vunpack.c.h.b16 %v859
    %v3249 = vunpack.c.l.b16 %v860
    %v3250 = vunpack.c.h.b16 %v860
    %v3251 = vunpack.c.l.b16 %v861
    %v3252 = vunpack.c.h.b16 %v861
    %v3253 = vunpack.c.l.b16 %v862
    %v3254 = vunpack.c.h.b16 %v862
    %v3255 = vunpack.c.l.b16 %v863
    %v3256 = vunpack.c.h.b16 %v863
    %v3257 = vunpack.c.l.b16 %v864
    %v3258 = vunpack.c.h.b16 %v864
    %v3259 = vunpack.c.l.b16 %v865
    %v3260 = vunpack.c.h.b16 %v865
    %v3261 = vunpack.c.l.b16 %v866
    %v3262 = vunpack.c.h.b16 %v866
    %v3263 = vunpack.c.l.b16 %v867
    %v3264 = vunpack.c.h.b16 %v867
    %v3265 = vunpack.c.l.b16 %v868
    %v3266 = vunpack.c.h.b16 %v868
    %v3267 = vunpack.c.l.b16 %v869
    %v3268 = vunpack.c.h.b16 %v869
    %v3269 = vunpack.c.l.b16 %v870
    %v3270 = vunpack.c.h.b16 %v870
    %v3271 = vunpack.c.l.b16 %v871
    %v3272 = vunpack.c.h.b16 %v871
    %v3273 = vunpack.c.l.b16 %v872
    %v3274 = vunpack.c.h.b16 %v872
    %v3275 = vunpack.c.l.b16 %v873
    %v3276 = vunpack.c.h.b16 %v873
    %v3277 = vunpack.c.l.b16 %v874
    %v3278 = vunpack.c.h.b16 %v874
    %v3279 = vunpack.c.l.b16 %v875
    %v3280 = vunpack.c.h.b16 %v875
    %v3281 = vunpack.c.l.b16 %v876
    %v3282 = vunpack.c.h.b16 %v876
    %v3283 = vunpack.c.l.b16 %v877
    %v3284 = vunpack.c.h.b16 %v877
    %v3285 = vunpack.c.l.b16 %v878
    %v3286 = vunpack.c.h.b16 %v878
    %v3287 = vunpack.c.l.b16 %v879
    %v3288 = vunpack.c.h.b16 %v879
    %v3289 = vunpack.c.l.b16 %v880
    %v3290 = vunpack.c.h.b16 %v880
    %v3291 = vpack.c.b16 %v1759, %v1755
    %v3292 = vpack.c.b16 %v1760, %v1756
    %v3293 = vpack.c.b16 %v1761, %v1757
    %v3294 = vpack.c.b16 %v1762, %v1758
    %v3295 = vpack.c.b16 %v1767, %v1763
    %v3296 = vpack.c.b16 %v1768, %v1764
    %v3297 = vpack.c.b16 %v1769, %v1765
    %v3298 = vpack.c.b16 %v1770, %v1766
    %v3299 = vpack.c.b16 %v1775, %v1771
    %v3300 = vpack.c.b16 %v1776, %v1772
    %v3301 = vpack.c.b16 %v1777, %v1773
    %v3302 = vpack.c.b16 %v1778, %v1774
    %v3303 = vpack.c.b16 %v1783, %v1779
    %v3304 = vpack.c.b16 %v1784, %v1780
    %v3305 = vpack.c.b16 %v1785, %v1781
    %v3306 = vpack.c.b16 %v1786, %v1782
    %v3307 = vpack.c.b16 %v1791, %v1787
    %v3308 = vpack.c.b16 %v1792, %v1788
    %v3309 = vpack.c.b16 %v1793, %v1789
    %v3310 = vpack.c.b16 %v1794, %v1790
    %v3311 = vpack.c.b16 %v1799, %v1795
    %v3312 = vpack.c.b16 %v1800, %v1796
    %v3313 = vpack.c.b16 %v1801, %v1797
    %v3314 = vpack.c.b16 %v1802, %v1798
    %v3315 = vpack.c.b16 %v1807, %v1803
    %v3316 = vpack.c.b16 %v1808, %v1804
    %v3317 = vpack.c.b16 %v1809, %v1805
    %v3318 = vpack.c.b16 %v1810, %v1806
    %v3319 = vpack.c.b16 %v1815, %v1811
    %v3320 = vpack.c.b16 %v1816, %v1812
    %v3321 = vpack.c.b16 %v1817, %v1813
    %v3322 = vpack.c.b16 %v1818, %v1814
    %v3323 = vpack.c.b16 %v1823, %v1819
    %v3324 = vpack.c.b16 %v1824, %v1820
    %v3325 = vpack.c.b16 %v1825, %v1821
    %v3326 = vpack.c.b16 %v1826, %v1822
    %v3327 = vpack.c.b16 %v1831, %v1827
    %v3328 = vpack.c.b16 %v1832, %v1828
    %v3329 = vpack.c.b16 %v1833, %v1829
    %v3330 = vpack.c.b16 %v1834, %v1830
    %v3331 = vpack.c.b16 %v1839, %v1835
    %v3332 = vpack.c.b16 %v1840, %v1836
    %v3333 = vpack.c.b16 %v1841, %v1837
    %v3334 = vpack.c.b16 %v1842, %v1838
    %v3335 = vpack.c.b16 %v1847, %v1843
    %v3336 = vpack.c.b16 %v1848, %v1844
    %v3337 = vpack.c.b16 %v1849, %v1845
    %v3338 = vpack.c.b16 %v1850, %v1846
    %v3339 = vpack.c.b16 %v1855, %v1851
    %v3340 = vpack.c.b16 %v1856, %v1852
    %v3341 = vpack.c.b16 %v1857, %v1853
    %v3342 = vpack.c.b16 %v1858, %v1854
    %v3343 = vpack.c.b16 %v1863, %v1859
    %v3344 = vpack.c.b16 %v1864, %v1860
    %v3345 = vpack.c.b16 %v1865, %v1861
    %v3346 = vpack.c.b16 %v1866, %v1862
    %v3347 = vpack.c.b16 %v1871, %v1867
    %v3348 = vpack.c.b16 %v1872, %v1868
    %v3349 = vpack.c.b16 %v1873, %v1869
    %v3350 = vpack.c.b16 %v1874, %v1870
    %v3351 = vpack.c.b16 %v1879, %v1875
    %v3352 = vpack.c.b16 %v1880, %v1876
    %v3353 = vpack.c.b16 %v1881, %v1877
    %v3354 = vpack.c.b16 %v1882, %v1878
    %v3355 = vpack.c.b16 %v1887, %v1883
    %v3356 = vpack.c.b16 %v1888, %v1884
    %v3357 = vpack.c.b16 %v1889, %v1885
    %v3358 = vpack.c.b16 %v1890, %v1886
    %v3359 = vpack.c.b16 %v1895, %v1891
    %v3360 = vpack.c.b16 %v1896, %v1892
    %v3361 = vpack.c.b16 %v1897, %v1893
    %v3362 = vpack.c.b16 %v1898, %v1894
    %v3363 = vpack.c.b16 %v1903, %v1899
    %v3364 = vpack.c.b16 %v1904, %v1900
    %v3365 = vpack.c.b16 %v1905, %v1901
    %v3366 = vpack.c.b16 %v1906, %v1902
    %v3367 = vpack.c.b16 %v1911, %v1907
    %v3368 = vpack.c.b16 %v1912, %v1908
    %v3369 = vpack.c.b16 %v1913, %v1909
    %v3370 = vpack.c.b16 %v1914, %v1910
    %v3371 = vpack.c.b16 %v1919, %v1915
    %v3372 = vpack.c.b16 %v1920, %v1916
    %v3373 = vpack.c.b16 %v1921, %v1917
    %v3374 = vpack.c.b16 %v1922, %v1918
    %v3375 = vpack.c.b16 %v1927, %v1923
    %v3376 = vpack.c.b16 %v1928, %v1924
    %v3377 = vpack.c.b16 %v1929, %v1925
    %v3378 = vpack.c.b16 %v1930, %v1926
    %v3379 = vpack.c.b16 %v1935, %v1931
    %v3380 = vpack.c.b16 %v1936, %v1932
    %v3381 = vpack.c.b16 %v1937, %v1933
    %v3382 = vpack.c.b16 %v1938, %v1934
    %v3383 = vpack.c.b16 %v1943, %v1939
    %v3384 = vpack.c.b16 %v1944, %v1940
    %v3385 = vpack.c.b16 %v1945, %v1941
    %v3386 = vpack.c.b16 %v1946, %v1942
    %v3387 = vpack.c.b16 %v1951, %v1947
    %v3388 = vpack.c.b16 %v1952, %v1948
    %v3389 = vpack.c.b16 %v1953, %v1949
    %v3390 = vpack.c.b16 %v1954, %v1950
    %v3391 = vpack.c.b16 %v1959, %v1955
    %v3392 = vpack.c.b16 %v1960, %v1956
    %v3393 = vpack.c.b16 %v1961, %v1957
    %v3394 = vpack.c.b16 %v1962, %v1958
    %v3395 = vpack.c.b16 %v1967, %v1963
    %v3396 = vpack.c.b16 %v1968, %v1964
    %v3397 = vpack.c.b16 %v1969, %v1965
    %v3398 = vpack.c.b16 %v1970, %v1966
    %v3399 = vpack.c.b16 %v1975, %v1971
    %v3400 = vpack.c.b16 %v1976, %v1972
    %v3401 = vpack.c.b16 %v1977, %v1973
    %v3402 = vpack.c.b16 %v1978, %v1974
    %v3403 = vpack.c.b16 %v1983, %v1979
    %v3404 = vpack.c.b16 %v1984, %v1980
    %v3405 = vpack.c.b16 %v1985, %v1981
    %v3406 = vpack.c.b16 %v1986, %v1982
    %v3407 = vpack.c.b16 %v1991, %v1987
    %v3408 = vpack.c.b16 %v1992, %v1988
    %v3409 = vpack.c.b16 %v1993, %v1989
    %v3410 = vpack.c.b16 %v1994, %v1990
    %v3411 = vpack.c.b16 %v1999, %v1995
    %v3412 = vpack.c.b16 %v2000, %v1996
    %v3413 = vpack.c.b16 %v2001, %v1997
    %v3414 = vpack.c.b16 %v2002, %v1998
    %v3415 = vpack.c.b16 %v2007, %v2003
    %v3416 = vpack.c.b16 %v2008, %v2004
    %v3417 = vpack.c.b16 %v2009, %v2005
    %v3418 = vpack.c.b16 %v2010, %v2006
    %v3419 = vpack.c.b16 %v2015, %v2011
    %v3420 = vpack.c.b16 %v2016, %v2012
    %v3421 = vpack.c.b16 %v2017, %v2013
    %v3422 = vpack.c.b16 %v2018, %v2014
    %v3423 = vpack.c.b16 %v2023, %v2019
    %v3424 = vpack.c.b16 %v2024, %v2020
    %v3425 = vpack.c.b16 %v2025, %v2021
    %v3426 = vpack.c.b16 %v2026, %v2022
    %v3427 = vpack.c.b16 %v2031, %v2027
    %v3428 = vpack.c.b16 %v2032, %v2028
    %v3429 = vpack.c.b16 %v2033, %v2029
    %v3430 = vpack.c.b16 %v2034, %v2030
    %v3431 = vpack.c.b16 %v2039, %v2035
    %v3432 = vpack.c.b16 %v2040, %v2036
    %v3433 = vpack.c.b16 %v2041, %v2037
    %v3434 = vpack.c.b16 %v2042, %v2038
    %v3435 = vpack.c.b16 %v2047, %v2043
    %v3436 = vpack.c.b16 %v2048, %v2044
    %v3437 = vpack.c.b16 %v2049, %v2045
    %v3438 = vpack.c.b16 %v2050, %v2046
    %v3439 = vpack.c.b16 %v2055, %v2051
    %v3440 = vpack.c.b16 %v2056, %v2052
    %v3441 = vpack.c.b16 %v2057, %v2053
    %v3442 = vpack.c.b16 %v2058, %v2054
    %v3443 = vpack.c.b16 %v2063, %v2059
    %v3444 = vpack.c.b16 %v2064, %v2060
    %v3445 = vpack.c.b16 %v2065, %v2061
    %v3446 = vpack.c.b16 %v2066, %v2062
    %v3447 = vpack.c.b16 %v2071, %v2067
    %v3448 = vpack.c.b16 %v2072, %v2068
    %v3449 = vpack.c.b16 %v2073, %v2069
    %v3450 = vpack.c.b16 %v2074, %v2070
    %v3451 = vpack.c.b16 %v2079, %v2075
    %v3452 = vpack.c.b16 %v2080, %v2076
    %v3453 = vpack.c.b16 %v2081, %v2077
    %v3454 = vpack.c.b16 %v2082, %v2078
    %v3455 = vpack.c.b16 %v2087, %v2083
    %v3456 = vpack.c.b16 %v2088, %v2084
    %v3457 = vpack.c.b16 %v2089, %v2085
    %v3458 = vpack.c.b16 %v2090, %v2086
    %v3459 = vpack.c.b16 %v2095, %v2091
    %v3460 = vpack.c.b16 %v2096, %v2092
    %v3461 = vpack.c.b16 %v2097, %v2093
    %v3462 = vpack.c.b16 %v2098, %v2094
    %v3463 = vpack.c.b16 %v2103, %v2099
    %v3464 = vpack.c.b16 %v2104, %v2100
    %v3465 = vpack.c.b16 %v2105, %v2101
    %v3466 = vpack.c.b16 %v2106, %v2102
    %v3467 = vpack.c.b16 %v2111, %v2107
    %v3468 = vpack.c.b16 %v2112, %v2108
    %v3469 = vpack.c.b16 %v2113, %v2109
    %v3470 = vpack.c.b16 %v2114, %v2110
    %v3471 = vpack.c.b16 %v2119, %v2115
    %v3472 = vpack.c.b16 %v2120, %v2116
    %v3473 = vpack.c.b16 %v2121, %v2117
    %v3474 = vpack.c.b16 %v2122, %v2118
    %v3475 = vpack.c.b16 %v2127, %v2123
    %v3476 = vpack.c.b16 %v2128, %v2124
    %v3477 = vpack.c.b16 %v2129, %v2125
    %v3478 = vpack.c.b16 %v2130, %v2126
    %v3479 = vpack.c.b16 %v2135, %v2131
    %v3480 = vpack.c.b16 %v2136, %v2132
    %v3481 = vpack.c.b16 %v2137, %v2133
    %v3482 = vpack.c.b16 %v2138, %v2134
    %v3483 = vpack.c.b16 %v2143, %v2139
    %v3484 = vpack.c.b16 %v2144, %v2140
    %v3485 = vpack.c.b16 %v2145, %v2141
    %v3486 = vpack.c.b16 %v2146, %v2142
    %v3487 = vpack.c.b16 %v2151, %v2147
    %v3488 = vpack.c.b16 %v2152, %v2148
    %v3489 = vpack.c.b16 %v2153, %v2149
    %v3490 = vpack.c.b16 %v2154, %v2150
    %v3491 = vpack.c.b16 %v2159, %v2155
    %v3492 = vpack.c.b16 %v2160, %v2156
    %v3493 = vpack.c.b16 %v2161, %v2157
    %v3494 = vpack.c.b16 %v2162, %v2158
    %v3495 = vpack.c.b16 %v2167, %v2163
    %v3496 = vpack.c.b16 %v2168, %v2164
    %v3497 = vpack.c.b16 %v2169, %v2165
    %v3498 = vpack.c.b16 %v2170, %v2166
    %v3499 = vpack.c.b16 %v2175, %v2171
    %v3500 = vpack.c.b16 %v2176, %v2172
    %v3501 = vpack.c.b16 %v2177, %v2173
    %v3502 = vpack.c.b16 %v2178, %v2174
    %v3503 = vpack.c.b16 %v2183, %v2179
    %v3504 = vpack.c.b16 %v2184, %v2180
    %v3505 = vpack.c.b16 %v2185, %v2181
    %v3506 = vpack.c.b16 %v2186, %v2182
    %v3507 = vpack.c.b16 %v2191, %v2187
    %v3508 = vpack.c.b16 %v2192, %v2188
    %v3509 = vpack.c.b16 %v2193, %v2189
    %v3510 = vpack.c.b16 %v2194, %v2190
    %v3511 = vpack.c.b16 %v2199, %v2195
    %v3512 = vpack.c.b16 %v2200, %v2196
    %v3513 = vpack.c.b16 %v2201, %v2197
    %v3514 = vpack.c.b16 %v2202, %v2198
    %v3515 = vpack.c.b16 %v2207, %v2203
    %v3516 = vpack.c.b16 %v2208, %v2204
    %v3517 = vpack.c.b16 %v2209, %v2205
    %v3518 = vpack.c.b16 %v2210, %v2206
    %v3519 = vpack.c.b16 %v2215, %v2211
    %v3520 = vpack.c.b16 %v2216, %v2212
    %v3521 = vpack.c.b16 %v2217, %v2213
    %v3522 = vpack.c.b16 %v2218, %v2214
    %v3523 = vpack.c.b16 %v2223, %v2219
    %v3524 = vpack.c.b16 %v2224, %v2220
    %v3525 = vpack.c.b16 %v2225, %v2221
    %v3526 = vpack.c.b16 %v2226, %v2222
    %v3527 = vpack.c.b16 %v2231, %v2227
    %v3528 = vpack.c.b16 %v2232, %v2228
    %v3529 = vpack.c.b16 %v2233, %v2229
    %v3530 = vpack.c.b16 %v2234, %v2230
    %v3531 = vpack.c.b16 %v2239, %v2235
    %v3532 = vpack.c.b16 %v2240, %v2236
    %v3533 = vpack.c.b16 %v2241, %v2237
    %v3534 = vpack.c.b16 %v2242, %v2238
    %v3535 = vpack.c.b16 %v2247, %v2243
    %v3536 = vpack.c.b16 %v2248, %v2244
    %v3537 = vpack.c.b16 %v2249, %v2245
    %v3538 = vpack.c.b16 %v2250, %v2246
    %v3539 = vpack.c.b16 %v2255, %v2251
    %v3540 = vpack.c.b16 %v2256, %v2252
    %v3541 = vpack.c.b16 %v2257, %v2253
    %v3542 = vpack.c.b16 %v2258, %v2254
    %v3543 = vpack.c.b16 %v2263, %v2259
    %v3544 = vpack.c.b16 %v2264, %v2260
    %v3545 = vpack.c.b16 %v2265, %v2261
    %v3546 = vpack.c.b16 %v2266, %v2262
    %v3547 = vpack.c.b16 %v2271, %v2267
    %v3548 = vpack.c.b16 %v2272, %v2268
    %v3549 = vpack.c.b16 %v2273, %v2269
    %v3550 = vpack.c.b16 %v2274, %v2270
    %v3551 = vpack.c.b16 %v2279, %v2275
    %v3552 = vpack.c.b16 %v2280, %v2276
    %v3553 = vpack.c.b16 %v2281, %v2277
    %v3554 = vpack.c.b16 %v2282, %v2278
    %v3555 = vpack.c.b16 %v2287, %v2283
    %v3556 = vpack.c.b16 %v2288, %v2284
    %v3557 = vpack.c.b16 %v2289, %v2285
    %v3558 = vpack.c.b16 %v2290, %v2286
    %v3559 = vpack.c.b16 %v2295, %v2291
    %v3560 = vpack.c.b16 %v2296, %v2292
    %v3561 = vpack.c.b16 %v2297, %v2293
    %v3562 = vpack.c.b16 %v2298, %v2294
    %v3563 = vpack.c.b16 %v2303, %v2299
    %v3564 = vpack.c.b16 %v2304, %v2300
    %v3565 = vpack.c.b16 %v2305, %v2301
    %v3566 = vpack.c.b16 %v2306, %v2302
    %v3567 = vpack.c.b16 %v2311, %v2307
    %v3568 = vpack.c.b16 %v2312, %v2308
    %v3569 = vpack.c.b16 %v2313, %v2309
    %v3570 = vpack.c.b16 %v2314, %v2310
    %v3571 = vpack.c.b16 %v2319, %v2315
    %v3572 = vpack.c.b16 %v2320, %v2316
    %v3573 = vpack.c.b16 %v2321, %v2317
    %v3574 = vpack.c.b16 %v2322, %v2318
    %v3575 = vpack.c.b16 %v2327, %v2323
    %v3576 = vpack.c.b16 %v2328, %v2324
    %v3577 = vpack.c.b16 %v2329, %v2325
    %v3578 = vpack.c.b16 %v2330, %v2326
    %v3579 = vpack.c.b16 %v2335, %v2331
    %v3580 = vpack.c.b16 %v2336, %v2332
    %v3581 = vpack.c.b16 %v2337, %v2333
    %v3582 = vpack.c.b16 %v2338, %v2334
    %v3583 = vpack.c.b16 %v2343, %v2339
    %v3584 = vpack.c.b16 %v2344, %v2340
    %v3585 = vpack.c.b16 %v2345, %v2341
    %v3586 = vpack.c.b16 %v2346, %v2342
    %v3587 = vpack.c.b16 %v2351, %v2347
    %v3588 = vpack.c.b16 %v2352, %v2348
    %v3589 = vpack.c.b16 %v2353, %v2349
    %v3590 = vpack.c.b16 %v2354, %v2350
    %v3591 = vpack.c.b16 %v2359, %v2355
    %v3592 = vpack.c.b16 %v2360, %v2356
    %v3593 = vpack.c.b16 %v2361, %v2357
    %v3594 = vpack.c.b16 %v2362, %v2358
    %v3595 = vpack.c.b16 %v2367, %v2363
    %v3596 = vpack.c.b16 %v2368, %v2364
    %v3597 = vpack.c.b16 %v2369, %v2365
    %v3598 = vpack.c.b16 %v2370, %v2366
    %v3599 = vpack.c.b16 %v2375, %v2371
    %v3600 = vpack.c.b16 %v2376, %v2372
    %v3601 = vpack.c.b16 %v2377, %v2373
    %v3602 = vpack.c.b16 %v2378, %v2374
    %v3603 = vpack.c.b16 %v2383, %v2379
    %v3604 = vpack.c.b16 %v2384, %v2380
    %v3605 = vpack.c.b16 %v2385, %v2381
    %v3606 = vpack.c.b16 %v2386, %v2382
    %v3607 = vpack.c.b16 %v2391, %v2387
    %v3608 = vpack.c.b16 %v2392, %v2388
    %v3609 = vpack.c.b16 %v2393, %v2389
    %v3610 = vpack.c.b16 %v2394, %v2390
    %v3611 = vpack.c.b16 %v2399, %v2395
    %v3612 = vpack.c.b16 %v2400, %v2396
    %v3613 = vpack.c.b16 %v2401, %v2397
    %v3614 = vpack.c.b16 %v2402, %v2398
    %v3615 = vpack.c.b16 %v2407, %v2403
    %v3616 = vpack.c.b16 %v2408, %v2404
    %v3617 = vpack.c.b16 %v2409, %v2405
    %v3618 = vpack.c.b16 %v2410, %v2406
    %v3619 = vpack.c.b16 %v2415, %v2411
    %v3620 = vpack.c.b16 %v2416, %v2412
    %v3621 = vpack.c.b16 %v2417, %v2413
    %v3622 = vpack.c.b16 %v2418, %v2414
    %v3623 = vpack.c.b16 %v2423, %v2419
    %v3624 = vpack.c.b16 %v2424, %v2420
    %v3625 = vpack.c.b16 %v2425, %v2421
    %v3626 = vpack.c.b16 %v2426, %v2422
    %v3627 = vpack.c.b16 %v2431, %v2427
    %v3628 = vpack.c.b16 %v2432, %v2428
    %v3629 = vpack.c.b16 %v2433, %v2429
    %v3630 = vpack.c.b16 %v2434, %v2430
    %v3631 = vpack.c.b16 %v2439, %v2435
    %v3632 = vpack.c.b16 %v2440, %v2436
    %v3633 = vpack.c.b16 %v2441, %v2437
    %v3634 = vpack.c.b16 %v2442, %v2438
    %v3635 = vpack.c.b16 %v2447, %v2443
    %v3636 = vpack.c.b16 %v2448, %v2444
    %v3637 = vpack.c.b16 %v2449, %v2445
    %v3638 = vpack.c.b16 %v2450, %v2446
    %v3639 = vpack.c.b16 %v2455, %v2451
    %v3640 = vpack.c.b16 %v2456, %v2452
    %v3641 = vpack.c.b16 %v2457, %v2453
    %v3642 = vpack.c.b16 %v2458, %v2454
    %v3643 = vpack.c.b16 %v2463, %v2459
    %v3644 = vpack.c.b16 %v2464, %v2460
    %v3645 = vpack.c.b16 %v2465, %v2461
    %v3646 = vpack.c.b16 %v2466, %v2462
    %v3647 = vpack.c.b16 %v2471, %v2467
    %v3648 = vpack.c.b16 %v2472, %v2468
    %v3649 = vpack.c.b16 %v2473, %v2469
    %v3650 = vpack.c.b16 %v2474, %v2470
    %v3651 = vpack.c.b16 %v2479, %v2475
    %v3652 = vpack.c.b16 %v2480, %v2476
    %v3653 = vpack.c.b16 %v2481, %v2477
    %v3654 = vpack.c.b16 %v2482, %v2478
    %v3655 = vpack.c.b16 %v2487, %v2483
    %v3656 = vpack.c.b16 %v2488, %v2484
    %v3657 = vpack.c.b16 %v2489, %v2485
    %v3658 = vpack.c.b16 %v2490, %v2486
    %v3659 = vpack.c.b16 %v2495, %v2491
    %v3660 = vpack.c.b16 %v2496, %v2492
    %v3661 = vpack.c.b16 %v2497, %v2493
    %v3662 = vpack.c.b16 %v2498, %v2494
    %v3663 = vpack.c.b16 %v2503, %v2499
    %v3664 = vpack.c.b16 %v2504, %v2500
    %v3665 = vpack.c.b16 %v2505, %v2501
    %v3666 = vpack.c.b16 %v2506, %v2502
    %v3667 = vpack.c.b16 %v2511, %v2507
    %v3668 = vpack.c.b16 %v2512, %v2508
    %v3669 = vpack.c.b16 %v2513, %v2509
    %v3670 = vpack.c.b16 %v2514, %v2510
    %v3671 = vpack.c.b16 %v2519, %v2515
    %v3672 = vpack.c.b16 %v2520, %v2516
    %v3673 = vpack.c.b16 %v2521, %v2517
    %v3674 = vpack.c.b16 %v2522, %v2518
    %v3675 = vpack.c.b16 %v2527, %v2523
    %v3676 = vpack.c.b16 %v2528, %v2524
    %v3677 = vpack.c.b16 %v2529, %v2525
    %v3678 = vpack.c.b16 %v2530, %v2526
    %v3679 = vpack.c.b16 %v2535, %v2531
    %v3680 = vpack.c.b16 %v2536, %v2532
    %v3681 = vpack.c.b16 %v2537, %v2533
    %v3682 = vpack.c.b16 %v2538, %v2534
    %v3683 = vpack.c.b16 %v2543, %v2539
    %v3684 = vpack.c.b16 %v2544, %v2540
    %v3685 = vpack.c.b16 %v2545, %v2541
    %v3686 = vpack.c.b16 %v2546, %v2542
    %v3687 = vpack.c.b16 %v2551, %v2547
    %v3688 = vpack.c.b16 %v2552, %v2548
    %v3689 = vpack.c.b16 %v2553, %v2549
    %v3690 = vpack.c.b16 %v2554, %v2550
    %v3691 = vpack.c.b16 %v2559, %v2555
    %v3692 = vpack.c.b16 %v2560, %v2556
    %v3693 = vpack.c.b16 %v2561, %v2557
    %v3694 = vpack.c.b16 %v2562, %v2558
    %v3695 = vpack.c.b16 %v2567, %v2563
    %v3696 = vpack.c.b16 %v2568, %v2564
    %v3697 = vpack.c.b16 %v2569, %v2565
    %v3698 = vpack.c.b16 %v2570, %v2566
    %v3699 = vpack.c.b16 %v2575, %v2571
    %v3700 = vpack.c.b16 %v2576, %v2572
    %v3701 = vpack.c.b16 %v2577, %v2573
    %v3702 = vpack.c.b16 %v2578, %v2574
    %v3703 = vpack.c.b16 %v2583, %v2579
    %v3704 = vpack.c.b16 %v2584, %v2580
    %v3705 = vpack.c.b16 %v2585, %v2581
    %v3706 = vpack.c.b16 %v2586, %v2582
    %v3707 = vpack.c.b16 %v2591, %v2587
    %v3708 = vpack.c.b16 %v2592, %v2588
    %v3709 = vpack.c.b16 %v2593, %v2589
    %v3710 = vpack.c.b16 %v2594, %v2590
    %v3711 = vpack.c.b16 %v2599, %v2595
    %v3712 = vpack.c.b16 %v2600, %v2596
    %v3713 = vpack.c.b16 %v2601, %v2597
    %v3714 = vpack.c.b16 %v2602, %v2598
    %v3715 = vpack.c.b16 %v2607, %v2603
    %v3716 = vpack.c.b16 %v2608, %v2604
    %v3717 = vpack.c.b16 %v2609, %v2605
    %v3718 = vpack.c.b16 %v2610, %v2606
    %v3719 = vpack.c.b16 %v2615, %v2611
    %v3720 = vpack.c.b16 %v2616, %v2612
    %v3721 = vpack.c.b16 %v2617, %v2613
    %v3722 = vpack.c.b16 %v2618, %v2614
    %v3723 = vpack.c.b16 %v2623, %v2619
    %v3724 = vpack.c.b16 %v2624, %v2620
    %v3725 = vpack.c.b16 %v2625, %v2621
    %v3726 = vpack.c.b16 %v2626, %v2622
    %v3727 = vpack.c.b16 %v2631, %v2627
    %v3728 = vpack.c.b16 %v2632, %v2628
    %v3729 = vpack.c.b16 %v2633, %v2629
    %v3730 = vpack.c.b16 %v2634, %v2630
    %v3731 = vpack.c.b16 %v2639, %v2635
    %v3732 = vpack.c.b16 %v2640, %v2636
    %v3733 = vpack.c.b16 %v2641, %v2637
    %v3734 = vpack.c.b16 %v2642, %v2638
    %v3735 = vpack.c.b16 %v2647, %v2643
    %v3736 = vpack.c.b16 %v2648, %v2644
    %v3737 = vpack.c.b16 %v2649, %v2645
    %v3738 = vpack.c.b16 %v2650, %v2646
    %v3739 = vpack.c.b16 %v2655, %v2651
    %v3740 = vpack.c.b16 %v2656, %v2652
    %v3741 = vpack.c.b16 %v2657, %v2653
    %v3742 = vpack.c.b16 %v2658, %v2654
    %v3743 = vpack.c.b16 %v2663, %v2659
    %v3744 = vpack.c.b16 %v2664, %v2660
    %v3745 = vpack.c.b16 %v2665, %v2661
    %v3746 = vpack.c.b16 %v2666, %v2662
    %v3747 = vpack.c.b16 %v2671, %v2667
    %v3748 = vpack.c.b16 %v2672, %v2668
    %v3749 = vpack.c.b16 %v2673, %v2669
    %v3750 = vpack.c.b16 %v2674, %v2670
    %v3751 = vpack.c.b16 %v2679, %v2675
    %v3752 = vpack.c.b16 %v2680, %v2676
    %v3753 = vpack.c.b16 %v2681, %v2677
    %v3754 = vpack.c.b16 %v2682, %v2678
    %v3755 = vpack.c.b16 %v2687, %v2683
    %v3756 = vpack.c.b16 %v2688, %v2684
    %v3757 = vpack.c.b16 %v2689, %v2685
    %v3758 = vpack.c.b16 %v2690, %v2686
    %v3759 = vpack.c.b16 %v2695, %v2691
    %v3760 = vpack.c.b16 %v2696, %v2692
    %v3761 = vpack.c.b16 %v2697, %v2693
    %v3762 = vpack.c.b16 %v2698, %v2694
    %v3763 = vpack.c.b16 %v2703, %v2699
    %v3764 = vpack.c.b16 %v2704, %v2700
    %v3765 = vpack.c.b16 %v2705, %v2701
    %v3766 = vpack.c.b16 %v2706, %v2702
    %v3767 = vpack.c.b16 %v2711, %v2707
    %v3768 = vpack.c.b16 %v2712, %v2708
    %v3769 = vpack.c.b16 %v2713, %v2709
    %v3770 = vpack.c.b16 %v2714, %v2710
    %v3771 = vpack.c.b16 %v2719, %v2715
    %v3772 = vpack.c.b16 %v2720, %v2716
    %v3773 = vpack.c.b16 %v2721, %v2717
    %v3774 = vpack.c.b16 %v2722, %v2718
    %v3775 = vpack.c.b16 %v2727, %v2723
    %v3776 = vpack.c.b16 %v2728, %v2724
    %v3777 = vpack.c.b16 %v2729, %v2725
    %v3778 = vpack.c.b16 %v2730, %v2726
    %v3779 = vpack.c.b16 %v2735, %v2731
    %v3780 = vpack.c.b16 %v2736, %v2732
    %v3781 = vpack.c.b16 %v2737, %v2733
    %v3782 = vpack.c.b16 %v2738, %v2734
    %v3783 = vpack.c.b16 %v2743, %v2739
    %v3784 = vpack.c.b16 %v2744, %v2740
    %v3785 = vpack.c.b16 %v2745, %v2741
    %v3786 = vpack.c.b16 %v2746, %v2742
    %v3787 = vpack.c.b16 %v2751, %v2747
    %v3788 = vpack.c.b16 %v2752, %v2748
    %v3789 = vpack.c.b16 %v2753, %v2749
    %v3790 = vpack.c.b16 %v2754, %v2750
    %v3791 = vpack.c.b16 %v2759, %v2755
    %v3792 = vpack.c.b16 %v2760, %v2756
    %v3793 = vpack.c.b16 %v2761, %v2757
    %v3794 = vpack.c.b16 %v2762, %v2758
    %v3795 = vpack.c.b16 %v2767, %v2763
    %v3796 = vpack.c.b16 %v2768, %v2764
    %v3797 = vpack.c.b16 %v2769, %v2765
    %v3798 = vpack.c.b16 %v2770, %v2766
    %v3799 = vpack.c.b16 %v2775, %v2771
    %v3800 = vpack.c.b16 %v2776, %v2772
    %v3801 = vpack.c.b16 %v2777, %v2773
    %v3802 = vpack.c.b16 %v2778, %v2774
    %v3803 = vpack.c.b16 %v2783, %v2779
    %v3804 = vpack.c.b16 %v2784, %v2780
    %v3805 = vpack.c.b16 %v2785, %v2781
    %v3806 = vpack.c.b16 %v2786, %v2782
    %v3807 = vpack.c.b16 %v2791, %v2787
    %v3808 = vpack.c.b16 %v2792, %v2788
    %v3809 = vpack.c.b16 %v2793, %v2789
    %v3810 = vpack.c.b16 %v2794, %v2790
    %v3811 = vpack.c.b16 %v2799, %v2795
    %v3812 = vpack.c.b16 %v2800, %v2796
    %v3813 = vpack.c.b16 %v2801, %v2797
    %v3814 = vpack.c.b16 %v2802, %v2798
    %v3815 = vpack.c.b16 %v2807, %v2803
    %v3816 = vpack.c.b16 %v2808, %v2804
    %v3817 = vpack.c.b16 %v2809, %v2805
    %v3818 = vpack.c.b16 %v2810, %v2806
    %v3819 = vpack.c.b16 %v2815, %v2811
    %v3820 = vpack.c.b16 %v2816, %v2812
    %v3821 = vpack.c.b16 %v2817, %v2813
    %v3822 = vpack.c.b16 %v2818, %v2814
    %v3823 = vpack.c.b16 %v2823, %v2819
    %v3824 = vpack.c.b16 %v2824, %v2820
    %v3825 = vpack.c.b16 %v2825, %v2821
    %v3826 = vpack.c.b16 %v2826, %v2822
    %v3827 = vpack.c.b16 %v2831, %v2827
    %v3828 = vpack.c.b16 %v2832, %v2828
    %v3829 = vpack.c.b16 %v2833, %v2829
    %v3830 = vpack.c.b16 %v2834, %v2830
    %v3831 = vpack.c.b16 %v2839, %v2835
    %v3832 = vpack.c.b16 %v2840, %v2836
    %v3833 = vpack.c.b16 %v2841, %v2837
    %v3834 = vpack.c.b16 %v2842, %v2838
    %v3835 = vpack.c.b16 %v2847, %v2843
    %v3836 = vpack.c.b16 %v2848, %v2844
    %v3837 = vpack.c.b16 %v2849, %v2845
    %v3838 = vpack.c.b16 %v2850, %v2846
    %v3839 = vpack.c.b16 %v2855, %v2851
    %v3840 = vpack.c.b16 %v2856, %v2852
    %v3841 = vpack.c.b16 %v2857, %v2853
    %v3842 = vpack.c.b16 %v2858, %v2854
    %v3843 = vpack.c.b16 %v2863, %v2859
    %v3844 = vpack.c.b16 %v2864, %v2860
    %v3845 = vpack.c.b16 %v2865, %v2861
    %v3846 = vpack.c.b16 %v2866, %v2862
    %v3847 = vpack.c.b16 %v2871, %v2867
    %v3848 = vpack.c.b16 %v2872, %v2868
    %v3849 = vpack.c.b16 %v2873, %v2869
    %v3850 = vpack.c.b16 %v2874, %v2870
    %v3851 = vpack.c.b16 %v2879, %v2875
    %v3852 = vpack.c.b16 %v2880, %v2876
    %v3853 = vpack.c.b16 %v2881, %v2877
    %v3854 = vpack.c.b16 %v2882, %v2878
    %v3855 = vpack.c.b16 %v2887, %v2883
    %v3856 = vpack.c.b16 %v2888, %v2884
    %v3857 = vpack.c.b16 %v2889, %v2885
    %v3858 = vpack.c.b16 %v2890, %v2886
    %v3859 = vpack.c.b16 %v2895, %v2891
    %v3860 = vpack.c.b16 %v2896, %v2892
    %v3861 = vpack.c.b16 %v2897, %v2893
    %v3862 = vpack.c.b16 %v2898, %v2894
    %v3863 = vpack.c.b16 %v2903, %v2899
    %v3864 = vpack.c.b16 %v2904, %v2900
    %v3865 = vpack.c.b16 %v2905, %v2901
    %v3866 = vpack.c.b16 %v2906, %v2902
    %v3867 = vpack.c.b16 %v2911, %v2907
    %v3868 = vpack.c.b16 %v2912, %v2908
    %v3869 = vpack.c.b16 %v2913, %v2909
    %v3870 = vpack.c.b16 %v2914, %v2910
    %v3871 = vpack.c.b16 %v2919, %v2915
    %v3872 = vpack.c.b16 %v2920, %v2916
    %v3873 = vpack.c.b16 %v2921, %v2917
    %v3874 = vpack.c.b16 %v2922, %v2918
    %v3875 = vpack.c.b16 %v2927, %v2923
    %v3876 = vpack.c.b16 %v2928, %v2924
    %v3877 = vpack.c.b16 %v2929, %v2925
    %v3878 = vpack.c.b16 %v2930, %v2926
    %v3879 = vpack.c.b16 %v2935, %v2931
    %v3880 = vpack.c.b16 %v2936, %v2932
    %v3881 = vpack.c.b16 %v2937, %v2933
    %v3882 = vpack.c.b16 %v2938, %v2934
    %v3883 = vpack.c.b16 %v2943, %v2939
    %v3884 = vpack.c.b16 %v2944, %v2940
    %v3885 = vpack.c.b16 %v2945, %v2941
    %v3886 = vpack.c.b16 %v2946, %v2942
    %v3887 = vpack.c.b16 %v2951, %v2947
    %v3888 = vpack.c.b16 %v2952, %v2948
    %v3889 = vpack.c.b16 %v2953, %v2949
    %v3890 = vpack.c.b16 %v2954, %v2950
    %v3891 = vpack.c.b16 %v2959, %v2955
    %v3892 = vpack.c.b16 %v2960, %v2956
    %v3893 = vpack.c.b16 %v2961, %v2957
    %v3894 = vpack.c.b16 %v2962, %v2958
    %v3895 = vpack.c.b16 %v2967, %v2963
    %v3896 = vpack.c.b16 %v2968, %v2964
    %v3897 = vpack.c.b16 %v2969, %v2965
    %v3898 = vpack.c.b16 %v2970, %v2966
    %v3899 = vpack.c.b16 %v2975, %v2971
    %v3900 = vpack.c.b16 %v2976, %v2972
    %v3901 = vpack.c.b16 %v2977, %v2973
    %v3902 = vpack.c.b16 %v2978, %v2974
    %v3903 = vpack.c.b16 %v2983, %v2979
    %v3904 = vpack.c.b16 %v2984, %v2980
    %v3905 = vpack.c.b16 %v2985, %v2981
    %v3906 = vpack.c.b16 %v2986, %v2982
    %v3907 = vpack.c.b16 %v2991, %v2987
    %v3908 = vpack.c.b16 %v2992, %v2988
    %v3909 = vpack.c.b16 %v2993, %v2989
    %v3910 = vpack.c.b16 %v2994, %v2990
    %v3911 = vpack.c.b16 %v2999, %v2995
    %v3912 = vpack.c.b16 %v3000, %v2996
    %v3913 = vpack.c.b16 %v3001, %v2997
    %v3914 = vpack.c.b16 %v3002, %v2998
    %v3915 = vpack.c.b16 %v3007, %v3003
    %v3916 = vpack.c.b16 %v3008, %v3004
    %v3917 = vpack.c.b16 %v3009, %v3005
    %v3918 = vpack.c.b16 %v3010, %v3006
    %v3919 = vpack.c.b16 %v3015, %v3011
    %v3920 = vpack.c.b16 %v3016, %v3012
    %v3921 = vpack.c.b16 %v3017, %v3013
    %v3922 = vpack.c.b16 %v3018, %v3014
    %v3923 = vpack.c.b16 %v3023, %v3019
    %v3924 = vpack.c.b16 %v3024, %v3020
    %v3925 = vpack.c.b16 %v3025, %v3021
    %v3926 = vpack.c.b16 %v3026, %v3022
    %v3927 = vpack.c.b16 %v3031, %v3027
    %v3928 = vpack.c.b16 %v3032, %v3028
    %v3929 = vpack.c.b16 %v3033, %v3029
    %v3930 = vpack.c.b16 %v3034, %v3030
    %v3931 = vpack.c.b16 %v3039, %v3035
    %v3932 = vpack.c.b16 %v3040, %v3036
    %v3933 = vpack.c.b16 %v3041, %v3037
    %v3934 = vpack.c.b16 %v3042, %v3038
    %v3935 = vpack.c.b16 %v3047, %v3043
    %v3936 = vpack.c.b16 %v3048, %v3044
    %v3937 = vpack.c.b16 %v3049, %v3045
    %v3938 = vpack.c.b16 %v3050, %v3046
    %v3939 = vpack.c.b16 %v3055, %v3051
    %v3940 = vpack.c.b16 %v3056, %v3052
    %v3941 = vpack.c.b16 %v3057, %v3053
    %v3942 = vpack.c.b16 %v3058, %v3054
    %v3943 = vpack.c.b16 %v3063, %v3059
    %v3944 = vpack.c.b16 %v3064, %v3060
    %v3945 = vpack.c.b16 %v3065, %v3061
    %v3946 = vpack.c.b16 %v3066, %v3062
    %v3947 = vpack.c.b16 %v3071, %v3067
    %v3948 = vpack.c.b16 %v3072, %v3068
    %v3949 = vpack.c.b16 %v3073, %v3069
    %v3950 = vpack.c.b16 %v3074, %v3070
    %v3951 = vpack.c.b16 %v3079, %v3075
    %v3952 = vpack.c.b16 %v3080, %v3076
    %v3953 = vpack.c.b16 %v3081, %v3077
    %v3954 = vpack.c.b16 %v3082, %v3078
    %v3955 = vpack.c.b16 %v3087, %v3083
    %v3956 = vpack.c.b16 %v3088, %v3084
    %v3957 = vpack.c.b16 %v3089, %v3085
    %v3958 = vpack.c.b16 %v3090, %v3086
    %v3959 = vpack.c.b16 %v3095, %v3091
    %v3960 = vpack.c.b16 %v3096, %v3092
    %v3961 = vpack.c.b16 %v3097, %v3093
    %v3962 = vpack.c.b16 %v3098, %v3094
    %v3963 = vpack.c.b16 %v3103, %v3099
    %v3964 = vpack.c.b16 %v3104, %v3100
    %v3965 = vpack.c.b16 %v3105, %v3101
    %v3966 = vpack.c.b16 %v3106, %v3102
    %v3967 = vpack.c.b16 %v3111, %v3107
    %v3968 = vpack.c.b16 %v3112, %v3108
    %v3969 = vpack.c.b16 %v3113, %v3109
    %v3970 = vpack.c.b16 %v3114, %v3110
    %v3971 = vpack.c.b16 %v3119, %v3115
    %v3972 = vpack.c.b16 %v3120, %v3116
    %v3973 = vpack.c.b16 %v3121, %v3117
    %v3974 = vpack.c.b16 %v3122, %v3118
    %v3975 = vpack.c.b16 %v3127, %v3123
    %v3976 = vpack.c.b16 %v3128, %v3124
    %v3977 = vpack.c.b16 %v3129, %v3125
    %v3978 = vpack.c.b16 %v3130, %v3126
    %v3979 = vpack.c.b16 %v3135, %v3131
    %v3980 = vpack.c.b16 %v3136, %v3132
    %v3981 = vpack.c.b16 %v3137, %v3133
    %v3982 = vpack.c.b16 %v3138, %v3134
    %v3983 = vpack.c.b16 %v3143, %v3139
    %v3984 = vpack.c.b16 %v3144, %v3140
    %v3985 = vpack.c.b16 %v3145, %v3141
    %v3986 = vpack.c.b16 %v3146, %v3142
    %v3987 = vpack.c.b16 %v3151, %v3147
    %v3988 = vpack.c.b16 %v3152, %v3148
    %v3989 = vpack.c.b16 %v3153, %v3149
    %v3990 = vpack.c.b16 %v3154, %v3150
    %v3991 = vpack.c.b16 %v3159, %v3155
    %v3992 = vpack.c.b16 %v3160, %v3156
    %v3993 = vpack.c.b16 %v3161, %v3157
    %v3994 = vpack.c.b16 %v3162, %v3158
    %v3995 = vpack.c.b16 %v3167, %v3163
    %v3996 = vpack.c.b16 %v3168, %v3164
    %v3997 = vpack.c.b16 %v3169, %v3165
    %v3998 = vpack.c.b16 %v3170, %v3166
    %v3999 = vpack.c.b16 %v3175, %v3171
    %v4000 = vpack.c.b16 %v3176, %v3172
    %v4001 = vpack.c.b16 %v3177, %v3173
    %v4002 = vpack.c.b16 %v3178, %v3174
    %v4003 = vpack.c.b16 %v3183, %v3179
    %v4004 = vpack.c.b16 %v3184, %v3180
    %v4005 = vpack.c.b16 %v3185, %v3181
    %v4006 = vpack.c.b16 %v3186, %v3182
    %v4007 = vpack.c.b16 %v3191, %v3187
    %v4008 = vpack.c.b16 %v3192, %v3188
    %v4009 = vpack.c.b16 %v3193, %v3189
    %v4010 = vpack.c.b16 %v3194, %v3190
    %v4011 = vpack.c.b16 %v3199, %v3195
    %v4012 = vpack.c.b16 %v3200, %v3196
    %v4013 = vpack.c.b16 %v3201, %v3197
    %v4014 = vpack.c.b16 %v3202, %v3198
    %v4015 = vpack.c.b16 %v3207, %v3203
    %v4016 = vpack.c.b16 %v3208, %v3204
    %v4017 = vpack.c.b16 %v3209, %v3205
    %v4018 = vpack.c.b16 %v3210, %v3206
    %v4019 = vpack.c.b16 %v3215, %v3211
    %v4020 = vpack.c.b16 %v3216, %v3212
    %v4021 = vpack.c.b16 %v3217, %v3213
    %v4022 = vpack.c.b16 %v3218, %v3214
    %v4023 = vpack.c.b16 %v3223, %v3219
    %v4024 = vpack.c.b16 %v3224, %v3220
    %v4025 = vpack.c.b16 %v3225, %v3221
    %v4026 = vpack.c.b16 %v3226, %v3222
    %v4027 = vpack.c.b16 %v3231, %v3227
    %v4028 = vpack.c.b16 %v3232, %v3228
    %v4029 = vpack.c.b16 %v3233, %v3229
    %v4030 = vpack.c.b16 %v3234, %v3230
    %v4031 = vpack.c.b16 %v3239, %v3235
    %v4032 = vpack.c.b16 %v3240, %v3236
    %v4033 = vpack.c.b16 %v3241, %v3237
    %v4034 = vpack.c.b16 %v3242, %v3238
    %v4035 = vpack.c.b16 %v3247, %v3243
    %v4036 = vpack.c.b16 %v3248, %v3244
    %v4037 = vpack.c.b16 %v3249, %v3245
    %v4038 = vpack.c.b16 %v3250, %v3246
    %v4039 = vpack.c.b16 %v3255, %v3251
    %v4040 = vpack.c.b16 %v3256, %v3252
    %v4041 = vpack.c.b16 %v3257, %v3253
    %v4042 = vpack.c.b16 %v3258, %v3254
    %v4043 = vpack.c.b16 %v3263, %v3259
    %v4044 = vpack.c.b16 %v3264, %v3260
    %v4045 = vpack.c.b16 %v3265, %v3261
    %v4046 = vpack.c.b16 %v3266, %v3262
    %v4047 = vpack.c.b16 %v3271, %v3267
    %v4048 = vpack.c.b16 %v3272, %v3268
    %v4049 = vpack.c.b16 %v3273, %v3269
    %v4050 = vpack.c.b16 %v3274, %v3270
    %v4051 = vpack.c.b16 %v3279, %v3275
    %v4052 = vpack.c.b16 %v3280, %v3276
    %v4053 = vpack.c.b16 %v3281, %v3277
    %v4054 = vpack.c.b16 %v3282, %v3278
    %v4055 = vpack.c.b16 %v3287, %v3283
    %v4056 = vpack.c.b16 %v3288, %v3284
    %v4057 = vpack.c.b16 %v3289, %v3285
    %v4058 = vpack.c.b16 %v3290, %v3286
    %4827 = vmatprep.subr.bf16.mxu0 %v3320
    %4828 = vmatpush1.bf16.msra.mxu0 %v3319
    %4829 = vmatprep.subr.bf16.mxu0 %v3316
    %4830 = vmatpush1.bf16.msra.mxu0 %v3315
    %4831 = vmatprep.subr.bf16.mxu0 %v3312
    %4832 = vmatpush1.bf16.msra.mxu0 %v3311
    %4833 = vmatprep.subr.bf16.mxu0 %v3308
    %4834 = vmatpush1.bf16.msra.mxu0 %v3307
    %4835 = vmatprep.subr.bf16.mxu0 %v3304
    %4836 = vmatpush1.bf16.msra.mxu0 %v3303
    %4837 = vmatprep.subr.bf16.mxu0 %v3300
    %4838 = vmatpush1.bf16.msra.mxu0 %v3299
    %4839 = vmatprep.subr.bf16.mxu0 %v3296
    %4840 = vmatpush1.bf16.msra.mxu0 %v3295
    %4841 = vmatprep.subr.bf16.mxu0 %v3292
    %4842 = vmatpush1.bf16.msra.mxu0 %v3291
    %4843 = vmatprep.subr.bf16.mxu0 %v3352
    %4844 = vmatpush2.bf16.msra.mxu0 %v3351
    %4845 = vmatprep.subr.bf16.mxu0 %v3348
    %4846 = vmatpush2.bf16.msra.mxu0 %v3347
    %4847 = vmatprep.subr.bf16.mxu0 %v3344
    %4848 = vmatpush2.bf16.msra.mxu0 %v3343
    %4849 = vmatprep.subr.bf16.mxu0 %v3340
    %4850 = vmatpush2.bf16.msra.mxu0 %v3339
    %4851 = vmatprep.subr.bf16.mxu0 %v3336
    %4852 = vmatpush2.bf16.msra.mxu0 %v3335
    %4853 = vmatprep.subr.bf16.mxu0 %v3332
    %4854 = vmatpush2.bf16.msra.mxu0 %v3331
    %4855 = vmatprep.subr.bf16.mxu0 %v3328
    %4856 = vmatpush2.bf16.msra.mxu0 %v3327
    %4857 = vmatprep.subr.bf16.mxu0 %v3324
    %4858 = vmatpush2.bf16.msra.mxu0 %v3323
    %4859 = vmatprep.mubr.bf16.mxu0 %v940
    %4860 = vmatmul.mubr.bf16.gmra.mxu0 %v939
    %v4861 = vpop.f32.mrf.mxu0
    %v4862 = vadd.f32 %v886, %v4861
    %v4863 = vpop.f32.mrf.mxu0
    %v4864 = vadd.f32 %v890, %v4863
    %v4865 = vpop.f32.mrf.mxu0
    %v4866 = vpop.f32.mrf.mxu0
    %4867 = vdwg.mxu0
    %4868 = vmatprep.subr.bf16.mxu0 %v3384
    %4869 = vmatpush1.bf16.msra.mxu0 %v3383
    %4870 = vmatprep.subr.bf16.mxu0 %v3380
    %4871 = vmatpush1.bf16.msra.mxu0 %v3379
    %4872 = vmatprep.subr.bf16.mxu0 %v3376
    %4873 = vmatpush1.bf16.msra.mxu0 %v3375
    %4874 = vmatprep.subr.bf16.mxu0 %v3372
    %4875 = vmatpush1.bf16.msra.mxu0 %v3371
    %4876 = vmatprep.subr.bf16.mxu0 %v3368
    %4877 = vmatpush1.bf16.msra.mxu0 %v3367
    %4878 = vmatprep.subr.bf16.mxu0 %v3364
    %4879 = vmatpush1.bf16.msra.mxu0 %v3363
    %4880 = vmatprep.subr.bf16.mxu0 %v3360
    %4881 = vmatpush1.bf16.msra.mxu0 %v3359
    %4882 = vmatprep.subr.bf16.mxu0 %v3356
    %4883 = vmatpush1.bf16.msra.mxu0 %v3355
    %4884 = vmatprep.subr.bf16.mxu0 %v3416
    %4885 = vmatpush2.bf16.msra.mxu0 %v3415
    %4886 = vmatprep.subr.bf16.mxu0 %v3412
    %4887 = vmatpush2.bf16.msra.mxu0 %v3411
    %4888 = vmatprep.subr.bf16.mxu0 %v3408
    %4889 = vmatpush2.bf16.msra.mxu0 %v3407
    %4890 = vmatprep.subr.bf16.mxu0 %v3404
    %4891 = vmatpush2.bf16.msra.mxu0 %v3403
    %4892 = vmatprep.subr.bf16.mxu0 %v3400
    %4893 = vmatpush2.bf16.msra.mxu0 %v3399
    %4894 = vmatprep.subr.bf16.mxu0 %v3396
    %4895 = vmatpush2.bf16.msra.mxu0 %v3395
    %4896 = vmatprep.subr.bf16.mxu0 %v3392
    %4897 = vmatpush2.bf16.msra.mxu0 %v3391
    %4898 = vmatprep.subr.bf16.mxu0 %v3388
    %4899 = vmatpush2.bf16.msra.mxu0 %v3387
    %4900 = vmatprep.mubr.bf16.mxu0 %v942
    %4901 = vmatmul.mubr.bf16.gmra.mxu0 %v941
    %v4902 = vpop.f32.mrf.mxu0
    %v4903 = vadd.f32 %v4862, %v4902
    %v4904 = vpop.f32.mrf.mxu0
    %v4905 = vadd.f32 %v4864, %v4904
    %v4906 = vpop.f32.mrf.mxu0
    %v4907 = vpop.f32.mrf.mxu0
    %4908 = vdwg.mxu0
    %4909 = vmatprep.subr.bf16.mxu0 %v3448
    %4910 = vmatpush1.bf16.msra.mxu0 %v3447
    %4911 = vmatprep.subr.bf16.mxu0 %v3444
    %4912 = vmatpush1.bf16.msra.mxu0 %v3443
    %4913 = vmatprep.subr.bf16.mxu0 %v3440
    %4914 = vmatpush1.bf16.msra.mxu0 %v3439
    %4915 = vmatprep.subr.bf16.mxu0 %v3436
    %4916 = vmatpush1.bf16.msra.mxu0 %v3435
    %4917 = vmatprep.subr.bf16.mxu0 %v3432
    %4918 = vmatpush1.bf16.msra.mxu0 %v3431
    %4919 = vmatprep.subr.bf16.mxu0 %v3428
    %4920 = vmatpush1.bf16.msra.mxu0 %v3427
    %4921 = vmatprep.subr.bf16.mxu0 %v3424
    %4922 = vmatpush1.bf16.msra.mxu0 %v3423
    %4923 = vmatprep.subr.bf16.mxu0 %v3420
    %4924 = vmatpush1.bf16.msra.mxu0 %v3419
    %4925 = vmatprep.subr.bf16.mxu0 %v3480
    %4926 = vmatpush2.bf16.msra.mxu0 %v3479
    %4927 = vmatprep.subr.bf16.mxu0 %v3476
    %4928 = vmatpush2.bf16.msra.mxu0 %v3475
    %4929 = vmatprep.subr.bf16.mxu0 %v3472
    %4930 = vmatpush2.bf16.msra.mxu0 %v3471
    %4931 = vmatprep.subr.bf16.mxu0 %v3468
    %4932 = vmatpush2.bf16.msra.mxu0 %v3467
    %4933 = vmatprep.subr.bf16.mxu0 %v3464
    %4934 = vmatpush2.bf16.msra.mxu0 %v3463
    %4935 = vmatprep.subr.bf16.mxu0 %v3460
    %4936 = vmatpush2.bf16.msra.mxu0 %v3459
    %4937 = vmatprep.subr.bf16.mxu0 %v3456
    %4938 = vmatpush2.bf16.msra.mxu0 %v3455
    %4939 = vmatprep.subr.bf16.mxu0 %v3452
    %4940 = vmatpush2.bf16.msra.mxu0 %v3451
    %4941 = vmatprep.mubr.bf16.mxu0 %v944
    %4942 = vmatmul.mubr.bf16.gmra.mxu0 %v943
    %v4943 = vpop.f32.mrf.mxu0
    %v4944 = vadd.f32 %v4903, %v4943
    %v4945 = vpop.f32.mrf.mxu0
    %v4946 = vadd.f32 %v4905, %v4945
    %v4947 = vpop.f32.mrf.mxu0
    %v4948 = vpop.f32.mrf.mxu0
    %4949 = vdwg.mxu0
    %4950 = vmatprep.subr.bf16.mxu0 %v3512
    %4951 = vmatpush1.bf16.msra.mxu0 %v3511
    %4952 = vmatprep.subr.bf16.mxu0 %v3508
    %4953 = vmatpush1.bf16.msra.mxu0 %v3507
    %4954 = vmatprep.subr.bf16.mxu0 %v3504
    %4955 = vmatpush1.bf16.msra.mxu0 %v3503
    %4956 = vmatprep.subr.bf16.mxu0 %v3500
    %4957 = vmatpush1.bf16.msra.mxu0 %v3499
    %4958 = vmatprep.subr.bf16.mxu0 %v3496
    %4959 = vmatpush1.bf16.msra.mxu0 %v3495
    %4960 = vmatprep.subr.bf16.mxu0 %v3492
    %4961 = vmatpush1.bf16.msra.mxu0 %v3491
    %4962 = vmatprep.subr.bf16.mxu0 %v3488
    %4963 = vmatpush1.bf16.msra.mxu0 %v3487
    %4964 = vmatprep.subr.bf16.mxu0 %v3484
    %4965 = vmatpush1.bf16.msra.mxu0 %v3483
    %4966 = vmatprep.subr.bf16.mxu0 %v3544
    %4967 = vmatpush2.bf16.msra.mxu0 %v3543
    %4968 = vmatprep.subr.bf16.mxu0 %v3540
    %4969 = vmatpush2.bf16.msra.mxu0 %v3539
    %4970 = vmatprep.subr.bf16.mxu0 %v3536
    %4971 = vmatpush2.bf16.msra.mxu0 %v3535
    %4972 = vmatprep.subr.bf16.mxu0 %v3532
    %4973 = vmatpush2.bf16.msra.mxu0 %v3531
    %4974 = vmatprep.subr.bf16.mxu0 %v3528
    %4975 = vmatpush2.bf16.msra.mxu0 %v3527
    %4976 = vmatprep.subr.bf16.mxu0 %v3524
    %4977 = vmatpush2.bf16.msra.mxu0 %v3523
    %4978 = vmatprep.subr.bf16.mxu0 %v3520
    %4979 = vmatpush2.bf16.msra.mxu0 %v3519
    %4980 = vmatprep.subr.bf16.mxu0 %v3516
    %4981 = vmatpush2.bf16.msra.mxu0 %v3515
    %4982 = vmatprep.mubr.bf16.mxu0 %v946
    %4983 = vmatmul.mubr.bf16.gmra.mxu0 %v945
    %v4984 = vpop.f32.mrf.mxu0
    %v4985 = vadd.f32 %v4944, %v4984
    %v4986 = vpop.f32.mrf.mxu0
    %v4987 = vadd.f32 %v4946, %v4986
    %v4988 = vpop.f32.mrf.mxu0
    %v4989 = vpop.f32.mrf.mxu0
    %4990 = vdwg.mxu0
    %4991 = vmatprep.subr.bf16.mxu0 %v3576
    %4992 = vmatpush1.bf16.msra.mxu0 %v3575
    %4993 = vmatprep.subr.bf16.mxu0 %v3572
    %4994 = vmatpush1.bf16.msra.mxu0 %v3571
    %4995 = vmatprep.subr.bf16.mxu0 %v3568
    %4996 = vmatpush1.bf16.msra.mxu0 %v3567
    %4997 = vmatprep.subr.bf16.mxu0 %v3564
    %4998 = vmatpush1.bf16.msra.mxu0 %v3563
    %4999 = vmatprep.subr.bf16.mxu0 %v3560
    %5000 = vmatpush1.bf16.msra.mxu0 %v3559
    %5001 = vmatprep.subr.bf16.mxu0 %v3556
    %5002 = vmatpush1.bf16.msra.mxu0 %v3555
    %5003 = vmatprep.subr.bf16.mxu0 %v3552
    %5004 = vmatpush1.bf16.msra.mxu0 %v3551
    %5005 = vmatprep.subr.bf16.mxu0 %v3548
    %5006 = vmatpush1.bf16.msra.mxu0 %v3547
    %5007 = vmatprep.subr.bf16.mxu0 %v3608
    %5008 = vmatpush2.bf16.msra.mxu0 %v3607
    %5009 = vmatprep.subr.bf16.mxu0 %v3604
    %5010 = vmatpush2.bf16.msra.mxu0 %v3603
    %5011 = vmatprep.subr.bf16.mxu0 %v3600
    %5012 = vmatpush2.bf16.msra.mxu0 %v3599
    %5013 = vmatprep.subr.bf16.mxu0 %v3596
    %5014 = vmatpush2.bf16.msra.mxu0 %v3595
    %5015 = vmatprep.subr.bf16.mxu0 %v3592
    %5016 = vmatpush2.bf16.msra.mxu0 %v3591
    %5017 = vmatprep.subr.bf16.mxu0 %v3588
    %5018 = vmatpush2.bf16.msra.mxu0 %v3587
    %5019 = vmatprep.subr.bf16.mxu0 %v3584
    %5020 = vmatpush2.bf16.msra.mxu0 %v3583
    %5021 = vmatprep.subr.bf16.mxu0 %v3580
    %5022 = vmatpush2.bf16.msra.mxu0 %v3579
    %5023 = vmatprep.mubr.bf16.mxu0 %v948
    %5024 = vmatmul.mubr.bf16.gmra.mxu0 %v947
    %v5025 = vpop.f32.mrf.mxu0
    %v5026 = vadd.f32 %v4985, %v5025
    %v5027 = vpop.f32.mrf.mxu0
    %v5028 = vadd.f32 %v4987, %v5027
    %v5029 = vpop.f32.mrf.mxu0
    %v5030 = vpop.f32.mrf.mxu0
    %5031 = vdwg.mxu0
    %5032 = vmatprep.subr.bf16.mxu0 %v3640
    %5033 = vmatpush1.bf16.msra.mxu0 %v3639
    %5034 = vmatprep.subr.bf16.mxu0 %v3636
    %5035 = vmatpush1.bf16.msra.mxu0 %v3635
    %5036 = vmatprep.subr.bf16.mxu0 %v3632
    %5037 = vmatpush1.bf16.msra.mxu0 %v3631
    %5038 = vmatprep.subr.bf16.mxu0 %v3628
    %5039 = vmatpush1.bf16.msra.mxu0 %v3627
    %5040 = vmatprep.subr.bf16.mxu0 %v3624
    %5041 = vmatpush1.bf16.msra.mxu0 %v3623
    %5042 = vmatprep.subr.bf16.mxu0 %v3620
    %5043 = vmatpush1.bf16.msra.mxu0 %v3619
    %5044 = vmatprep.subr.bf16.mxu0 %v3616
    %5045 = vmatpush1.bf16.msra.mxu0 %v3615
    %5046 = vmatprep.subr.bf16.mxu0 %v3612
    %5047 = vmatpush1.bf16.msra.mxu0 %v3611
    %5048 = vmatprep.subr.bf16.mxu0 %v3672
    %5049 = vmatpush2.bf16.msra.mxu0 %v3671
    %5050 = vmatprep.subr.bf16.mxu0 %v3668
    %5051 = vmatpush2.bf16.msra.mxu0 %v3667
    %5052 = vmatprep.subr.bf16.mxu0 %v3664
    %5053 = vmatpush2.bf16.msra.mxu0 %v3663
    %5054 = vmatprep.subr.bf16.mxu0 %v3660
    %5055 = vmatpush2.bf16.msra.mxu0 %v3659
    %5056 = vmatprep.subr.bf16.mxu0 %v3656
    %5057 = vmatpush2.bf16.msra.mxu0 %v3655
    %5058 = vmatprep.subr.bf16.mxu0 %v3652
    %5059 = vmatpush2.bf16.msra.mxu0 %v3651
    %5060 = vmatprep.subr.bf16.mxu0 %v3648
    %5061 = vmatpush2.bf16.msra.mxu0 %v3647
    %5062 = vmatprep.subr.bf16.mxu0 %v3644
    %5063 = vmatpush2.bf16.msra.mxu0 %v3643
    %5064 = vmatprep.mubr.bf16.mxu0 %v950
    %5065 = vmatmul.mubr.bf16.gmra.mxu0 %v949
    %v5066 = vpop.f32.mrf.mxu0
    %v5067 = vadd.f32 %v5026, %v5066
    %v5068 = vpop.f32.mrf.mxu0
    %v5069 = vadd.f32 %v5028, %v5068
    %v5070 = vpop.f32.mrf.mxu0
    %v5071 = vpop.f32.mrf.mxu0
    %5072 = vdwg.mxu0
    %5073 = vmatprep.subr.bf16.mxu0 %v3704
    %5074 = vmatpush1.bf16.msra.mxu0 %v3703
    %5075 = vmatprep.subr.bf16.mxu0 %v3700
    %5076 = vmatpush1.bf16.msra.mxu0 %v3699
    %5077 = vmatprep.subr.bf16.mxu0 %v3696
    %5078 = vmatpush1.bf16.msra.mxu0 %v3695
    %5079 = vmatprep.subr.bf16.mxu0 %v3692
    %5080 = vmatpush1.bf16.msra.mxu0 %v3691
    %5081 = vmatprep.subr.bf16.mxu0 %v3688
    %5082 = vmatpush1.bf16.msra.mxu0 %v3687
    %5083 = vmatprep.subr.bf16.mxu0 %v3684
    %5084 = vmatpush1.bf16.msra.mxu0 %v3683
    %5085 = vmatprep.subr.bf16.mxu0 %v3680
    %5086 = vmatpush1.bf16.msra.mxu0 %v3679
    %5087 = vmatprep.subr.bf16.mxu0 %v3676
    %5088 = vmatpush1.bf16.msra.mxu0 %v3675
    %5089 = vmatprep.subr.bf16.mxu0 %v3736
    %5090 = vmatpush2.bf16.msra.mxu0 %v3735
    %5091 = vmatprep.subr.bf16.mxu0 %v3732
    %5092 = vmatpush2.bf16.msra.mxu0 %v3731
    %5093 = vmatprep.subr.bf16.mxu0 %v3728
    %5094 = vmatpush2.bf16.msra.mxu0 %v3727
    %5095 = vmatprep.subr.bf16.mxu0 %v3724
    %5096 = vmatpush2.bf16.msra.mxu0 %v3723
    %5097 = vmatprep.subr.bf16.mxu0 %v3720
    %5098 = vmatpush2.bf16.msra.mxu0 %v3719
    %5099 = vmatprep.subr.bf16.mxu0 %v3716
    %5100 = vmatpush2.bf16.msra.mxu0 %v3715
    %5101 = vmatprep.subr.bf16.mxu0 %v3712
    %5102 = vmatpush2.bf16.msra.mxu0 %v3711
    %5103 = vmatprep.subr.bf16.mxu0 %v3708
    %5104 = vmatpush2.bf16.msra.mxu0 %v3707
    %5105 = vmatprep.mubr.bf16.mxu0 %v952
    %5106 = vmatmul.mubr.bf16.gmra.mxu0 %v951
    %v5107 = vpop.f32.mrf.mxu0
    %v5108 = vadd.f32 %v5067, %v5107
    %v5109 = vpop.f32.mrf.mxu0
    %v5110 = vadd.f32 %v5069, %v5109
    %v5111 = vpop.f32.mrf.mxu0
    %v5112 = vpop.f32.mrf.mxu0
    %5113 = vdwg.mxu0
    %5114 = vmatprep.subr.bf16.mxu0 %v3768
    %5115 = vmatpush1.bf16.msra.mxu0 %v3767
    %5116 = vmatprep.subr.bf16.mxu0 %v3764
    %5117 = vmatpush1.bf16.msra.mxu0 %v3763
    %5118 = vmatprep.subr.bf16.mxu0 %v3760
    %5119 = vmatpush1.bf16.msra.mxu0 %v3759
    %5120 = vmatprep.subr.bf16.mxu0 %v3756
    %5121 = vmatpush1.bf16.msra.mxu0 %v3755
    %5122 = vmatprep.subr.bf16.mxu0 %v3752
    %5123 = vmatpush1.bf16.msra.mxu0 %v3751
    %5124 = vmatprep.subr.bf16.mxu0 %v3748
    %5125 = vmatpush1.bf16.msra.mxu0 %v3747
    %5126 = vmatprep.subr.bf16.mxu0 %v3744
    %5127 = vmatpush1.bf16.msra.mxu0 %v3743
    %5128 = vmatprep.subr.bf16.mxu0 %v3740
    %5129 = vmatpush1.bf16.msra.mxu0 %v3739
    %5130 = vmatprep.subr.bf16.mxu0 %v3800
    %5131 = vmatpush2.bf16.msra.mxu0 %v3799
    %5132 = vmatprep.subr.bf16.mxu0 %v3796
    %5133 = vmatpush2.bf16.msra.mxu0 %v3795
    %5134 = vmatprep.subr.bf16.mxu0 %v3792
    %5135 = vmatpush2.bf16.msra.mxu0 %v3791
    %5136 = vmatprep.subr.bf16.mxu0 %v3788
    %5137 = vmatpush2.bf16.msra.mxu0 %v3787
    %5138 = vmatprep.subr.bf16.mxu0 %v3784
    %5139 = vmatpush2.bf16.msra.mxu0 %v3783
    %5140 = vmatprep.subr.bf16.mxu0 %v3780
    %5141 = vmatpush2.bf16.msra.mxu0 %v3779
    %5142 = vmatprep.subr.bf16.mxu0 %v3776
    %5143 = vmatpush2.bf16.msra.mxu0 %v3775
    %5144 = vmatprep.subr.bf16.mxu0 %v3772
    %5145 = vmatpush2.bf16.msra.mxu0 %v3771
    %5146 = vmatprep.mubr.bf16.mxu0 %v954
    %5147 = vmatmul.mubr.bf16.gmra.mxu0 %v953
    %v5148 = vpop.f32.mrf.mxu0
    %v5149 = vadd.f32 %v5108, %v5148
    %v5150 = vpop.f32.mrf.mxu0
    %v5151 = vadd.f32 %v5110, %v5150
    %v5152 = vpop.f32.mrf.mxu0
    %v5153 = vpop.f32.mrf.mxu0
    %5154 = vdwg.mxu0
    %5155 = vmatprep.subr.bf16.mxu0 %v3832
    %5156 = vmatpush1.bf16.msra.mxu0 %v3831
    %5157 = vmatprep.subr.bf16.mxu0 %v3828
    %5158 = vmatpush1.bf16.msra.mxu0 %v3827
    %5159 = vmatprep.subr.bf16.mxu0 %v3824
    %5160 = vmatpush1.bf16.msra.mxu0 %v3823
    %5161 = vmatprep.subr.bf16.mxu0 %v3820
    %5162 = vmatpush1.bf16.msra.mxu0 %v3819
    %5163 = vmatprep.subr.bf16.mxu0 %v3816
    %5164 = vmatpush1.bf16.msra.mxu0 %v3815
    %5165 = vmatprep.subr.bf16.mxu0 %v3812
    %5166 = vmatpush1.bf16.msra.mxu0 %v3811
    %5167 = vmatprep.subr.bf16.mxu0 %v3808
    %5168 = vmatpush1.bf16.msra.mxu0 %v3807
    %5169 = vmatprep.subr.bf16.mxu0 %v3804
    %5170 = vmatpush1.bf16.msra.mxu0 %v3803
    %5171 = vmatprep.subr.bf16.mxu0 %v3864
    %5172 = vmatpush2.bf16.msra.mxu0 %v3863
    %5173 = vmatprep.subr.bf16.mxu0 %v3860
    %5174 = vmatpush2.bf16.msra.mxu0 %v3859
    %5175 = vmatprep.subr.bf16.mxu0 %v3856
    %5176 = vmatpush2.bf16.msra.mxu0 %v3855
    %5177 = vmatprep.subr.bf16.mxu0 %v3852
    %5178 = vmatpush2.bf16.msra.mxu0 %v3851
    %5179 = vmatprep.subr.bf16.mxu0 %v3848
    %5180 = vmatpush2.bf16.msra.mxu0 %v3847
    %5181 = vmatprep.subr.bf16.mxu0 %v3844
    %5182 = vmatpush2.bf16.msra.mxu0 %v3843
    %5183 = vmatprep.subr.bf16.mxu0 %v3840
    %5184 = vmatpush2.bf16.msra.mxu0 %v3839
    %5185 = vmatprep.subr.bf16.mxu0 %v3836
    %5186 = vmatpush2.bf16.msra.mxu0 %v3835
    %5187 = vmatprep.mubr.bf16.mxu0 %v956
    %5188 = vmatmul.mubr.bf16.gmra.mxu0 %v955
    %v5189 = vpop.f32.mrf.mxu0
    %v5190 = vadd.f32 %v5149, %v5189
    %v5191 = vpop.f32.mrf.mxu0
    %v5192 = vadd.f32 %v5151, %v5191
    %v5193 = vpop.f32.mrf.mxu0
    %v5194 = vpop.f32.mrf.mxu0
    %5195 = vdwg.mxu0
    %5196 = vmatprep.subr.bf16.mxu0 %v3896
    %5197 = vmatpush1.bf16.msra.mxu0 %v3895
    %5198 = vmatprep.subr.bf16.mxu0 %v3892
    %5199 = vmatpush1.bf16.msra.mxu0 %v3891
    %5200 = vmatprep.subr.bf16.mxu0 %v3888
    %5201 = vmatpush1.bf16.msra.mxu0 %v3887
    %5202 = vmatprep.subr.bf16.mxu0 %v3884
    %5203 = vmatpush1.bf16.msra.mxu0 %v3883
    %5204 = vmatprep.subr.bf16.mxu0 %v3880
    %5205 = vmatpush1.bf16.msra.mxu0 %v3879
    %5206 = vmatprep.subr.bf16.mxu0 %v3876
    %5207 = vmatpush1.bf16.msra.mxu0 %v3875
    %5208 = vmatprep.subr.bf16.mxu0 %v3872
    %5209 = vmatpush1.bf16.msra.mxu0 %v3871
    %5210 = vmatprep.subr.bf16.mxu0 %v3868
    %5211 = vmatpush1.bf16.msra.mxu0 %v3867
    %5212 = vmatprep.subr.bf16.mxu0 %v3928
    %5213 = vmatpush2.bf16.msra.mxu0 %v3927
    %5214 = vmatprep.subr.bf16.mxu0 %v3924
    %5215 = vmatpush2.bf16.msra.mxu0 %v3923
    %5216 = vmatprep.subr.bf16.mxu0 %v3920
    %5217 = vmatpush2.bf16.msra.mxu0 %v3919
    %5218 = vmatprep.subr.bf16.mxu0 %v3916
    %5219 = vmatpush2.bf16.msra.mxu0 %v3915
    %5220 = vmatprep.subr.bf16.mxu0 %v3912
    %5221 = vmatpush2.bf16.msra.mxu0 %v3911
    %5222 = vmatprep.subr.bf16.mxu0 %v3908
    %5223 = vmatpush2.bf16.msra.mxu0 %v3907
    %5224 = vmatprep.subr.bf16.mxu0 %v3904
    %5225 = vmatpush2.bf16.msra.mxu0 %v3903
    %5226 = vmatprep.subr.bf16.mxu0 %v3900
    %5227 = vmatpush2.bf16.msra.mxu0 %v3899
    %5228 = vmatprep.mubr.bf16.mxu0 %v958
    %5229 = vmatmul.mubr.bf16.gmra.mxu0 %v957
    %v5230 = vpop.f32.mrf.mxu0
    %v5231 = vadd.f32 %v5190, %v5230
    %v5232 = vpop.f32.mrf.mxu0
    %v5233 = vadd.f32 %v5192, %v5232
    %v5234 = vpop.f32.mrf.mxu0
    %v5235 = vpop.f32.mrf.mxu0
    %5236 = vdwg.mxu0
    %5237 = vmatprep.subr.bf16.mxu0 %v3960
    %5238 = vmatpush1.bf16.msra.mxu0 %v3959
    %5239 = vmatprep.subr.bf16.mxu0 %v3956
    %5240 = vmatpush1.bf16.msra.mxu0 %v3955
    %5241 = vmatprep.subr.bf16.mxu0 %v3952
    %5242 = vmatpush1.bf16.msra.mxu0 %v3951
    %5243 = vmatprep.subr.bf16.mxu0 %v3948
    %5244 = vmatpush1.bf16.msra.mxu0 %v3947
    %5245 = vmatprep.subr.bf16.mxu0 %v3944
    %5246 = vmatpush1.bf16.msra.mxu0 %v3943
    %5247 = vmatprep.subr.bf16.mxu0 %v3940
    %5248 = vmatpush1.bf16.msra.mxu0 %v3939
    %5249 = vmatprep.subr.bf16.mxu0 %v3936
    %5250 = vmatpush1.bf16.msra.mxu0 %v3935
    %5251 = vmatprep.subr.bf16.mxu0 %v3932
    %5252 = vmatpush1.bf16.msra.mxu0 %v3931
    %5253 = vmatprep.subr.bf16.mxu0 %v3992
    %5254 = vmatpush2.bf16.msra.mxu0 %v3991
    %5255 = vmatprep.subr.bf16.mxu0 %v3988
    %5256 = vmatpush2.bf16.msra.mxu0 %v3987
    %5257 = vmatprep.subr.bf16.mxu0 %v3984
    %5258 = vmatpush2.bf16.msra.mxu0 %v3983
    %5259 = vmatprep.subr.bf16.mxu0 %v3980
    %5260 = vmatpush2.bf16.msra.mxu0 %v3979
    %5261 = vmatprep.subr.bf16.mxu0 %v3976
    %5262 = vmatpush2.bf16.msra.mxu0 %v3975
    %5263 = vmatprep.subr.bf16.mxu0 %v3972
    %5264 = vmatpush2.bf16.msra.mxu0 %v3971
    %5265 = vmatprep.subr.bf16.mxu0 %v3968
    %5266 = vmatpush2.bf16.msra.mxu0 %v3967
    %5267 = vmatprep.subr.bf16.mxu0 %v3964
    %5268 = vmatpush2.bf16.msra.mxu0 %v3963
    %5269 = vmatprep.mubr.bf16.mxu0 %v960
    %5270 = vmatmul.mubr.bf16.gmra.mxu0 %v959
    %v5271 = vpop.f32.mrf.mxu0
    %v5272 = vadd.f32 %v5231, %v5271
    %v5273 = vpop.f32.mrf.mxu0
    %v5274 = vadd.f32 %v5233, %v5273
    %v5275 = vpop.f32.mrf.mxu0
    %v5276 = vpop.f32.mrf.mxu0
    %5277 = vdwg.mxu0
    %5278 = vmatprep.subr.bf16.mxu0 %v4024
    %5279 = vmatpush1.bf16.msra.mxu0 %v4023
    %5280 = vmatprep.subr.bf16.mxu0 %v4020
    %5281 = vmatpush1.bf16.msra.mxu0 %v4019
    %5282 = vmatprep.subr.bf16.mxu0 %v4016
    %5283 = vmatpush1.bf16.msra.mxu0 %v4015
    %5284 = vmatprep.subr.bf16.mxu0 %v4012
    %5285 = vmatpush1.bf16.msra.mxu0 %v4011
    %5286 = vmatprep.subr.bf16.mxu0 %v4008
    %5287 = vmatpush1.bf16.msra.mxu0 %v4007
    %5288 = vmatprep.subr.bf16.mxu0 %v4004
    %5289 = vmatpush1.bf16.msra.mxu0 %v4003
    %5290 = vmatprep.subr.bf16.mxu0 %v4000
    %5291 = vmatpush1.bf16.msra.mxu0 %v3999
    %5292 = vmatprep.subr.bf16.mxu0 %v3996
    %5293 = vmatpush1.bf16.msra.mxu0 %v3995
    %5294 = vmatprep.subr.bf16.mxu0 %v4056
    %5295 = vmatpush2.bf16.msra.mxu0 %v4055
    %5296 = vmatprep.subr.bf16.mxu0 %v4052
    %5297 = vmatpush2.bf16.msra.mxu0 %v4051
    %5298 = vmatprep.subr.bf16.mxu0 %v4048
    %5299 = vmatpush2.bf16.msra.mxu0 %v4047
    %5300 = vmatprep.subr.bf16.mxu0 %v4044
    %5301 = vmatpush2.bf16.msra.mxu0 %v4043
    %5302 = vmatprep.subr.bf16.mxu0 %v4040
    %5303 = vmatpush2.bf16.msra.mxu0 %v4039
    %5304 = vmatprep.subr.bf16.mxu0 %v4036
    %5305 = vmatpush2.bf16.msra.mxu0 %v4035
    %5306 = vmatprep.subr.bf16.mxu0 %v4032
    %5307 = vmatpush2.bf16.msra.mxu0 %v4031
    %5308 = vmatprep.subr.bf16.mxu0 %v4028
    %5309 = vmatpush2.bf16.msra.mxu0 %v4027
    %5310 = vmatprep.mubr.bf16.mxu0 %v962
    %5311 = vmatmul.mubr.bf16.gmra.mxu0 %v961
    %v5312 = vpop.f32.mrf.mxu0
    %v5313 = vadd.f32 %v5272, %v5312
    %v5314 = vpop.f32.mrf.mxu0
    %v5315 = vadd.f32 %v5274, %v5314
    %v5316 = vpop.f32.mrf.mxu0
    %v5317 = vpop.f32.mrf.mxu0
    %5318 = vdwg.mxu0
    %5319 = vmatprep.subr.bf16.mxu0 %v3322
    %5320 = vmatpush1.bf16.msra.mxu0 %v3321
    %5321 = vmatprep.subr.bf16.mxu0 %v3318
    %5322 = vmatpush1.bf16.msra.mxu0 %v3317
    %5323 = vmatprep.subr.bf16.mxu0 %v3314
    %5324 = vmatpush1.bf16.msra.mxu0 %v3313
    %5325 = vmatprep.subr.bf16.mxu0 %v3310
    %5326 = vmatpush1.bf16.msra.mxu0 %v3309
    %5327 = vmatprep.subr.bf16.mxu0 %v3306
    %5328 = vmatpush1.bf16.msra.mxu0 %v3305
    %5329 = vmatprep.subr.bf16.mxu0 %v3302
    %5330 = vmatpush1.bf16.msra.mxu0 %v3301
    %5331 = vmatprep.subr.bf16.mxu0 %v3298
    %5332 = vmatpush1.bf16.msra.mxu0 %v3297
    %5333 = vmatprep.subr.bf16.mxu0 %v3294
    %5334 = vmatpush1.bf16.msra.mxu0 %v3293
    %5335 = vmatprep.subr.bf16.mxu0 %v3354
    %5336 = vmatpush2.bf16.msra.mxu0 %v3353
    %5337 = vmatprep.subr.bf16.mxu0 %v3350
    %5338 = vmatpush2.bf16.msra.mxu0 %v3349
    %5339 = vmatprep.subr.bf16.mxu0 %v3346
    %5340 = vmatpush2.bf16.msra.mxu0 %v3345
    %5341 = vmatprep.subr.bf16.mxu0 %v3342
    %5342 = vmatpush2.bf16.msra.mxu0 %v3341
    %5343 = vmatprep.subr.bf16.mxu0 %v3338
    %5344 = vmatpush2.bf16.msra.mxu0 %v3337
    %5345 = vmatprep.subr.bf16.mxu0 %v3334
    %5346 = vmatpush2.bf16.msra.mxu0 %v3333
    %5347 = vmatprep.subr.bf16.mxu0 %v3330
    %5348 = vmatpush2.bf16.msra.mxu0 %v3329
    %5349 = vmatprep.subr.bf16.mxu0 %v3326
    %5350 = vmatpush2.bf16.msra.mxu0 %v3325
    %5351 = vmatprep.mubr.bf16.mxu0 %v940
    %5352 = vmatmul.mubr.bf16.gmra.mxu0 %v939
    %v5353 = vpop.f32.mrf.mxu0
    %v5354 = vadd.f32 %v894, %v5353
    %v5355 = vpop.f32.mrf.mxu0
    %v5356 = vadd.f32 %v898, %v5355
    %v5357 = vpop.f32.mrf.mxu0
    %v5358 = vpop.f32.mrf.mxu0
    %5359 = vdwg.mxu0
    %5360 = vmatprep.subr.bf16.mxu0 %v3386
    %5361 = vmatpush1.bf16.msra.mxu0 %v3385
    %5362 = vmatprep.subr.bf16.mxu0 %v3382
    %5363 = vmatpush1.bf16.msra.mxu0 %v3381
    %5364 = vmatprep.subr.bf16.mxu0 %v3378
    %5365 = vmatpush1.bf16.msra.mxu0 %v3377
    %5366 = vmatprep.subr.bf16.mxu0 %v3374
    %5367 = vmatpush1.bf16.msra.mxu0 %v3373
    %5368 = vmatprep.subr.bf16.mxu0 %v3370
    %5369 = vmatpush1.bf16.msra.mxu0 %v3369
    %5370 = vmatprep.subr.bf16.mxu0 %v3366
    %5371 = vmatpush1.bf16.msra.mxu0 %v3365
    %5372 = vmatprep.subr.bf16.mxu0 %v3362
    %5373 = vmatpush1.bf16.msra.mxu0 %v3361
    %5374 = vmatprep.subr.bf16.mxu0 %v3358
    %5375 = vmatpush1.bf16.msra.mxu0 %v3357
    %5376 = vmatprep.subr.bf16.mxu0 %v3418
    %5377 = vmatpush2.bf16.msra.mxu0 %v3417
    %5378 = vmatprep.subr.bf16.mxu0 %v3414
    %5379 = vmatpush2.bf16.msra.mxu0 %v3413
    %5380 = vmatprep.subr.bf16.mxu0 %v3410
    %5381 = vmatpush2.bf16.msra.mxu0 %v3409
    %5382 = vmatprep.subr.bf16.mxu0 %v3406
    %5383 = vmatpush2.bf16.msra.mxu0 %v3405
    %5384 = vmatprep.subr.bf16.mxu0 %v3402
    %5385 = vmatpush2.bf16.msra.mxu0 %v3401
    %5386 = vmatprep.subr.bf16.mxu0 %v3398
    %5387 = vmatpush2.bf16.msra.mxu0 %v3397
    %5388 = vmatprep.subr.bf16.mxu0 %v3394
    %5389 = vmatpush2.bf16.msra.mxu0 %v3393
    %5390 = vmatprep.subr.bf16.mxu0 %v3390
    %5391 = vmatpush2.bf16.msra.mxu0 %v3389
    %5392 = vmatprep.mubr.bf16.mxu0 %v942
    %5393 = vmatmul.mubr.bf16.gmra.mxu0 %v941
    %v5394 = vpop.f32.mrf.mxu0
    %v5395 = vadd.f32 %v5354, %v5394
    %v5396 = vpop.f32.mrf.mxu0
    %v5397 = vadd.f32 %v5356, %v5396
    %v5398 = vpop.f32.mrf.mxu0
    %v5399 = vpop.f32.mrf.mxu0
    %5400 = vdwg.mxu0
    %5401 = vmatprep.subr.bf16.mxu0 %v3450
    %5402 = vmatpush1.bf16.msra.mxu0 %v3449
    %5403 = vmatprep.subr.bf16.mxu0 %v3446
    %5404 = vmatpush1.bf16.msra.mxu0 %v3445
    %5405 = vmatprep.subr.bf16.mxu0 %v3442
    %5406 = vmatpush1.bf16.msra.mxu0 %v3441
    %5407 = vmatprep.subr.bf16.mxu0 %v3438
    %5408 = vmatpush1.bf16.msra.mxu0 %v3437
    %5409 = vmatprep.subr.bf16.mxu0 %v3434
    %5410 = vmatpush1.bf16.msra.mxu0 %v3433
    %5411 = vmatprep.subr.bf16.mxu0 %v3430
    %5412 = vmatpush1.bf16.msra.mxu0 %v3429
    %5413 = vmatprep.subr.bf16.mxu0 %v3426
    %5414 = vmatpush1.bf16.msra.mxu0 %v3425
    %5415 = vmatprep.subr.bf16.mxu0 %v3422
    %5416 = vmatpush1.bf16.msra.mxu0 %v3421
    %5417 = vmatprep.subr.bf16.mxu0 %v3482
    %5418 = vmatpush2.bf16.msra.mxu0 %v3481
    %5419 = vmatprep.subr.bf16.mxu0 %v3478
    %5420 = vmatpush2.bf16.msra.mxu0 %v3477
    %5421 = vmatprep.subr.bf16.mxu0 %v3474
    %5422 = vmatpush2.bf16.msra.mxu0 %v3473
    %5423 = vmatprep.subr.bf16.mxu0 %v3470
    %5424 = vmatpush2.bf16.msra.mxu0 %v3469
    %5425 = vmatprep.subr.bf16.mxu0 %v3466
    %5426 = vmatpush2.bf16.msra.mxu0 %v3465
    %5427 = vmatprep.subr.bf16.mxu0 %v3462
    %5428 = vmatpush2.bf16.msra.mxu0 %v3461
    %5429 = vmatprep.subr.bf16.mxu0 %v3458
    %5430 = vmatpush2.bf16.msra.mxu0 %v3457
    %5431 = vmatprep.subr.bf16.mxu0 %v3454
    %5432 = vmatpush2.bf16.msra.mxu0 %v3453
    %5433 = vmatprep.mubr.bf16.mxu0 %v944
    %5434 = vmatmul.mubr.bf16.gmra.mxu0 %v943
    %v5435 = vpop.f32.mrf.mxu0
    %v5436 = vadd.f32 %v5395, %v5435
    %v5437 = vpop.f32.mrf.mxu0
    %v5438 = vadd.f32 %v5397, %v5437
    %v5439 = vpop.f32.mrf.mxu0
    %v5440 = vpop.f32.mrf.mxu0
    %5441 = vdwg.mxu0
    %5442 = vmatprep.subr.bf16.mxu0 %v3514
    %5443 = vmatpush1.bf16.msra.mxu0 %v3513
    %5444 = vmatprep.subr.bf16.mxu0 %v3510
    %5445 = vmatpush1.bf16.msra.mxu0 %v3509
    %5446 = vmatprep.subr.bf16.mxu0 %v3506
    %5447 = vmatpush1.bf16.msra.mxu0 %v3505
    %5448 = vmatprep.subr.bf16.mxu0 %v3502
    %5449 = vmatpush1.bf16.msra.mxu0 %v3501
    %5450 = vmatprep.subr.bf16.mxu0 %v3498
    %5451 = vmatpush1.bf16.msra.mxu0 %v3497
    %5452 = vmatprep.subr.bf16.mxu0 %v3494
    %5453 = vmatpush1.bf16.msra.mxu0 %v3493
    %5454 = vmatprep.subr.bf16.mxu0 %v3490
    %5455 = vmatpush1.bf16.msra.mxu0 %v3489
    %5456 = vmatprep.subr.bf16.mxu0 %v3486
    %5457 = vmatpush1.bf16.msra.mxu0 %v3485
    %5458 = vmatprep.subr.bf16.mxu0 %v3546
    %5459 = vmatpush2.bf16.msra.mxu0 %v3545
    %5460 = vmatprep.subr.bf16.mxu0 %v3542
    %5461 = vmatpush2.bf16.msra.mxu0 %v3541
    %5462 = vmatprep.subr.bf16.mxu0 %v3538
    %5463 = vmatpush2.bf16.msra.mxu0 %v3537
    %5464 = vmatprep.subr.bf16.mxu0 %v3534
    %5465 = vmatpush2.bf16.msra.mxu0 %v3533
    %5466 = vmatprep.subr.bf16.mxu0 %v3530
    %5467 = vmatpush2.bf16.msra.mxu0 %v3529
    %5468 = vmatprep.subr.bf16.mxu0 %v3526
    %5469 = vmatpush2.bf16.msra.mxu0 %v3525
    %5470 = vmatprep.subr.bf16.mxu0 %v3522
    %5471 = vmatpush2.bf16.msra.mxu0 %v3521
    %5472 = vmatprep.subr.bf16.mxu0 %v3518
    %5473 = vmatpush2.bf16.msra.mxu0 %v3517
    %5474 = vmatprep.mubr.bf16.mxu0 %v946
    %5475 = vmatmul.mubr.bf16.gmra.mxu0 %v945
    %v5476 = vpop.f32.mrf.mxu0
    %v5477 = vadd.f32 %v5436, %v5476
    %v5478 = vpop.f32.mrf.mxu0
    %v5479 = vadd.f32 %v5438, %v5478
    %v5480 = vpop.f32.mrf.mxu0
    %v5481 = vpop.f32.mrf.mxu0
    %5482 = vdwg.mxu0
    %5483 = vmatprep.subr.bf16.mxu0 %v3578
    %5484 = vmatpush1.bf16.msra.mxu0 %v3577
    %5485 = vmatprep.subr.bf16.mxu0 %v3574
    %5486 = vmatpush1.bf16.msra.mxu0 %v3573
    %5487 = vmatprep.subr.bf16.mxu0 %v3570
    %5488 = vmatpush1.bf16.msra.mxu0 %v3569
    %5489 = vmatprep.subr.bf16.mxu0 %v3566
    %5490 = vmatpush1.bf16.msra.mxu0 %v3565
    %5491 = vmatprep.subr.bf16.mxu0 %v3562
    %5492 = vmatpush1.bf16.msra.mxu0 %v3561
    %5493 = vmatprep.subr.bf16.mxu0 %v3558
    %5494 = vmatpush1.bf16.msra.mxu0 %v3557
    %5495 = vmatprep.subr.bf16.mxu0 %v3554
    %5496 = vmatpush1.bf16.msra.mxu0 %v3553
    %5497 = vmatprep.subr.bf16.mxu0 %v3550
    %5498 = vmatpush1.bf16.msra.mxu0 %v3549
    %5499 = vmatprep.subr.bf16.mxu0 %v3610
    %5500 = vmatpush2.bf16.msra.mxu0 %v3609
    %5501 = vmatprep.subr.bf16.mxu0 %v3606
    %5502 = vmatpush2.bf16.msra.mxu0 %v3605
    %5503 = vmatprep.subr.bf16.mxu0 %v3602
    %5504 = vmatpush2.bf16.msra.mxu0 %v3601
    %5505 = vmatprep.subr.bf16.mxu0 %v3598
    %5506 = vmatpush2.bf16.msra.mxu0 %v3597
    %5507 = vmatprep.subr.bf16.mxu0 %v3594
    %5508 = vmatpush2.bf16.msra.mxu0 %v3593
    %5509 = vmatprep.subr.bf16.mxu0 %v3590
    %5510 = vmatpush2.bf16.msra.mxu0 %v3589
    %5511 = vmatprep.subr.bf16.mxu0 %v3586
    %5512 = vmatpush2.bf16.msra.mxu0 %v3585
    %5513 = vmatprep.subr.bf16.mxu0 %v3582
    %5514 = vmatpush2.bf16.msra.mxu0 %v3581
    %5515 = vmatprep.mubr.bf16.mxu0 %v948
    %5516 = vmatmul.mubr.bf16.gmra.mxu0 %v947
    %v5517 = vpop.f32.mrf.mxu0
    %v5518 = vadd.f32 %v5477, %v5517
    %v5519 = vpop.f32.mrf.mxu0
    %v5520 = vadd.f32 %v5479, %v5519
    %v5521 = vpop.f32.mrf.mxu0
    %v5522 = vpop.f32.mrf.mxu0
    %5523 = vdwg.mxu0
    %5524 = vmatprep.subr.bf16.mxu0 %v3642
    %5525 = vmatpush1.bf16.msra.mxu0 %v3641
    %5526 = vmatprep.subr.bf16.mxu0 %v3638
    %5527 = vmatpush1.bf16.msra.mxu0 %v3637
    %5528 = vmatprep.subr.bf16.mxu0 %v3634
    %5529 = vmatpush1.bf16.msra.mxu0 %v3633
    %5530 = vmatprep.subr.bf16.mxu0 %v3630
    %5531 = vmatpush1.bf16.msra.mxu0 %v3629
    %5532 = vmatprep.subr.bf16.mxu0 %v3626
    %5533 = vmatpush1.bf16.msra.mxu0 %v3625
    %5534 = vmatprep.subr.bf16.mxu0 %v3622
    %5535 = vmatpush1.bf16.msra.mxu0 %v3621
    %5536 = vmatprep.subr.bf16.mxu0 %v3618
    %5537 = vmatpush1.bf16.msra.mxu0 %v3617
    %5538 = vmatprep.subr.bf16.mxu0 %v3614
    %5539 = vmatpush1.bf16.msra.mxu0 %v3613
    %5540 = vmatprep.subr.bf16.mxu0 %v3674
    %5541 = vmatpush2.bf16.msra.mxu0 %v3673
    %5542 = vmatprep.subr.bf16.mxu0 %v3670
    %5543 = vmatpush2.bf16.msra.mxu0 %v3669
    %5544 = vmatprep.subr.bf16.mxu0 %v3666
    %5545 = vmatpush2.bf16.msra.mxu0 %v3665
    %5546 = vmatprep.subr.bf16.mxu0 %v3662
    %5547 = vmatpush2.bf16.msra.mxu0 %v3661
    %5548 = vmatprep.subr.bf16.mxu0 %v3658
    %5549 = vmatpush2.bf16.msra.mxu0 %v3657
    %5550 = vmatprep.subr.bf16.mxu0 %v3654
    %5551 = vmatpush2.bf16.msra.mxu0 %v3653
    %5552 = vmatprep.subr.bf16.mxu0 %v3650
    %5553 = vmatpush2.bf16.msra.mxu0 %v3649
    %5554 = vmatprep.subr.bf16.mxu0 %v3646
    %5555 = vmatpush2.bf16.msra.mxu0 %v3645
    %5556 = vmatprep.mubr.bf16.mxu0 %v950
    %5557 = vmatmul.mubr.bf16.gmra.mxu0 %v949
    %v5558 = vpop.f32.mrf.mxu0
    %v5559 = vadd.f32 %v5518, %v5558
    %v5560 = vpop.f32.mrf.mxu0
    %v5561 = vadd.f32 %v5520, %v5560
    %v5562 = vpop.f32.mrf.mxu0
    %v5563 = vpop.f32.mrf.mxu0
    %5564 = vdwg.mxu0
    %5565 = vmatprep.subr.bf16.mxu0 %v3706
    %5566 = vmatpush1.bf16.msra.mxu0 %v3705
    %5567 = vmatprep.subr.bf16.mxu0 %v3702
    %5568 = vmatpush1.bf16.msra.mxu0 %v3701
    %5569 = vmatprep.subr.bf16.mxu0 %v3698
    %5570 = vmatpush1.bf16.msra.mxu0 %v3697
    %5571 = vmatprep.subr.bf16.mxu0 %v3694
    %5572 = vmatpush1.bf16.msra.mxu0 %v3693
    %5573 = vmatprep.subr.bf16.mxu0 %v3690
    %5574 = vmatpush1.bf16.msra.mxu0 %v3689
    %5575 = vmatprep.subr.bf16.mxu0 %v3686
    %5576 = vmatpush1.bf16.msra.mxu0 %v3685
    %5577 = vmatprep.subr.bf16.mxu0 %v3682
    %5578 = vmatpush1.bf16.msra.mxu0 %v3681
    %5579 = vmatprep.subr.bf16.mxu0 %v3678
    %5580 = vmatpush1.bf16.msra.mxu0 %v3677
    %5581 = vmatprep.subr.bf16.mxu0 %v3738
    %5582 = vmatpush2.bf16.msra.mxu0 %v3737
    %5583 = vmatprep.subr.bf16.mxu0 %v3734
    %5584 = vmatpush2.bf16.msra.mxu0 %v3733
    %5585 = vmatprep.subr.bf16.mxu0 %v3730
    %5586 = vmatpush2.bf16.msra.mxu0 %v3729
    %5587 = vmatprep.subr.bf16.mxu0 %v3726
    %5588 = vmatpush2.bf16.msra.mxu0 %v3725
    %5589 = vmatprep.subr.bf16.mxu0 %v3722
    %5590 = vmatpush2.bf16.msra.mxu0 %v3721
    %5591 = vmatprep.subr.bf16.mxu0 %v3718
    %5592 = vmatpush2.bf16.msra.mxu0 %v3717
    %5593 = vmatprep.subr.bf16.mxu0 %v3714
    %5594 = vmatpush2.bf16.msra.mxu0 %v3713
    %5595 = vmatprep.subr.bf16.mxu0 %v3710
    %5596 = vmatpush2.bf16.msra.mxu0 %v3709
    %5597 = vmatprep.mubr.bf16.mxu0 %v952
    %5598 = vmatmul.mubr.bf16.gmra.mxu0 %v951
    %v5599 = vpop.f32.mrf.mxu0
    %v5600 = vadd.f32 %v5559, %v5599
    %v5601 = vpop.f32.mrf.mxu0
    %v5602 = vadd.f32 %v5561, %v5601
    %v5603 = vpop.f32.mrf.mxu0
    %v5604 = vpop.f32.mrf.mxu0
    %5605 = vdwg.mxu0
    %5606 = vmatprep.subr.bf16.mxu0 %v3770
    %5607 = vmatpush1.bf16.msra.mxu0 %v3769
    %5608 = vmatprep.subr.bf16.mxu0 %v3766
    %5609 = vmatpush1.bf16.msra.mxu0 %v3765
    %5610 = vmatprep.subr.bf16.mxu0 %v3762
    %5611 = vmatpush1.bf16.msra.mxu0 %v3761
    %5612 = vmatprep.subr.bf16.mxu0 %v3758
    %5613 = vmatpush1.bf16.msra.mxu0 %v3757
    %5614 = vmatprep.subr.bf16.mxu0 %v3754
    %5615 = vmatpush1.bf16.msra.mxu0 %v3753
    %5616 = vmatprep.subr.bf16.mxu0 %v3750
    %5617 = vmatpush1.bf16.msra.mxu0 %v3749
    %5618 = vmatprep.subr.bf16.mxu0 %v3746
    %5619 = vmatpush1.bf16.msra.mxu0 %v3745
    %5620 = vmatprep.subr.bf16.mxu0 %v3742
    %5621 = vmatpush1.bf16.msra.mxu0 %v3741
    %5622 = vmatprep.subr.bf16.mxu0 %v3802
    %5623 = vmatpush2.bf16.msra.mxu0 %v3801
    %5624 = vmatprep.subr.bf16.mxu0 %v3798
    %5625 = vmatpush2.bf16.msra.mxu0 %v3797
    %5626 = vmatprep.subr.bf16.mxu0 %v3794
    %5627 = vmatpush2.bf16.msra.mxu0 %v3793
    %5628 = vmatprep.subr.bf16.mxu0 %v3790
    %5629 = vmatpush2.bf16.msra.mxu0 %v3789
    %5630 = vmatprep.subr.bf16.mxu0 %v3786
    %5631 = vmatpush2.bf16.msra.mxu0 %v3785
    %5632 = vmatprep.subr.bf16.mxu0 %v3782
    %5633 = vmatpush2.bf16.msra.mxu0 %v3781
    %5634 = vmatprep.subr.bf16.mxu0 %v3778
    %5635 = vmatpush2.bf16.msra.mxu0 %v3777
    %5636 = vmatprep.subr.bf16.mxu0 %v3774
    %5637 = vmatpush2.bf16.msra.mxu0 %v3773
    %5638 = vmatprep.mubr.bf16.mxu0 %v954
    %5639 = vmatmul.mubr.bf16.gmra.mxu0 %v953
    %v5640 = vpop.f32.mrf.mxu0
    %v5641 = vadd.f32 %v5600, %v5640
    %v5642 = vpop.f32.mrf.mxu0
    %v5643 = vadd.f32 %v5602, %v5642
    %v5644 = vpop.f32.mrf.mxu0
    %v5645 = vpop.f32.mrf.mxu0
    %5646 = vdwg.mxu0
    %5647 = vmatprep.subr.bf16.mxu0 %v3834
    %5648 = vmatpush1.bf16.msra.mxu0 %v3833
    %5649 = vmatprep.subr.bf16.mxu0 %v3830
    %5650 = vmatpush1.bf16.msra.mxu0 %v3829
    %5651 = vmatprep.subr.bf16.mxu0 %v3826
    %5652 = vmatpush1.bf16.msra.mxu0 %v3825
    %5653 = vmatprep.subr.bf16.mxu0 %v3822
    %5654 = vmatpush1.bf16.msra.mxu0 %v3821
    %5655 = vmatprep.subr.bf16.mxu0 %v3818
    %5656 = vmatpush1.bf16.msra.mxu0 %v3817
    %5657 = vmatprep.subr.bf16.mxu0 %v3814
    %5658 = vmatpush1.bf16.msra.mxu0 %v3813
    %5659 = vmatprep.subr.bf16.mxu0 %v3810
    %5660 = vmatpush1.bf16.msra.mxu0 %v3809
    %5661 = vmatprep.subr.bf16.mxu0 %v3806
    %5662 = vmatpush1.bf16.msra.mxu0 %v3805
    %5663 = vmatprep.subr.bf16.mxu0 %v3866
    %5664 = vmatpush2.bf16.msra.mxu0 %v3865
    %5665 = vmatprep.subr.bf16.mxu0 %v3862
    %5666 = vmatpush2.bf16.msra.mxu0 %v3861
    %5667 = vmatprep.subr.bf16.mxu0 %v3858
    %5668 = vmatpush2.bf16.msra.mxu0 %v3857
    %5669 = vmatprep.subr.bf16.mxu0 %v3854
    %5670 = vmatpush2.bf16.msra.mxu0 %v3853
    %5671 = vmatprep.subr.bf16.mxu0 %v3850
    %5672 = vmatpush2.bf16.msra.mxu0 %v3849
    %5673 = vmatprep.subr.bf16.mxu0 %v3846
    %5674 = vmatpush2.bf16.msra.mxu0 %v3845
    %5675 = vmatprep.subr.bf16.mxu0 %v3842
    %5676 = vmatpush2.bf16.msra.mxu0 %v3841
    %5677 = vmatprep.subr.bf16.mxu0 %v3838
    %5678 = vmatpush2.bf16.msra.mxu0 %v3837
    %5679 = vmatprep.mubr.bf16.mxu0 %v956
    %5680 = vmatmul.mubr.bf16.gmra.mxu0 %v955
    %v5681 = vpop.f32.mrf.mxu0
    %v5682 = vadd.f32 %v5641, %v5681
    %v5683 = vpop.f32.mrf.mxu0
    %v5684 = vadd.f32 %v5643, %v5683
    %v5685 = vpop.f32.mrf.mxu0
    %v5686 = vpop.f32.mrf.mxu0
    %5687 = vdwg.mxu0
    %5688 = vmatprep.subr.bf16.mxu0 %v3898
    %5689 = vmatpush1.bf16.msra.mxu0 %v3897
    %5690 = vmatprep.subr.bf16.mxu0 %v3894
    %5691 = vmatpush1.bf16.msra.mxu0 %v3893
    %5692 = vmatprep.subr.bf16.mxu0 %v3890
    %5693 = vmatpush1.bf16.msra.mxu0 %v3889
    %5694 = vmatprep.subr.bf16.mxu0 %v3886
    %5695 = vmatpush1.bf16.msra.mxu0 %v3885
    %5696 = vmatprep.subr.bf16.mxu0 %v3882
    %5697 = vmatpush1.bf16.msra.mxu0 %v3881
    %5698 = vmatprep.subr.bf16.mxu0 %v3878
    %5699 = vmatpush1.bf16.msra.mxu0 %v3877
    %5700 = vmatprep.subr.bf16.mxu0 %v3874
    %5701 = vmatpush1.bf16.msra.mxu0 %v3873
    %5702 = vmatprep.subr.bf16.mxu0 %v3870
    %5703 = vmatpush1.bf16.msra.mxu0 %v3869
    %5704 = vmatprep.subr.bf16.mxu0 %v3930
    %5705 = vmatpush2.bf16.msra.mxu0 %v3929
    %5706 = vmatprep.subr.bf16.mxu0 %v3926
    %5707 = vmatpush2.bf16.msra.mxu0 %v3925
    %5708 = vmatprep.subr.bf16.mxu0 %v3922
    %5709 = vmatpush2.bf16.msra.mxu0 %v3921
    %5710 = vmatprep.subr.bf16.mxu0 %v3918
    %5711 = vmatpush2.bf16.msra.mxu0 %v3917
    %5712 = vmatprep.subr.bf16.mxu0 %v3914
    %5713 = vmatpush2.bf16.msra.mxu0 %v3913
    %5714 = vmatprep.subr.bf16.mxu0 %v3910
    %5715 = vmatpush2.bf16.msra.mxu0 %v3909
    %5716 = vmatprep.subr.bf16.mxu0 %v3906
    %5717 = vmatpush2.bf16.msra.mxu0 %v3905
    %5718 = vmatprep.subr.bf16.mxu0 %v3902
    %5719 = vmatpush2.bf16.msra.mxu0 %v3901
    %5720 = vmatprep.mubr.bf16.mxu0 %v958
    %5721 = vmatmul.mubr.bf16.gmra.mxu0 %v957
    %v5722 = vpop.f32.mrf.mxu0
    %v5723 = vadd.f32 %v5682, %v5722
    %v5724 = vpop.f32.mrf.mxu0
    %v5725 = vadd.f32 %v5684, %v5724
    %v5726 = vpop.f32.mrf.mxu0
    %v5727 = vpop.f32.mrf.mxu0
    %5728 = vdwg.mxu0
    %5729 = vmatprep.subr.bf16.mxu0 %v3962
    %5730 = vmatpush1.bf16.msra.mxu0 %v3961
    %5731 = vmatprep.subr.bf16.mxu0 %v3958
    %5732 = vmatpush1.bf16.msra.mxu0 %v3957
    %5733 = vmatprep.subr.bf16.mxu0 %v3954
    %5734 = vmatpush1.bf16.msra.mxu0 %v3953
    %5735 = vmatprep.subr.bf16.mxu0 %v3950
    %5736 = vmatpush1.bf16.msra.mxu0 %v3949
    %5737 = vmatprep.subr.bf16.mxu0 %v3946
    %5738 = vmatpush1.bf16.msra.mxu0 %v3945
    %5739 = vmatprep.subr.bf16.mxu0 %v3942
    %5740 = vmatpush1.bf16.msra.mxu0 %v3941
    %5741 = vmatprep.subr.bf16.mxu0 %v3938
    %5742 = vmatpush1.bf16.msra.mxu0 %v3937
    %5743 = vmatprep.subr.bf16.mxu0 %v3934
    %5744 = vmatpush1.bf16.msra.mxu0 %v3933
    %5745 = vmatprep.subr.bf16.mxu0 %v3994
    %5746 = vmatpush2.bf16.msra.mxu0 %v3993
    %5747 = vmatprep.subr.bf16.mxu0 %v3990
    %5748 = vmatpush2.bf16.msra.mxu0 %v3989
    %5749 = vmatprep.subr.bf16.mxu0 %v3986
    %5750 = vmatpush2.bf16.msra.mxu0 %v3985
    %5751 = vmatprep.subr.bf16.mxu0 %v3982
    %5752 = vmatpush2.bf16.msra.mxu0 %v3981
    %5753 = vmatprep.subr.bf16.mxu0 %v3978
    %5754 = vmatpush2.bf16.msra.mxu0 %v3977
    %5755 = vmatprep.subr.bf16.mxu0 %v3974
    %5756 = vmatpush2.bf16.msra.mxu0 %v3973
    %5757 = vmatprep.subr.bf16.mxu0 %v3970
    %5758 = vmatpush2.bf16.msra.mxu0 %v3969
    %5759 = vmatprep.subr.bf16.mxu0 %v3966
    %5760 = vmatpush2.bf16.msra.mxu0 %v3965
    %5761 = vmatprep.mubr.bf16.mxu0 %v960
    %5762 = vmatmul.mubr.bf16.gmra.mxu0 %v959
    %v5763 = vpop.f32.mrf.mxu0
    %v5764 = vadd.f32 %v5723, %v5763
    %v5765 = vpop.f32.mrf.mxu0
    %v5766 = vadd.f32 %v5725, %v5765
    %v5767 = vpop.f32.mrf.mxu0
    %v5768 = vpop.f32.mrf.mxu0
    %5769 = vdwg.mxu0
    %5770 = vmatprep.subr.bf16.mxu0 %v4026
    %5771 = vmatpush1.bf16.msra.mxu0 %v4025
    %5772 = vmatprep.subr.bf16.mxu0 %v4022
    %5773 = vmatpush1.bf16.msra.mxu0 %v4021
    %5774 = vmatprep.subr.bf16.mxu0 %v4018
    %5775 = vmatpush1.bf16.msra.mxu0 %v4017
    %5776 = vmatprep.subr.bf16.mxu0 %v4014
    %5777 = vmatpush1.bf16.msra.mxu0 %v4013
    %5778 = vmatprep.subr.bf16.mxu0 %v4010
    %5779 = vmatpush1.bf16.msra.mxu0 %v4009
    %5780 = vmatprep.subr.bf16.mxu0 %v4006
    %5781 = vmatpush1.bf16.msra.mxu0 %v4005
    %5782 = vmatprep.subr.bf16.mxu0 %v4002
    %5783 = vmatpush1.bf16.msra.mxu0 %v4001
    %5784 = vmatprep.subr.bf16.mxu0 %v3998
    %5785 = vmatpush1.bf16.msra.mxu0 %v3997
    %5786 = vmatprep.subr.bf16.mxu0 %v4058
    %5787 = vmatpush2.bf16.msra.mxu0 %v4057
    %5788 = vmatprep.subr.bf16.mxu0 %v4054
    %5789 = vmatpush2.bf16.msra.mxu0 %v4053
    %5790 = vmatprep.subr.bf16.mxu0 %v4050
    %5791 = vmatpush2.bf16.msra.mxu0 %v4049
    %5792 = vmatprep.subr.bf16.mxu0 %v4046
    %5793 = vmatpush2.bf16.msra.mxu0 %v4045
    %5794 = vmatprep.subr.bf16.mxu0 %v4042
    %5795 = vmatpush2.bf16.msra.mxu0 %v4041
    %5796 = vmatprep.subr.bf16.mxu0 %v4038
    %5797 = vmatpush2.bf16.msra.mxu0 %v4037
    %5798 = vmatprep.subr.bf16.mxu0 %v4034
    %5799 = vmatpush2.bf16.msra.mxu0 %v4033
    %5800 = vmatprep.subr.bf16.mxu0 %v4030
    %5801 = vmatpush2.bf16.msra.mxu0 %v4029
    %5802 = vmatprep.mubr.bf16.mxu0 %v962
    %5803 = vmatmul.mubr.bf16.gmra.mxu0 %v961
    %v5804 = vpop.f32.mrf.mxu0
    %v5805 = vadd.f32 %v5764, %v5804
    %v5806 = vpop.f32.mrf.mxu0
    %v5807 = vadd.f32 %v5766, %v5806
    %v5808 = vpop.f32.mrf.mxu0
    %v5809 = vpop.f32.mrf.mxu0
    %5810 = vdwg.mxu0
    %vm5811 = vcmp.gt.f32.partialorder %v5313, 0.0
    %vm5812 = vcmp.gt.f32.partialorder %v5315, 0.0
    %vm5813 = vcmp.gt.f32.partialorder %v5805, 0.0
    %vm5814 = vcmp.gt.f32.partialorder %v5807, 0.0
    %v5815 = vmul.f32 %v5313, 0.2
    %v5816 = vmul.f32 %v5315, 0.2
    %v5817 = vmul.f32 %v5805, 0.2
    %v5818 = vmul.f32 %v5807, 0.2
    %v5819 = vsel %vm5811, %v5313, %v5815
    %v5820 = vsel %vm5812, %v5315, %v5816
    %v5821 = vsel %vm5813, %v5805, %v5817
    %v5822 = vsel %vm5814, %v5807, %v5818
    %v5823 = vpack.c.bf16 %v5819, %v5819
    %v5824 = vpack.c.bf16 %v5820, %v5820
    %v5825 = vpack.c.bf16 %v5821, %v5821
    %v5826 = vpack.c.bf16 %v5822, %v5822
    %v5827 = vld [vmem:[#allocation8] sm:$0xff]
    %v5828 = vld [vmem:[#allocation8 + $0x8] sm:$0xff]
    %v5829 = vld [vmem:[#allocation8 + $0x10] sm:$0xff]
    %v5830 = vld [vmem:[#allocation8 + $0x18] sm:$0xff]
    %v5831 = vld [vmem:[#allocation8 + $0x20] sm:$0xff]
    %v5832 = vld [vmem:[#allocation8 + $0x28] sm:$0xff]
    %v5833 = vld [vmem:[#allocation8 + $0x30] sm:$0xff]
    %v5834 = vld [vmem:[#allocation8 + $0x38] sm:$0xff]
    %v5835 = vld [vmem:[#allocation8 + $0x40] sm:$0xff]
    %v5836 = vld [vmem:[#allocation8 + $0x48] sm:$0xff]
    %v5837 = vld [vmem:[#allocation8 + $0x50] sm:$0xff]
    %v5838 = vld [vmem:[#allocation8 + $0x58] sm:$0xff]
    %v5839 = vld [vmem:[#allocation8 + $0x60] sm:$0xff]
    %v5840 = vld [vmem:[#allocation8 + $0x68] sm:$0xff]
    %v5841 = vld [vmem:[#allocation8 + $0x70] sm:$0xff]
    %v5842 = vld [vmem:[#allocation8 + $0x78] sm:$0xff]
    %v5843 = vld [vmem:[#allocation8 + $0x80] sm:$0xff]
    %v5844 = vld [vmem:[#allocation8 + $0x88] sm:$0xff]
    %v5845 = vld [vmem:[#allocation8 + $0x90] sm:$0xff]
    %v5846 = vld [vmem:[#allocation8 + $0x98] sm:$0xff]
    %v5847 = vld [vmem:[#allocation8 + $0xa0] sm:$0xff]
    %v5848 = vld [vmem:[#allocation8 + $0xa8] sm:$0xff]
    %v5849 = vld [vmem:[#allocation8 + $0xb0] sm:$0xff]
    %v5850 = vld [vmem:[#allocation8 + $0xb8] sm:$0xff]
    %v5851 = vld [vmem:[#allocation8 + $0xc0] sm:$0xff]
    %v5852 = vld [vmem:[#allocation8 + $0xc8] sm:$0xff]
    %v5853 = vld [vmem:[#allocation8 + $0xd0] sm:$0xff]
    %v5854 = vld [vmem:[#allocation8 + $0xd8] sm:$0xff]
    %v5855 = vld [vmem:[#allocation8 + $0xe0] sm:$0xff]
    %v5856 = vld [vmem:[#allocation8 + $0xe8] sm:$0xff]
    %v5857 = vld [vmem:[#allocation8 + $0xf0] sm:$0xff]
    %v5858 = vld [vmem:[#allocation8 + $0xf8] sm:$0xff]
    %v5859 = vld [vmem:[#allocation8 + $0x100] sm:$0xff]
    %v5860 = vld [vmem:[#allocation8 + $0x108] sm:$0xff]
    %v5861 = vld [vmem:[#allocation8 + $0x110] sm:$0xff]
    %v5862 = vld [vmem:[#allocation8 + $0x118] sm:$0xff]
    %v5863 = vld [vmem:[#allocation8 + $0x120] sm:$0xff]
    %v5864 = vld [vmem:[#allocation8 + $0x128] sm:$0xff]
    %v5865 = vld [vmem:[#allocation8 + $0x130] sm:$0xff]
    %v5866 = vld [vmem:[#allocation8 + $0x138] sm:$0xff]
    %v5867 = vld [vmem:[#allocation8 + $0x140] sm:$0xff]
    %v5868 = vld [vmem:[#allocation8 + $0x148] sm:$0xff]
    %v5869 = vld [vmem:[#allocation8 + $0x150] sm:$0xff]
    %v5870 = vld [vmem:[#allocation8 + $0x158] sm:$0xff]
    %v5871 = vld [vmem:[#allocation8 + $0x160] sm:$0xff]
    %v5872 = vld [vmem:[#allocation8 + $0x168] sm:$0xff]
    %v5873 = vld [vmem:[#allocation8 + $0x170] sm:$0xff]
    %v5874 = vld [vmem:[#allocation8 + $0x178] sm:$0xff]
    %v5875 = vld [vmem:[#allocation8 + $0x180] sm:$0xff]
    %v5876 = vld [vmem:[#allocation8 + $0x188] sm:$0xff]
    %v5877 = vld [vmem:[#allocation8 + $0x190] sm:$0xff]
    %v5878 = vld [vmem:[#allocation8 + $0x198] sm:$0xff]
    %v5879 = vld [vmem:[#allocation8 + $0x1a0] sm:$0xff]
    %v5880 = vld [vmem:[#allocation8 + $0x1a8] sm:$0xff]
    %v5881 = vld [vmem:[#allocation8 + $0x1b0] sm:$0xff]
    %v5882 = vld [vmem:[#allocation8 + $0x1b8] sm:$0xff]
    %v5883 = vld [vmem:[#allocation8 + $0x1c0] sm:$0xff]
    %v5884 = vld [vmem:[#allocation8 + $0x1c8] sm:$0xff]
    %v5885 = vld [vmem:[#allocation8 + $0x1d0] sm:$0xff]
    %v5886 = vld [vmem:[#allocation8 + $0x1d8] sm:$0xff]
    %v5887 = vld [vmem:[#allocation8 + $0x1e0] sm:$0xff]
    %v5888 = vld [vmem:[#allocation8 + $0x1e8] sm:$0xff]
    %v5889 = vld [vmem:[#allocation8 + $0x1f0] sm:$0xff]
    %v5890 = vld [vmem:[#allocation8 + $0x1f8] sm:$0xff]
    %v5891 = vld [vmem:[#allocation10] sm:$0x3]
    %v5893 = vlaneseq
    %v5894 = vshrl.u32 %v5893, 7
    %v5895 = vsub.s32 0, %v5894
    %v5896 = vrot.slane %v5891, %v5895
    %v5897 = vlaneseq
    %v5898 = vshrl.u32 %v5897, 7
    %v5899 = vsub.s32 1, %v5898
    %v5900 = vrot.slane %v5891, %v5899
    %v5967 = vunpack.c.l.b16 %v5827
    %v5968 = vunpack.c.h.b16 %v5827
    %v5969 = vunpack.c.l.b16 %v5828
    %v5970 = vunpack.c.h.b16 %v5828
    %v5971 = vunpack.c.l.b16 %v5829
    %v5972 = vunpack.c.h.b16 %v5829
    %v5973 = vunpack.c.l.b16 %v5830
    %v5974 = vunpack.c.h.b16 %v5830
    %v5975 = vunpack.c.l.b16 %v5831
    %v5976 = vunpack.c.h.b16 %v5831
    %v5977 = vunpack.c.l.b16 %v5832
    %v5978 = vunpack.c.h.b16 %v5832
    %v5979 = vunpack.c.l.b16 %v5833
    %v5980 = vunpack.c.h.b16 %v5833
    %v5981 = vunpack.c.l.b16 %v5834
    %v5982 = vunpack.c.h.b16 %v5834
    %v5983 = vunpack.c.l.b16 %v5835
    %v5984 = vunpack.c.h.b16 %v5835
    %v5985 = vunpack.c.l.b16 %v5836
    %v5986 = vunpack.c.h.b16 %v5836
    %v5987 = vunpack.c.l.b16 %v5837
    %v5988 = vunpack.c.h.b16 %v5837
    %v5989 = vunpack.c.l.b16 %v5838
    %v5990 = vunpack.c.h.b16 %v5838
    %v5991 = vunpack.c.l.b16 %v5839
    %v5992 = vunpack.c.h.b16 %v5839
    %v5993 = vunpack.c.l.b16 %v5840
    %v5994 = vunpack.c.h.b16 %v5840
    %v5995 = vunpack.c.l.b16 %v5841
    %v5996 = vunpack.c.h.b16 %v5841
    %v5997 = vunpack.c.l.b16 %v5842
    %v5998 = vunpack.c.h.b16 %v5842
    %v5999 = vunpack.c.l.b16 %v5843
    %v6000 = vunpack.c.h.b16 %v5843
    %v6001 = vunpack.c.l.b16 %v5844
    %v6002 = vunpack.c.h.b16 %v5844
    %v6003 = vunpack.c.l.b16 %v5845
    %v6004 = vunpack.c.h.b16 %v5845
    %v6005 = vunpack.c.l.b16 %v5846
    %v6006 = vunpack.c.h.b16 %v5846
    %v6007 = vunpack.c.l.b16 %v5847
    %v6008 = vunpack.c.h.b16 %v5847
    %v6009 = vunpack.c.l.b16 %v5848
    %v6010 = vunpack.c.h.b16 %v5848
    %v6011 = vunpack.c.l.b16 %v5849
    %v6012 = vunpack.c.h.b16 %v5849
    %v6013 = vunpack.c.l.b16 %v5850
    %v6014 = vunpack.c.h.b16 %v5850
    %v6015 = vunpack.c.l.b16 %v5851
    %v6016 = vunpack.c.h.b16 %v5851
    %v6017 = vunpack.c.l.b16 %v5852
    %v6018 = vunpack.c.h.b16 %v5852
    %v6019 = vunpack.c.l.b16 %v5853
    %v6020 = vunpack.c.h.b16 %v5853
    %v6021 = vunpack.c.l.b16 %v5854
    %v6022 = vunpack.c.h.b16 %v5854
    %v6023 = vunpack.c.l.b16 %v5855
    %v6024 = vunpack.c.h.b16 %v5855
    %v6025 = vunpack.c.l.b16 %v5856
    %v6026 = vunpack.c.h.b16 %v5856
    %v6027 = vunpack.c.l.b16 %v5857
    %v6028 = vunpack.c.h.b16 %v5857
    %v6029 = vunpack.c.l.b16 %v5858
    %v6030 = vunpack.c.h.b16 %v5858
    %v6031 = vunpack.c.l.b16 %v5859
    %v6032 = vunpack.c.h.b16 %v5859
    %v6033 = vunpack.c.l.b16 %v5860
    %v6034 = vunpack.c.h.b16 %v5860
    %v6035 = vunpack.c.l.b16 %v5861
    %v6036 = vunpack.c.h.b16 %v5861
    %v6037 = vunpack.c.l.b16 %v5862
    %v6038 = vunpack.c.h.b16 %v5862
    %v6039 = vunpack.c.l.b16 %v5863
    %v6040 = vunpack.c.h.b16 %v5863
    %v6041 = vunpack.c.l.b16 %v5864
    %v6042 = vunpack.c.h.b16 %v5864
    %v6043 = vunpack.c.l.b16 %v5865
    %v6044 = vunpack.c.h.b16 %v5865
    %v6045 = vunpack.c.l.b16 %v5866
    %v6046 = vunpack.c.h.b16 %v5866
    %v6047 = vunpack.c.l.b16 %v5867
    %v6048 = vunpack.c.h.b16 %v5867
    %v6049 = vunpack.c.l.b16 %v5868
    %v6050 = vunpack.c.h.b16 %v5868
    %v6051 = vunpack.c.l.b16 %v5869
    %v6052 = vunpack.c.h.b16 %v5869
    %v6053 = vunpack.c.l.b16 %v5870
    %v6054 = vunpack.c.h.b16 %v5870
    %v6055 = vunpack.c.l.b16 %v5871
    %v6056 = vunpack.c.h.b16 %v5871
    %v6057 = vunpack.c.l.b16 %v5872
    %v6058 = vunpack.c.h.b16 %v5872
    %v6059 = vunpack.c.l.b16 %v5873
    %v6060 = vunpack.c.h.b16 %v5873
    %v6061 = vunpack.c.l.b16 %v5874
    %v6062 = vunpack.c.h.b16 %v5874
    %v6063 = vunpack.c.l.b16 %v5875
    %v6064 = vunpack.c.h.b16 %v5875
    %v6065 = vunpack.c.l.b16 %v5876
    %v6066 = vunpack.c.h.b16 %v5876
    %v6067 = vunpack.c.l.b16 %v5877
    %v6068 = vunpack.c.h.b16 %v5877
    %v6069 = vunpack.c.l.b16 %v5878
    %v6070 = vunpack.c.h.b16 %v5878
    %v6071 = vunpack.c.l.b16 %v5879
    %v6072 = vunpack.c.h.b16 %v5879
    %v6073 = vunpack.c.l.b16 %v5880
    %v6074 = vunpack.c.h.b16 %v5880
    %v6075 = vunpack.c.l.b16 %v5881
    %v6076 = vunpack.c.h.b16 %v5881
    %v6077 = vunpack.c.l.b16 %v5882
    %v6078 = vunpack.c.h.b16 %v5882
    %v6079 = vunpack.c.l.b16 %v5883
    %v6080 = vunpack.c.h.b16 %v5883
    %v6081 = vunpack.c.l.b16 %v5884
    %v6082 = vunpack.c.h.b16 %v5884
    %v6083 = vunpack.c.l.b16 %v5885
    %v6084 = vunpack.c.h.b16 %v5885
    %v6085 = vunpack.c.l.b16 %v5886
    %v6086 = vunpack.c.h.b16 %v5886
    %v6087 = vunpack.c.l.b16 %v5887
    %v6088 = vunpack.c.h.b16 %v5887
    %v6089 = vunpack.c.l.b16 %v5888
    %v6090 = vunpack.c.h.b16 %v5888
    %v6091 = vunpack.c.l.b16 %v5889
    %v6092 = vunpack.c.h.b16 %v5889
    %v6093 = vunpack.c.l.b16 %v5890
    %v6094 = vunpack.c.h.b16 %v5890
    %v6095 = vpack.c.b16 %v5969, %v5967
    %v6096 = vpack.c.b16 %v5970, %v5968
    %v6097 = vpack.c.b16 %v5973, %v5971
    %v6098 = vpack.c.b16 %v5974, %v5972
    %v6099 = vpack.c.b16 %v5977, %v5975
    %v6100 = vpack.c.b16 %v5978, %v5976
    %v6101 = vpack.c.b16 %v5981, %v5979
    %v6102 = vpack.c.b16 %v5982, %v5980
    %v6103 = vpack.c.b16 %v5985, %v5983
    %v6104 = vpack.c.b16 %v5986, %v5984
    %v6105 = vpack.c.b16 %v5989, %v5987
    %v6106 = vpack.c.b16 %v5990, %v5988
    %v6107 = vpack.c.b16 %v5993, %v5991
    %v6108 = vpack.c.b16 %v5994, %v5992
    %v6109 = vpack.c.b16 %v5997, %v5995
    %v6110 = vpack.c.b16 %v5998, %v5996
    %v6111 = vpack.c.b16 %v6001, %v5999
    %v6112 = vpack.c.b16 %v6002, %v6000
    %v6113 = vpack.c.b16 %v6005, %v6003
    %v6114 = vpack.c.b16 %v6006, %v6004
    %v6115 = vpack.c.b16 %v6009, %v6007
    %v6116 = vpack.c.b16 %v6010, %v6008
    %v6117 = vpack.c.b16 %v6013, %v6011
    %v6118 = vpack.c.b16 %v6014, %v6012
    %v6119 = vpack.c.b16 %v6017, %v6015
    %v6120 = vpack.c.b16 %v6018, %v6016
    %v6121 = vpack.c.b16 %v6021, %v6019
    %v6122 = vpack.c.b16 %v6022, %v6020
    %v6123 = vpack.c.b16 %v6025, %v6023
    %v6124 = vpack.c.b16 %v6026, %v6024
    %v6125 = vpack.c.b16 %v6029, %v6027
    %v6126 = vpack.c.b16 %v6030, %v6028
    %v6127 = vpack.c.b16 %v6033, %v6031
    %v6128 = vpack.c.b16 %v6034, %v6032
    %v6129 = vpack.c.b16 %v6037, %v6035
    %v6130 = vpack.c.b16 %v6038, %v6036
    %v6131 = vpack.c.b16 %v6041, %v6039
    %v6132 = vpack.c.b16 %v6042, %v6040
    %v6133 = vpack.c.b16 %v6045, %v6043
    %v6134 = vpack.c.b16 %v6046, %v6044
    %v6135 = vpack.c.b16 %v6049, %v6047
    %v6136 = vpack.c.b16 %v6050, %v6048
    %v6137 = vpack.c.b16 %v6053, %v6051
    %v6138 = vpack.c.b16 %v6054, %v6052
    %v6139 = vpack.c.b16 %v6057, %v6055
    %v6140 = vpack.c.b16 %v6058, %v6056
    %v6141 = vpack.c.b16 %v6061, %v6059
    %v6142 = vpack.c.b16 %v6062, %v6060
    %v6143 = vpack.c.b16 %v6065, %v6063
    %v6144 = vpack.c.b16 %v6066, %v6064
    %v6145 = vpack.c.b16 %v6069, %v6067
    %v6146 = vpack.c.b16 %v6070, %v6068
    %v6147 = vpack.c.b16 %v6073, %v6071
    %v6148 = vpack.c.b16 %v6074, %v6072
    %v6149 = vpack.c.b16 %v6077, %v6075
    %v6150 = vpack.c.b16 %v6078, %v6076
    %v6151 = vpack.c.b16 %v6081, %v6079
    %v6152 = vpack.c.b16 %v6082, %v6080
    %v6153 = vpack.c.b16 %v6085, %v6083
    %v6154 = vpack.c.b16 %v6086, %v6084
    %v6155 = vpack.c.b16 %v6089, %v6087
    %v6156 = vpack.c.b16 %v6090, %v6088
    %v6157 = vpack.c.b16 %v6093, %v6091
    %v6158 = vpack.c.b16 %v6094, %v6092
    %6223 = vmatprep.subr.bf16.mxu0 %v6110
    %6224 = vmatpush1.bf16.msra.mxu0 %v6109
    %6225 = vmatprep.subr.bf16.mxu0 %v6108
    %6226 = vmatpush1.bf16.msra.mxu0 %v6107
    %6227 = vmatprep.subr.bf16.mxu0 %v6106
    %6228 = vmatpush1.bf16.msra.mxu0 %v6105
    %6229 = vmatprep.subr.bf16.mxu0 %v6104
    %6230 = vmatpush1.bf16.msra.mxu0 %v6103
    %6231 = vmatprep.subr.bf16.mxu0 %v6102
    %6232 = vmatpush1.bf16.msra.mxu0 %v6101
    %6233 = vmatprep.subr.bf16.mxu0 %v6100
    %6234 = vmatpush1.bf16.msra.mxu0 %v6099
    %6235 = vmatprep.subr.bf16.mxu0 %v6098
    %6236 = vmatpush1.bf16.msra.mxu0 %v6097
    %6237 = vmatprep.subr.bf16.mxu0 %v6096
    %6238 = vmatpush1.bf16.msra.mxu0 %v6095
    %6239 = vmatprep.subr.bf16.mxu0 %v6126
    %6240 = vmatpush2.bf16.msra.mxu0 %v6125
    %6241 = vmatprep.subr.bf16.mxu0 %v6124
    %6242 = vmatpush2.bf16.msra.mxu0 %v6123
    %6243 = vmatprep.subr.bf16.mxu0 %v6122
    %6244 = vmatpush2.bf16.msra.mxu0 %v6121
    %6245 = vmatprep.subr.bf16.mxu0 %v6120
    %6246 = vmatpush2.bf16.msra.mxu0 %v6119
    %6247 = vmatprep.subr.bf16.mxu0 %v6118
    %6248 = vmatpush2.bf16.msra.mxu0 %v6117
    %6249 = vmatprep.subr.bf16.mxu0 %v6116
    %6250 = vmatpush2.bf16.msra.mxu0 %v6115
    %6251 = vmatprep.subr.bf16.mxu0 %v6114
    %6252 = vmatpush2.bf16.msra.mxu0 %v6113
    %6253 = vmatprep.subr.bf16.mxu0 %v6112
    %6254 = vmatpush2.bf16.msra.mxu0 %v6111
    %6255 = vmatprep.mubr.bf16.mxu0 %v5824
    %6256 = vmatmul.mubr.bf16.gmra.mxu0 %v5823
    %v6257 = vpop.f32.mrf.mxu0
    %v6258 = vadd.f32 %v5896, %v6257
    %v6259 = vpop.f32.mrf.mxu0
    %v6260 = vadd.f32 %v5900, %v6259
    %v6261 = vpop.f32.mrf.mxu0
    %v6262 = vpop.f32.mrf.mxu0
    %6263 = vdwg.mxu0
    %6264 = vmatprep.subr.bf16.mxu0 %v6142
    %6265 = vmatpush1.bf16.msra.mxu0 %v6141
    %6266 = vmatprep.subr.bf16.mxu0 %v6140
    %6267 = vmatpush1.bf16.msra.mxu0 %v6139
    %6268 = vmatprep.subr.bf16.mxu0 %v6138
    %6269 = vmatpush1.bf16.msra.mxu0 %v6137
    %6270 = vmatprep.subr.bf16.mxu0 %v6136
    %6271 = vmatpush1.bf16.msra.mxu0 %v6135
    %6272 = vmatprep.subr.bf16.mxu0 %v6134
    %6273 = vmatpush1.bf16.msra.mxu0 %v6133
    %6274 = vmatprep.subr.bf16.mxu0 %v6132
    %6275 = vmatpush1.bf16.msra.mxu0 %v6131
    %6276 = vmatprep.subr.bf16.mxu0 %v6130
    %6277 = vmatpush1.bf16.msra.mxu0 %v6129
    %6278 = vmatprep.subr.bf16.mxu0 %v6128
    %6279 = vmatpush1.bf16.msra.mxu0 %v6127
    %6280 = vmatprep.subr.bf16.mxu0 %v6158
    %6281 = vmatpush2.bf16.msra.mxu0 %v6157
    %6282 = vmatprep.subr.bf16.mxu0 %v6156
    %6283 = vmatpush2.bf16.msra.mxu0 %v6155
    %6284 = vmatprep.subr.bf16.mxu0 %v6154
    %6285 = vmatpush2.bf16.msra.mxu0 %v6153
    %6286 = vmatprep.subr.bf16.mxu0 %v6152
    %6287 = vmatpush2.bf16.msra.mxu0 %v6151
    %6288 = vmatprep.subr.bf16.mxu0 %v6150
    %6289 = vmatpush2.bf16.msra.mxu0 %v6149
    %6290 = vmatprep.subr.bf16.mxu0 %v6148
    %6291 = vmatpush2.bf16.msra.mxu0 %v6147
    %6292 = vmatprep.subr.bf16.mxu0 %v6146
    %6293 = vmatpush2.bf16.msra.mxu0 %v6145
    %6294 = vmatprep.subr.bf16.mxu0 %v6144
    %6295 = vmatpush2.bf16.msra.mxu0 %v6143
    %6296 = vmatprep.mubr.bf16.mxu0 %v5826
    %6297 = vmatmul.mubr.bf16.gmra.mxu0 %v5825
    %v6298 = vpop.f32.mrf.mxu0
    %v6299 = vadd.f32 %v6258, %v6298
    %v6300 = vpop.f32.mrf.mxu0
    %v6301 = vadd.f32 %v6260, %v6300
    %v6302 = vpop.f32.mrf.mxu0
    %v6303 = vpop.f32.mrf.mxu0
    %6304 = vdwg.mxu0
    %vm6305 = vcmp.gt.f32.partialorder %v6299, 0.0
    %vm6306 = vcmp.gt.f32.partialorder %v6301, 0.0
    %v6307 = vmul.f32 %v6299, 0.2
    %v6308 = vmul.f32 %v6301, 0.2
    %v6309 = vsel %vm6305, %v6299, %v6307
    %v6310 = vsel %vm6306, %v6301, %v6308
    %v6311 = vld [vmem:[#allocation11] sm:$0x3]
    %v6312 = vunpack.c.l.bf16 %v6311
    %v6314 = vlaneseq
    %v6315 = vshrl.u32 %v6314, 7
    %v6316 = vsub.s32 0, %v6315
    %v6317 = vrot.slane %v6312, %v6316
    %v6318 = vlaneseq
    %v6319 = vshrl.u32 %v6318, 7
    %v6320 = vsub.s32 2, %v6319
    %v6321 = vrot.slane %v6312, %v6320
    %v6324 = vlaneseq
    %v6325 = vshrl.u32 %v6324, 7
    %v6326 = vsub.s32 0, %v6325
    %v6327 = vrot.slane %v6317, %v6326
    %v6328 = vlaneseq
    %v6329 = vshrl.u32 %v6328, 7
    %v6330 = vsub.s32 0, %v6329
    %v6331 = vrot.slane %v6321, %v6330
    %v6332 = vmul.f32 %v6309, %v6327
    %v6333 = vmul.f32 %v6310, %v6331
    %v6334 = vadd.f32 %v6332, %v6333
    %6335 = vadd.xlane.f32.xlu0 %v6334
    %v6336 = vpop.xlane.xlu0 %6335
    %s6337 = sld [smem:[#allocation2]]
    %v6338 = vstv %s6337
    %v6339 = vadd.f32 %v6336, %v6338
    %v6340 = vxor.u32 %v6339, 2147483648
    %v6341 = vmul.f32 %v6340, 1.442695
    %v6342 = vpow.pop %v6341
    %v6343 = vadd.f32 %v6342, 1.0
    %v6344 = vrcp.pop %v6343
    %v6345 = vmul.f32 1.0, %v6344
    %vm6346 = vcmask 7168
    %6347 = vst.msk [vmem:[%s7] sm:$0xff] %vm6346, %v6345
    // Predicated region
    $region54: #{tpu_custom_call.1} parent=1 // pred_check
      _
    $region55: #{tpu_custom_call.1} parent=1 // pred_check_branch
      %6349 = sbr.rel (0) target = $region57
    $region56: #{tpu_custom_call.1} parent=1 // pred_region
      _
    $region57: #{tpu_custom_call.1} parent=1 // pred_fallthru
      _
    // Predicated region
    $region58: #{tpu_custom_call.1} parent=1 // pred_check
      _
    $region59: #{tpu_custom_call.1} parent=1 // pred_check_branch
      %6351 = sbr.rel (0) target = $region61
    $region60: #{tpu_custom_call.1} parent=1 // pred_region
      _
    $region61: #{tpu_custom_call.1} parent=1 // pred_fallthru
      _
    %6352 = vsyncpa [#allocation4], 1
    %6353 = vsyncpa [#allocation6], 1
    %6354 = vsyncpa [#allocation9], 1
    %6355 = vsyncpa [#allocation12], 1

</llo_original>
